<compile_context>
chip_gen: v5e
topology: v5e:2x2
jax: 0.10.0
libtpu: 0.0.40
codegen_flags: <defaults>
</compile_context>

<pallas_src>
import math

import jax
import jax.numpy as jnp
from jax import lax
from jax.experimental import pallas as pl
from jax.experimental.pallas import tpu as pltpu

SCALE = math.sqrt(0.5)   # torch.sqrt(FloatTensor([0.5]))
_MIB = 1024 * 1024


# ----------------------------------------------------------------------------
# Fused forward kernel (one grid step = one batch tile, all layers resident)
# ----------------------------------------------------------------------------
def _encoder_kernel(tok_ref, pos_ref, w_eh_ref, b_eh_ref,
                    conv_w_ref, conv_b_ref, w_he_ref, b_he_ref,
                    conved_ref, combined_ref, xpad_ref):
    TB, L, E = tok_ref.shape
    H = w_eh_ref.shape[1]
    n_layers = conv_b_ref.shape[0]
    K = conv_w_ref.shape[0] // n_layers
    pad = (K - 1) // 2
    M = TB * L

    # Zero the pad rows of the persistent padded conv-input scratch once per
    # tile (interior rows are overwritten every layer; no per-layer zeros+concat).
    if pad > 0:
        xpad_ref[:, :pad, :] = jnp.zeros((TB, pad, H), jnp.float32)
        xpad_ref[:, pad + L:, :] = jnp.zeros((TB, pad, H), jnp.float32)

    # embedded = dropout(tok + pos)   (dropout == identity in eval mode)
    # TODO(synk): training-mode stochastic dropout not implemented (eval only).
    emb = tok_ref[...].astype(jnp.float32) + pos_ref[...].astype(jnp.float32)

    # conv_input = embedded @ W_emb2hid + b   (bf16 MXU matmul, f32 accumulate)
    x = jnp.dot(emb.reshape(M, E).astype(jnp.bfloat16), w_eh_ref[...],
                preferred_element_type=jnp.float32) + b_eh_ref[...]        # (M, H)
    # `emb` is intentionally NOT kept live across the layer stack; it is
    # recomputed from the resident tok/pos tiles just before writing combined.

    def layer_step(li, x):
        # Write this layer's conv input into the padded scratch interior.
        xpad_ref[:, pad:pad + L, :] = x.reshape(TB, L, H)
        # Conv1d as K per-tap matmuls accumulated in f32 (no im2col copies).
        acc = jnp.dot(xpad_ref[:, 0:L, :].reshape(M, H).astype(jnp.bfloat16),
                      conv_w_ref[li * K + 0],
                      preferred_element_type=jnp.float32)                  # (M, 2H)
        for t in range(1, K):
            acc = acc + jnp.dot(
                xpad_ref[:, t:t + L, :].reshape(M, H).astype(jnp.bfloat16),
                conv_w_ref[li * K + t],
                preferred_element_type=jnp.float32)
        acc = acc + conv_b_ref[li]                            # + (1, 2H) bias
        glu = acc[:, :H] * jax.nn.sigmoid(acc[:, H:])         # F.glu over channels
        return (glu + x) * SCALE                              # residual * sqrt(0.5)

    if n_layers <= 3:
        for li in range(n_layers):          # shallow stacks: static unroll
            x = layer_step(li, x)
    else:                                   # deep stacks: bounded code size / live ranges
        x = lax.fori_loop(0, n_layers, layer_step, x)

    # conved = x @ W_hid2emb + b ; combined = (conved + embedded) * sqrt(0.5)
    conved = jnp.dot(x.astype(jnp.bfloat16), w_he_ref[...],
                     preferred_element_type=jnp.float32) + b_he_ref[...]   # (M, E)
    emb = (tok_ref[...].astype(jnp.float32)
           + pos_ref[...].astype(jnp.float32)).reshape(M, E)               # cheap recompute
    conved_ref[...] = conved.reshape(TB, L, E).astype(conved_ref.dtype)
    combined_ref[...] = ((conved + emb) * SCALE).reshape(TB, L, E).astype(combined_ref.dtype)


# ----------------------------------------------------------------------------
# Wrapper helpers: hardware query + batch-tile sizing
# ----------------------------------------------------------------------------
def _vmem_capacity_bytes():
    """Physical VMEM per TensorCore; 128 MiB fallback (v5e/v6e) if unqueryable."""
    try:
        info = pltpu.get_tpu_info()
        for name in ("vmem_capacity_bytes", "vmem_size_bytes", "vmem_bytes"):
            val = getattr(info, name, None)
            if val:
                return int(val)
    except Exception:
        pass
    return 128 * _MIB


def _pick_tile_b(B, L, E, H, pad, vmem_limit, weight_bytes, num_cores):
    """Largest batch tile whose working set fits the VMEM budget.

    Maximizes M = tile_b * L (the MXU row dimension). On 2-TensorCore chips the
    grid is kept >= 2 so "parallel" batch tiles land on both cores; on 1-TC
    chips one maximal tile is preferred (grid overhead ~0.35 us/step).
    """
    budget = int(vmem_limit * 0.75) - weight_bytes
    per_row = (
        2 * L * E * 2                                   # tok tile (bf16), double-buffered
        + 2 * 2 * L * E * 4                             # conved+combined (f32), double-buffered
        + (L + 2 * pad) * H * 4                         # persistent padded conv-input scratch
        + 2 * (L * H * 4 + L * 2 * H * 4 + L * E * 4)   # x / acc / conved temps (2x headroom)
    )
    tile_b = max(1, min(B, budget // per_row))
    if num_cores >= 2 and B > 1:
        tile_b = min(tile_b, -(-B // 2))                # >= 2 grid steps for megacore
    return int(tile_b)


# ----------------------------------------------------------------------------
# Wrapper: embedding gathers (plain JAX glue) + fused pallas_call
# ----------------------------------------------------------------------------
def encoder_cnn_forward(src, params, kernel_size, *, tile_b=None, out_dtype=jnp.float32):
    assert kernel_size % 2 == 1, "Kernel size must be odd!"
    B, L = src.shape
    E = params["tok_emb"].shape[1]
    H = params["emb2hid_w"].shape[1]
    n_layers = len(params["convs"])
    K = kernel_size
    pad = (K - 1) // 2
    max_length = params["pos_emb"].shape[0]
    assert L <= max_length, "src length exceeds pos_embedding max_length"

    # Per-generation VMEM budget: v7x has 64 MiB/TC (2 cores), v5e/v6e 128 MiB (1 core).
    vmem_cap = _vmem_capacity_bytes()
    if vmem_cap <= 64 * _MIB:
        vmem_limit, num_cores = 52 * _MIB, 2      # v7x: leave Mosaic-scratch headroom
    else:
        vmem_limit, num_cores = 100 * _MIB, 1     # v5e / v6e: use the larger VMEM

    # Embedding lookups are gathers -> plain JAX glue; everything else is fused.
    # bf16 halves the HBM read of the big (B, L, E) token-embedding tensor.
    tok_e = jnp.take(params["tok_emb"], src, axis=0).astype(jnp.bfloat16)   # (B, L, E)
    pos_e = params["pos_emb"][:L].astype(jnp.bfloat16)[None, :, :]          # (1, L, E)

    # Resident operands: bf16 matmul weights (f32 accumulate in-kernel), f32 biases.
    w_eh = params["emb2hid_w"].astype(jnp.bfloat16)                         # (E, H)
    b_eh = params["emb2hid_b"].reshape(1, H).astype(jnp.float32)
    w_he = params["hid2emb_w"].astype(jnp.bfloat16)                         # (H, E)
    b_he = params["hid2emb_b"].reshape(1, E).astype(jnp.float32)
    conv_w = jnp.stack([w for w, _ in params["convs"]])                     # (nl, K, H, 2H)
    conv_w = conv_w.reshape(n_layers * K, H, 2 * H).astype(jnp.bfloat16)    # per-tap slabs
    conv_b = jnp.stack([b for _, b in params["convs"]])
    conv_b = conv_b.reshape(n_layers, 1, 2 * H).astype(jnp.float32)

    def nbytes(a):
        return int(a.size) * a.dtype.itemsize

    weight_bytes = sum(nbytes(a) for a in (pos_e, w_eh, b_eh, conv_w, conv_b, w_he, b_he))
    # TODO(synk): if all-layer conv weights approach the VMEM limit, stream one layer
    # slab at a time via a second ("arbitrary") grid axis instead of all-resident.

    if tile_b is None:
        tile_b = _pick_tile_b(B, L, E, H, pad, vmem_limit, weight_bytes, num_cores)
    if L % 8 != 0:
        tile_b = 1   # keeps the in-kernel (TB, L, C) -> (TB*L, C) flatten a free retile
    grid_b = pl.cdiv(B, tile_b)
    b_pad = grid_b * tile_b
    if b_pad != B:   # pad batch so the tail tile never reads undefined rows
        tok_e = jnp.pad(tok_e, ((0, b_pad - B), (0, 0), (0, 0)))

    flops = 2 * b_pad * L * (E * H + n_layers * K * H * 2 * H + H * E)
    cost = pl.CostEstimate(
        flops=flops,
        transcendentals=b_pad * L * H * n_layers,                 # GLU sigmoids
        bytes_accessed=nbytes(tok_e) + weight_bytes + 2 * b_pad * L * E * 4)

    def build_call(single_buffer_weights):
        def resident(shape):   # constant index_map: DMA'd once; single-buffered if supported
            zero = (0,) * len(shape)
            if single_buffer_weights:
                return pl.BlockSpec(shape, lambda b, _z=zero: _z,
                                    pipeline_mode=pl.Buffered(1))
            return pl.BlockSpec(shape, lambda b, _z=zero: _z)

        def per_batch(shape):  # activations / outputs: tiled over batch
            return pl.BlockSpec(shape, lambda b: (b, 0, 0))

        return pl.pallas_call(
            _encoder_kernel,
            grid=(grid_b,),
            in_specs=[
                per_batch((tile_b, L, E)),            # token embeddings (bf16)
                resident((1, L, E)),                  # positional embeddings (bf16)
                resident((E, H)),                     # emb2hid weight  (bf16)
                resident((1, H)),                     # emb2hid bias
                resident((n_layers * K, H, 2 * H)),   # all conv tap weights (bf16)
                resident((n_layers, 1, 2 * H)),       # all conv biases
                resident((H, E)),                     # hid2emb weight  (bf16)
                resident((1, E)),                     # hid2emb bias
            ],
            out_specs=[per_batch((tile_b, L, E)), per_batch((tile_b, L, E))],
            out_shape=(jax.ShapeDtypeStruct((b_pad, L, E), out_dtype),
                       jax.ShapeDtypeStruct((b_pad, L, E), out_dtype)),
            scratch_shapes=[pltpu.VMEM((tile_b, L + 2 * pad, H), jnp.float32)],
            compiler_params=pltpu.CompilerParams(
                dimension_semantics=("parallel",),    # megacore: batch tiles across TCs
                vmem_limit_bytes=vmem_limit),
            cost_estimate=cost,
        )

    operands = (tok_e, pos_e, w_eh, b_eh, conv_w, conv_b, w_he, b_he)
    try:
        conved, combined = build_call(True)(*operands)
    except Exception:
        # Fallback for runtimes that reject pipeline_mode=pl.Buffered(1) on inputs.
        conved, combined = build_call(False)(*operands)

    if b_pad != B:
        conved, combined = conved[:B], combined[:B]
    return conved, combined


# ----------------------------------------------------------------------------
# Pure-JAX f32 reference (mirrors PyTorch EncoderCNN forward, eval mode)
# ----------------------------------------------------------------------------
def encoder_cnn_reference(src, params, kernel_size):
    pad = (kernel_size - 1) // 2
    L = src.shape[1]
    emb = jnp.take(params["tok_emb"], src, axis=0) + params["pos_emb"][:L][None]
    x = emb @ params["emb2hid_w"] + params["emb2hid_b"]
    H = x.shape[-1]
    for w, b in params["convs"]:                       # w: (K, H, 2H)
        xpad = jnp.pad(x, ((0, 0), (pad, pad), (0, 0)))
        acc = sum(jnp.einsum("blh,ho->blo", xpad[:, t:t + L, :], w[t])
                  for t in range(kernel_size)) + b
        x = (acc[..., :H] * jax.nn.sigmoid(acc[..., H:]) + x) * SCALE
    conved = x @ params["hid2emb_w"] + params["hid2emb_b"]
    combined = (conved + emb) * SCALE
    return conved, combined


# ----------------------------------------------------------------------------
# Parameter init (matches EncoderCNN shapes; conv weights stored per-tap as
# (K, hid, 2*hid) == torch (2*hid, hid, K).transpose(2, 1, 0), which preserves
# F.glu's channel split: first H output channels = value, last H = gate).
# ----------------------------------------------------------------------------
def init_params(key, input_dim, emb_dim, hid_dim, n_layers, kernel_size, max_length):
    keys = jax.random.split(key, 6 + 2 * n_layers)
    s = 0.1
    params = {
        "tok_emb":   s * jax.random.normal(keys[0], (input_dim, emb_dim), jnp.float32),
        "pos_emb":   s * jax.random.normal(keys[1], (max_length, emb_dim), jnp.float32),
        "emb2hid_w": s * jax.random.normal(keys[2], (emb_dim, hid_dim), jnp.float32),
        "emb2hid_b": s * jax.random.normal(keys[3], (hid_dim,), jnp.float32),
        "hid2emb_w": s * jax.random.normal(keys[4], (hid_dim, emb_dim), jnp.float32),
        "hid2emb_b": s * jax.random.normal(keys[5], (emb_dim,), jnp.float32),
        "convs": [],
    }
    for i in range(n_layers):
        w = s * jax.random.normal(keys[6 + 2 * i],
                                  (kernel_size, hid_dim, 2 * hid_dim), jnp.float32)
        b = s * jax.random.normal(keys[7 + 2 * i], (2 * hid_dim,), jnp.float32)
        params["convs"].append((w, b))
    return params


if __name__ == "__main__":
    key = jax.random.PRNGKey(0)
    # Small but lane/sublane-friendly demo shapes (channels multiple of 128, seq multiple of 8).
    B, L = 2, 16
    input_dim, emb_dim, hid_dim = 50, 128, 128
    n_layers, kernel_size, max_length = 2, 3, 100

    pkey, skey = jax.random.split(key)
    params = init_params(pkey, input_dim, emb_dim, hid_dim,
                         n_layers, kernel_size, max_length)
    src = jax.random.randint(skey, (B, L), 0, input_dim, dtype=jnp.int32)

    conved, combined = encoder_cnn_forward(src, params, kernel_size)
    jax.block_until_ready((conved, combined))
    assert conved.shape == (B, L, emb_dim) and combined.shape == (B, L, emb_dim)
    assert bool(jnp.all(jnp.isfinite(conved))) and bool(jnp.all(jnp.isfinite(combined)))

    # Tolerance check against the pure-JAX f32 reference (kernel matmuls run in bf16).
    conved_ref, combined_ref = encoder_cnn_reference(src, params, kernel_size)
    assert bool(jnp.allclose(conved, conved_ref, rtol=5e-2, atol=5e-2))
    assert bool(jnp.allclose(combined, combined_ref, rtol=5e-2, atol=5e-2))
    print("KERNEL_OK")
</pallas_src>

<mosaic_0001>
module attributes {stable_mosaic.version = 11 : i64} {
  func.func @_encoder_kernel(%arg0: i32, %arg1: memref<2x16x128xbf16, #tpu.memory_space<vmem>>, %arg2: memref<1x16x128xbf16, #tpu.memory_space<vmem>>, %arg3: memref<128x128xbf16, #tpu.memory_space<vmem>>, %arg4: memref<1x128xf32, #tpu.memory_space<vmem>>, %arg5: memref<6x128x256xbf16, #tpu.memory_space<vmem>>, %arg6: memref<2x1x256xf32, #tpu.memory_space<vmem>>, %arg7: memref<128x128xbf16, #tpu.memory_space<vmem>>, %arg8: memref<1x128xf32, #tpu.memory_space<vmem>>, %arg9: memref<2x16x128xf32, #tpu.memory_space<vmem>>, %arg10: memref<2x16x128xf32, #tpu.memory_space<vmem>>, %arg11: memref<2x18x128xf32, #tpu.memory_space<vmem>>) attributes {dimension_semantics = [#tpu.dimension_semantics<parallel>], iteration_bounds = array<i64: 1>, scalar_prefetch = 0 : i64, scratch_operands = 1 : i64, tpu.core_type = #tpu.core_type<tc>, window_params = [{transform_indices = @transform_0, window_bounds = array<i64: 2, 16, 128>}, {pipeline_mode = #tpu.pipeline_mode<synchronous>, transform_indices = @transform_1, window_bounds = array<i64: 1, 16, 128>}, {pipeline_mode = #tpu.pipeline_mode<synchronous>, transform_indices = @transform_2, window_bounds = array<i64: 128, 128>}, {pipeline_mode = #tpu.pipeline_mode<synchronous>, transform_indices = @transform_3, window_bounds = array<i64: 1, 128>}, {pipeline_mode = #tpu.pipeline_mode<synchronous>, transform_indices = @transform_4, window_bounds = array<i64: 6, 128, 256>}, {pipeline_mode = #tpu.pipeline_mode<synchronous>, transform_indices = @transform_5, window_bounds = array<i64: 2, 1, 256>}, {pipeline_mode = #tpu.pipeline_mode<synchronous>, transform_indices = @transform_6, window_bounds = array<i64: 128, 128>}, {pipeline_mode = #tpu.pipeline_mode<synchronous>, transform_indices = @transform_7, window_bounds = array<i64: 1, 128>}, {transform_indices = @transform_8, window_bounds = array<i64: 2, 16, 128>}, {transform_indices = @transform_9, window_bounds = array<i64: 2, 16, 128>}]} {
    %cst = arith.constant 0.000000e+00 : f32
    %0 = vector.broadcast %cst : f32 to vector<2x1x128xf32>
    %c0 = arith.constant 0 : index
    %c0_0 = arith.constant 0 : index
    %c0_1 = arith.constant 0 : index
    %1 = vector.load %arg11[%c0, %c0_0, %c0_1] : memref<2x18x128xf32, #tpu.memory_space<vmem>>, vector<2x1x128xf32>
    tpu.vector_store %arg11[%c0, %c0_0, %c0_1], %0 {strides = array<i32>} : memref<2x18x128xf32, #tpu.memory_space<vmem>>, vector<2x1x128xf32>,
    %cst_2 = arith.constant 0.000000e+00 : f32
    %2 = vector.broadcast %cst_2 : f32 to vector<2x1x128xf32>
    %c0_3 = arith.constant 0 : index
    %c17 = arith.constant 17 : index
    %c0_4 = arith.constant 0 : index
    %3 = vector.load %arg11[%c0_3, %c17, %c0_4] : memref<2x18x128xf32, #tpu.memory_space<vmem>>, vector<2x1x128xf32>
    tpu.vector_store %arg11[%c0_3, %c17, %c0_4], %2 {strides = array<i32>} : memref<2x18x128xf32, #tpu.memory_space<vmem>>, vector<2x1x128xf32>,
    %c0_5 = arith.constant 0 : index
    %c0_6 = arith.constant 0 : index
    %c0_7 = arith.constant 0 : index
    %4 = vector.load %arg1[%c0_5, %c0_6, %c0_7] : memref<2x16x128xbf16, #tpu.memory_space<vmem>>, vector<2x16x128xbf16>
    %5 = arith.extf %4 : vector<2x16x128xbf16> to vector<2x16x128xf32>
    %c0_8 = arith.constant 0 : index
    %c0_9 = arith.constant 0 : index
    %c0_10 = arith.constant 0 : index
    %6 = vector.load %arg2[%c0_8, %c0_9, %c0_10] : memref<1x16x128xbf16, #tpu.memory_space<vmem>>, vector<1x16x128xbf16>
    %7 = arith.extf %6 : vector<1x16x128xbf16> to vector<1x16x128xf32>
    %8 = vector.broadcast %7 : vector<1x16x128xf32> to vector<2x16x128xf32>
    %9 = arith.addf %5, %8 : vector<2x16x128xf32>
    %10 = vector.shape_cast %9 : vector<2x16x128xf32> to vector<32x128xf32>
    %11 = arith.truncf %10 : vector<32x128xf32> to vector<32x128xbf16>
    %c0_11 = arith.constant 0 : index
    %c0_12 = arith.constant 0 : index
    %12 = vector.load %arg3[%c0_11, %c0_12] : memref<128x128xbf16, #tpu.memory_space<vmem>>, vector<128x128xbf16>
    %cst_13 = arith.constant dense<0.000000e+00> : vector<32x128xf32>
    %13 = tpu.matmul %11, %12, %cst_13 {dimension_numbers = #tpu.dot_dimension_numbers<[1], [0], [0], [1], [0, 0, 1, 1], [], []>} : vector<32x128xbf16>, vector<128x128xbf16>, vector<32x128xf32> -> vector<32x128xf32>
    %c0_14 = arith.constant 0 : index
    %c0_15 = arith.constant 0 : index
    %14 = vector.load %arg4[%c0_14, %c0_15] : memref<1x128xf32, #tpu.memory_space<vmem>>, vector<1x128xf32>
    %15 = vector.broadcast %14 : vector<1x128xf32> to vector<32x128xf32>
    %16 = arith.addf %13, %15 : vector<32x128xf32>
    %17 = vector.shape_cast %16 : vector<32x128xf32> to vector<2x16x128xf32>
    %c0_16 = arith.constant 0 : index
    %c1 = arith.constant 1 : index
    %c0_17 = arith.constant 0 : index
    %18 = vector.load %arg11[%c0_16, %c1, %c0_17] : memref<2x18x128xf32, #tpu.memory_space<vmem>>, vector<2x16x128xf32>
    tpu.vector_store %arg11[%c0_16, %c1, %c0_17], %17 {strides = array<i32>} : memref<2x18x128xf32, #tpu.memory_space<vmem>>, vector<2x16x128xf32>,
    %c0_18 = arith.constant 0 : index
    %c0_19 = arith.constant 0 : index
    %c0_20 = arith.constant 0 : index
    %19 = vector.load %arg11[%c0_18, %c0_19, %c0_20] : memref<2x18x128xf32, #tpu.memory_space<vmem>>, vector<2x16x128xf32>
    %20 = vector.shape_cast %19 : vector<2x16x128xf32> to vector<32x128xf32>
    %21 = arith.truncf %20 : vector<32x128xf32> to vector<32x128xbf16>
    %c0_21 = arith.constant 0 : index
    %c0_22 = arith.constant 0 : index
    %c0_23 = arith.constant 0 : index
    %22 = vector.load %arg5[%c0_21, %c0_22, %c0_23] : memref<6x128x256xbf16, #tpu.memory_space<vmem>>, vector<1x128x256xbf16>
    %23 = vector.shape_cast %22 : vector<1x128x256xbf16> to vector<128x256xbf16>
    %cst_24 = arith.constant dense<0.000000e+00> : vector<32x256xf32>
    %24 = tpu.matmul %21, %23, %cst_24 {dimension_numbers = #tpu.dot_dimension_numbers<[1], [0], [0], [1], [0, 0, 1, 1], [], []>} : vector<32x128xbf16>, vector<128x256xbf16>, vector<32x256xf32> -> vector<32x256xf32>
    %c0_25 = arith.constant 0 : index
    %c1_26 = arith.constant 1 : index
    %c0_27 = arith.constant 0 : index
    %25 = vector.load %arg11[%c0_25, %c1_26, %c0_27] : memref<2x18x128xf32, #tpu.memory_space<vmem>>, vector<2x16x128xf32>
    %26 = vector.shape_cast %25 : vector<2x16x128xf32> to vector<32x128xf32>
    %27 = arith.truncf %26 : vector<32x128xf32> to vector<32x128xbf16>
    %c1_28 = arith.constant 1 : index
    %c0_29 = arith.constant 0 : index
    %c0_30 = arith.constant 0 : index
    %28 = vector.load %arg5[%c1_28, %c0_29, %c0_30] : memref<6x128x256xbf16, #tpu.memory_space<vmem>>, vector<1x128x256xbf16>
    %29 = vector.shape_cast %28 : vector<1x128x256xbf16> to vector<128x256xbf16>
    %cst_31 = arith.constant dense<0.000000e+00> : vector<32x256xf32>
    %30 = tpu.matmul %27, %29, %cst_31 {dimension_numbers = #tpu.dot_dimension_numbers<[1], [0], [0], [1], [0, 0, 1, 1], [], []>} : vector<32x128xbf16>, vector<128x256xbf16>, vector<32x256xf32> -> vector<32x256xf32>
    %31 = arith.addf %24, %30 : vector<32x256xf32>
    %c0_32 = arith.constant 0 : index
    %c2 = arith.constant 2 : index
    %c0_33 = arith.constant 0 : index
    %32 = vector.load %arg11[%c0_32, %c2, %c0_33] : memref<2x18x128xf32, #tpu.memory_space<vmem>>, vector<2x16x128xf32>
    %33 = vector.shape_cast %32 : vector<2x16x128xf32> to vector<32x128xf32>
    %34 = arith.truncf %33 : vector<32x128xf32> to vector<32x128xbf16>
    %c2_34 = arith.constant 2 : index
    %c0_35 = arith.constant 0 : index
    %c0_36 = arith.constant 0 : index
    %35 = vector.load %arg5[%c2_34, %c0_35, %c0_36] : memref<6x128x256xbf16, #tpu.memory_space<vmem>>, vector<1x128x256xbf16>
    %36 = vector.shape_cast %35 : vector<1x128x256xbf16> to vector<128x256xbf16>
    %cst_37 = arith.constant dense<0.000000e+00> : vector<32x256xf32>
    %37 = tpu.matmul %34, %36, %cst_37 {dimension_numbers = #tpu.dot_dimension_numbers<[1], [0], [0], [1], [0, 0, 1, 1], [], []>} : vector<32x128xbf16>, vector<128x256xbf16>, vector<32x256xf32> -> vector<32x256xf32>
    %38 = arith.addf %31, %37 : vector<32x256xf32>
    %c0_38 = arith.constant 0 : index
    %c0_39 = arith.constant 0 : index
    %c0_40 = arith.constant 0 : index
    %39 = vector.load %arg6[%c0_38, %c0_39, %c0_40] : memref<2x1x256xf32, #tpu.memory_space<vmem>>, vector<1x1x256xf32>
    %40 = vector.shape_cast %39 : vector<1x1x256xf32> to vector<1x256xf32>
    %41 = vector.broadcast %40 : vector<1x256xf32> to vector<32x256xf32>
    %42 = arith.addf %38, %41 : vector<32x256xf32>
    %43 = vector.extract_strided_slice %42 {offsets = [0, 0], sizes = [32, 128], strides = [1, 1]} : vector<32x256xf32> to vector<32x128xf32>
    %44 = vector.extract_strided_slice %42 {offsets = [0, 128], sizes = [32, 128], strides = [1, 1]} : vector<32x256xf32> to vector<32x128xf32>
    %45 = arith.negf %44 : vector<32x128xf32>
    %46 = math.exp %45 : vector<32x128xf32>
    %cst_41 = arith.constant 1.000000e+00 : f32
    %47 = vector.broadcast %cst_41 : f32 to vector<32x128xf32>
    %48 = arith.addf %47, %46 : vector<32x128xf32>
    %49 = arith.divf %47, %48 : vector<32x128xf32>
    %50 = arith.mulf %43, %49 : vector<32x128xf32>
    %51 = arith.addf %50, %16 : vector<32x128xf32>
    %cst_42 = arith.constant 0.707106769 : f32
    %52 = vector.broadcast %cst_42 : f32 to vector<32x128xf32>
    %53 = arith.mulf %51, %52 : vector<32x128xf32>
    %54 = vector.shape_cast %53 : vector<32x128xf32> to vector<2x16x128xf32>
    %c0_43 = arith.constant 0 : index
    %c1_44 = arith.constant 1 : index
    %c0_45 = arith.constant 0 : index
    %55 = vector.load %arg11[%c0_43, %c1_44, %c0_45] : memref<2x18x128xf32, #tpu.memory_space<vmem>>, vector<2x16x128xf32>
    tpu.vector_store %arg11[%c0_43, %c1_44, %c0_45], %54 {strides = array<i32>} : memref<2x18x128xf32, #tpu.memory_space<vmem>>, vector<2x16x128xf32>,
    %c0_46 = arith.constant 0 : index
    %c0_47 = arith.constant 0 : index
    %c0_48 = arith.constant 0 : index
    %56 = vector.load %arg11[%c0_46, %c0_47, %c0_48] : memref<2x18x128xf32, #tpu.memory_space<vmem>>, vector<2x16x128xf32>
    %57 = vector.shape_cast %56 : vector<2x16x128xf32> to vector<32x128xf32>
    %58 = arith.truncf %57 : vector<32x128xf32> to vector<32x128xbf16>
    %c3 = arith.constant 3 : index
    %c0_49 = arith.constant 0 : index
    %c0_50 = arith.constant 0 : index
    %59 = vector.load %arg5[%c3, %c0_49, %c0_50] : memref<6x128x256xbf16, #tpu.memory_space<vmem>>, vector<1x128x256xbf16>
    %60 = vector.shape_cast %59 : vector<1x128x256xbf16> to vector<128x256xbf16>
    %cst_51 = arith.constant dense<0.000000e+00> : vector<32x256xf32>
    %61 = tpu.matmul %58, %60, %cst_51 {dimension_numbers = #tpu.dot_dimension_numbers<[1], [0], [0], [1], [0, 0, 1, 1], [], []>} : vector<32x128xbf16>, vector<128x256xbf16>, vector<32x256xf32> -> vector<32x256xf32>
    %c0_52 = arith.constant 0 : index
    %c1_53 = arith.constant 1 : index
    %c0_54 = arith.constant 0 : index
    %62 = vector.load %arg11[%c0_52, %c1_53, %c0_54] : memref<2x18x128xf32, #tpu.memory_space<vmem>>, vector<2x16x128xf32>
    %63 = vector.shape_cast %62 : vector<2x16x128xf32> to vector<32x128xf32>
    %64 = arith.truncf %63 : vector<32x128xf32> to vector<32x128xbf16>
    %c4 = arith.constant 4 : index
    %c0_55 = arith.constant 0 : index
    %c0_56 = arith.constant 0 : index
    %65 = vector.load %arg5[%c4, %c0_55, %c0_56] : memref<6x128x256xbf16, #tpu.memory_space<vmem>>, vector<1x128x256xbf16>
    %66 = vector.shape_cast %65 : vector<1x128x256xbf16> to vector<128x256xbf16>
    %cst_57 = arith.constant dense<0.000000e+00> : vector<32x256xf32>
    %67 = tpu.matmul %64, %66, %cst_57 {dimension_numbers = #tpu.dot_dimension_numbers<[1], [0], [0], [1], [0, 0, 1, 1], [], []>} : vector<32x128xbf16>, vector<128x256xbf16>, vector<32x256xf32> -> vector<32x256xf32>
    %68 = arith.addf %61, %67 : vector<32x256xf32>
    %c0_58 = arith.constant 0 : index
    %c2_59 = arith.constant 2 : index
    %c0_60 = arith.constant 0 : index
    %69 = vector.load %arg11[%c0_58, %c2_59, %c0_60] : memref<2x18x128xf32, #tpu.memory_space<vmem>>, vector<2x16x128xf32>
    %70 = vector.shape_cast %69 : vector<2x16x128xf32> to vector<32x128xf32>
    %71 = arith.truncf %70 : vector<32x128xf32> to vector<32x128xbf16>
    %c5 = arith.constant 5 : index
    %c0_61 = arith.constant 0 : index
    %c0_62 = arith.constant 0 : index
    %72 = vector.load %arg5[%c5, %c0_61, %c0_62] : memref<6x128x256xbf16, #tpu.memory_space<vmem>>, vector<1x128x256xbf16>
    %73 = vector.shape_cast %72 : vector<1x128x256xbf16> to vector<128x256xbf16>
    %cst_63 = arith.constant dense<0.000000e+00> : vector<32x256xf32>
    %74 = tpu.matmul %71, %73, %cst_63 {dimension_numbers = #tpu.dot_dimension_numbers<[1], [0], [0], [1], [0, 0, 1, 1], [], []>} : vector<32x128xbf16>, vector<128x256xbf16>, vector<32x256xf32> -> vector<32x256xf32>
    %75 = arith.addf %68, %74 : vector<32x256xf32>
    %c1_64 = arith.constant 1 : index
    %c0_65 = arith.constant 0 : index
    %c0_66 = arith.constant 0 : index
    %76 = vector.load %arg6[%c1_64, %c0_65, %c0_66] : memref<2x1x256xf32, #tpu.memory_space<vmem>>, vector<1x1x256xf32>
    %77 = vector.shape_cast %76 : vector<1x1x256xf32> to vector<1x256xf32>
    %78 = vector.broadcast %77 : vector<1x256xf32> to vector<32x256xf32>
    %79 = arith.addf %75, %78 : vector<32x256xf32>
    %80 = vector.extract_strided_slice %79 {offsets = [0, 0], sizes = [32, 128], strides = [1, 1]} : vector<32x256xf32> to vector<32x128xf32>
    %81 = vector.extract_strided_slice %79 {offsets = [0, 128], sizes = [32, 128], strides = [1, 1]} : vector<32x256xf32> to vector<32x128xf32>
    %82 = arith.negf %81 : vector<32x128xf32>
    %83 = math.exp %82 : vector<32x128xf32>
    %cst_67 = arith.constant 1.000000e+00 : f32
    %84 = vector.broadcast %cst_67 : f32 to vector<32x128xf32>
    %85 = arith.addf %84, %83 : vector<32x128xf32>
    %86 = arith.divf %84, %85 : vector<32x128xf32>
    %87 = arith.mulf %80, %86 : vector<32x128xf32>
    %88 = arith.addf %87, %53 : vector<32x128xf32>
    %cst_68 = arith.constant 0.707106769 : f32
    %89 = vector.broadcast %cst_68 : f32 to vector<32x128xf32>
    %90 = arith.mulf %88, %89 : vector<32x128xf32>
    %91 = arith.truncf %90 : vector<32x128xf32> to vector<32x128xbf16>
    %c0_69 = arith.constant 0 : index
    %c0_70 = arith.constant 0 : index
    %92 = vector.load %arg7[%c0_69, %c0_70] : memref<128x128xbf16, #tpu.memory_space<vmem>>, vector<128x128xbf16>
    %cst_71 = arith.constant dense<0.000000e+00> : vector<32x128xf32>
    %93 = tpu.matmul %91, %92, %cst_71 {dimension_numbers = #tpu.dot_dimension_numbers<[1], [0], [0], [1], [0, 0, 1, 1], [], []>} : vector<32x128xbf16>, vector<128x128xbf16>, vector<32x128xf32> -> vector<32x128xf32>
    %c0_72 = arith.constant 0 : index
    %c0_73 = arith.constant 0 : index
    %94 = vector.load %arg8[%c0_72, %c0_73] : memref<1x128xf32, #tpu.memory_space<vmem>>, vector<1x128xf32>
    %95 = vector.broadcast %94 : vector<1x128xf32> to vector<32x128xf32>
    %96 = arith.addf %93, %95 : vector<32x128xf32>
    %c0_74 = arith.constant 0 : index
    %c0_75 = arith.constant 0 : index
    %c0_76 = arith.constant 0 : index
    %97 = vector.load %arg1[%c0_74, %c0_75, %c0_76] : memref<2x16x128xbf16, #tpu.memory_space<vmem>>, vector<2x16x128xbf16>
    %98 = arith.extf %97 : vector<2x16x128xbf16> to vector<2x16x128xf32>
    %c0_77 = arith.constant 0 : index
    %c0_78 = arith.constant 0 : index
    %c0_79 = arith.constant 0 : index
    %99 = vector.load %arg2[%c0_77, %c0_78, %c0_79] : memref<1x16x128xbf16, #tpu.memory_space<vmem>>, vector<1x16x128xbf16>
    %100 = arith.extf %99 : vector<1x16x128xbf16> to vector<1x16x128xf32>
    %101 = vector.broadcast %100 : vector<1x16x128xf32> to vector<2x16x128xf32>
    %102 = arith.addf %98, %101 : vector<2x16x128xf32>
    %103 = vector.shape_cast %102 : vector<2x16x128xf32> to vector<32x128xf32>
    %104 = vector.shape_cast %96 : vector<32x128xf32> to vector<2x16x128xf32>
    %c0_80 = arith.constant 0 : index
    %c0_81 = arith.constant 0 : index
    %c0_82 = arith.constant 0 : index
    %105 = vector.load %arg9[%c0_80, %c0_81, %c0_82] : memref<2x16x128xf32, #tpu.memory_space<vmem>>, vector<2x16x128xf32>
    tpu.vector_store %arg9[%c0_80, %c0_81, %c0_82], %104 {strides = array<i32>} : memref<2x16x128xf32, #tpu.memory_space<vmem>>, vector<2x16x128xf32>,
    %106 = arith.addf %96, %103 : vector<32x128xf32>
    %cst_83 = arith.constant 0.707106769 : f32
    %107 = vector.broadcast %cst_83 : f32 to vector<32x128xf32>
    %108 = arith.mulf %106, %107 : vector<32x128xf32>
    %109 = vector.shape_cast %108 : vector<32x128xf32> to vector<2x16x128xf32>
    %c0_84 = arith.constant 0 : index
    %c0_85 = arith.constant 0 : index
    %c0_86 = arith.constant 0 : index
    %110 = vector.load %arg10[%c0_84, %c0_85, %c0_86] : memref<2x16x128xf32, #tpu.memory_space<vmem>>, vector<2x16x128xf32>
    tpu.vector_store %arg10[%c0_84, %c0_85, %c0_86], %109 {strides = array<i32>} : memref<2x16x128xf32, #tpu.memory_space<vmem>>, vector<2x16x128xf32>,
    return
  }
  func.func @transform_0(%arg0: i32) -> (i32, i32, i32) {
    %c0_i32 = arith.constant 0 : i32
    %c0_i32_0 = arith.constant 0 : i32
    %c0_i32_1 = arith.constant 0 : i32
    return %arg0, %c0_i32, %c0_i32_0 : i32, i32, i32
  }
  func.func @transform_1(%arg0: i32) -> (i32, i32, i32) {
    %c0_i32 = arith.constant 0 : i32
    %c0_i32_0 = arith.constant 0 : i32
    %c0_i32_1 = arith.constant 0 : i32
    %c0_i32_2 = arith.constant 0 : i32
    return %c0_i32, %c0_i32_0, %c0_i32_1 : i32, i32, i32
  }
  func.func @transform_2(%arg0: i32) -> (i32, i32) {
    %c0_i32 = arith.constant 0 : i32
    %c0_i32_0 = arith.constant 0 : i32
    %c0_i32_1 = arith.constant 0 : i32
    return %c0_i32, %c0_i32_0 : i32, i32
  }
  func.func @transform_3(%arg0: i32) -> (i32, i32) {
    %c0_i32 = arith.constant 0 : i32
    %c0_i32_0 = arith.constant 0 : i32
    %c0_i32_1 = arith.constant 0 : i32
    return %c0_i32, %c0_i32_0 : i32, i32
  }
  func.func @transform_4(%arg0: i32) -> (i32, i32, i32) {
    %c0_i32 = arith.constant 0 : i32
    %c0_i32_0 = arith.constant 0 : i32
    %c0_i32_1 = arith.constant 0 : i32
    %c0_i32_2 = arith.constant 0 : i32
    return %c0_i32, %c0_i32_0, %c0_i32_1 : i32, i32, i32
  }
  func.func @transform_5(%arg0: i32) -> (i32, i32, i32) {
    %c0_i32 = arith.constant 0 : i32
    %c0_i32_0 = arith.constant 0 : i32
    %c0_i32_1 = arith.constant 0 : i32
    %c0_i32_2 = arith.constant 0 : i32
    return %c0_i32, %c0_i32_0, %c0_i32_1 : i32, i32, i32
  }
  func.func @transform_6(%arg0: i32) -> (i32, i32) {
    %c0_i32 = arith.constant 0 : i32
    %c0_i32_0 = arith.constant 0 : i32
    %c0_i32_1 = arith.constant 0 : i32
    return %c0_i32, %c0_i32_0 : i32, i32
  }
  func.func @transform_7(%arg0: i32) -> (i32, i32) {
    %c0_i32 = arith.constant 0 : i32
    %c0_i32_0 = arith.constant 0 : i32
    %c0_i32_1 = arith.constant 0 : i32
    return %c0_i32, %c0_i32_0 : i32, i32
  }
  func.func @transform_8(%arg0: i32) -> (i32, i32, i32) {
    %c0_i32 = arith.constant 0 : i32
    %c0_i32_0 = arith.constant 0 : i32
    %c0_i32_1 = arith.constant 0 : i32
    return %arg0, %c0_i32, %c0_i32_0 : i32, i32, i32
  }
  func.func @transform_9(%arg0: i32) -> (i32, i32, i32) {
    %c0_i32 = arith.constant 0 : i32
    %c0_i32_0 = arith.constant 0 : i32
    %c0_i32_1 = arith.constant 0 : i32
    return %arg0, %c0_i32, %c0_i32_0 : i32, i32, i32
  }
}

module attributes {stable_mosaic.version = 11 : i64} {
  func.func @_encoder_kernel(%arg0: i32, %arg1: memref<2x16x128xbf16, #tpu.memory_space<vmem>>, %arg2: memref<1x16x128xbf16, #tpu.memory_space<vmem>>, %arg3: memref<128x128xbf16, #tpu.memory_space<vmem>>, %arg4: memref<1x128xf32, #tpu.memory_space<vmem>>, %arg5: memref<6x128x256xbf16, #tpu.memory_space<vmem>>, %arg6: memref<2x1x256xf32, #tpu.memory_space<vmem>>, %arg7: memref<128x128xbf16, #tpu.memory_space<vmem>>, %arg8: memref<1x128xf32, #tpu.memory_space<vmem>>, %arg9: memref<2x16x128xf32, #tpu.memory_space<vmem>>, %arg10: memref<2x16x128xf32, #tpu.memory_space<vmem>>, %arg11: memref<2x18x128xf32, #tpu.memory_space<vmem>>) attributes {dimension_semantics = [#tpu.dimension_semantics<parallel>], iteration_bounds = array<i64: 1>, scalar_prefetch = 0 : i64, scratch_operands = 1 : i64, tpu.core_type = #tpu.core_type<tc>, window_params = [{transform_indices = @transform_0, window_bounds = array<i64: 2, 16, 128>}, {pipeline_mode = #tpu.pipeline_mode<synchronous>, transform_indices = @transform_1, window_bounds = array<i64: 1, 16, 128>}, {pipeline_mode = #tpu.pipeline_mode<synchronous>, transform_indices = @transform_2, window_bounds = array<i64: 128, 128>}, {pipeline_mode = #tpu.pipeline_mode<synchronous>, transform_indices = @transform_3, window_bounds = array<i64: 1, 128>}, {pipeline_mode = #tpu.pipeline_mode<synchronous>, transform_indices = @transform_4, window_bounds = array<i64: 6, 128, 256>}, {pipeline_mode = #tpu.pipeline_mode<synchronous>, transform_indices = @transform_5, window_bounds = array<i64: 2, 1, 256>}, {pipeline_mode = #tpu.pipeline_mode<synchronous>, transform_indices = @transform_6, window_bounds = array<i64: 128, 128>}, {pipeline_mode = #tpu.pipeline_mode<synchronous>, transform_indices = @transform_7, window_bounds = array<i64: 1, 128>}, {transform_indices = @transform_8, window_bounds = array<i64: 2, 16, 128>}, {transform_indices = @transform_9, window_bounds = array<i64: 2, 16, 128>}]} {
    %cst = arith.constant 0.000000e+00 : f32
    %0 = vector.broadcast %cst : f32 to vector<2x1x128xf32>
    %c0 = arith.constant 0 : index
    %c0_0 = arith.constant 0 : index
    %c0_1 = arith.constant 0 : index
    %1 = vector.load %arg11[%c0, %c0_0, %c0_1] : memref<2x18x128xf32, #tpu.memory_space<vmem>>, vector<2x1x128xf32>
    tpu.vector_store %arg11[%c0, %c0_0, %c0_1], %0 {strides = array<i32>} : memref<2x18x128xf32, #tpu.memory_space<vmem>>, vector<2x1x128xf32>,
    %cst_2 = arith.constant 0.000000e+00 : f32
    %2 = vector.broadcast %cst_2 : f32 to vector<2x1x128xf32>
    %c0_3 = arith.constant 0 : index
    %c17 = arith.constant 17 : index
    %c0_4 = arith.constant 0 : index
    %3 = vector.load %arg11[%c0_3, %c17, %c0_4] : memref<2x18x128xf32, #tpu.memory_space<vmem>>, vector<2x1x128xf32>
    tpu.vector_store %arg11[%c0_3, %c17, %c0_4], %2 {strides = array<i32>} : memref<2x18x128xf32, #tpu.memory_space<vmem>>, vector<2x1x128xf32>,
    %c0_5 = arith.constant 0 : index
    %c0_6 = arith.constant 0 : index
    %c0_7 = arith.constant 0 : index
    %4 = vector.load %arg1[%c0_5, %c0_6, %c0_7] : memref<2x16x128xbf16, #tpu.memory_space<vmem>>, vector<2x16x128xbf16>
    %5 = arith.extf %4 : vector<2x16x128xbf16> to vector<2x16x128xf32>
    %c0_8 = arith.constant 0 : index
    %c0_9 = arith.constant 0 : index
    %c0_10 = arith.constant 0 : index
    %6 = vector.load %arg2[%c0_8, %c0_9, %c0_10] : memref<1x16x128xbf16, #tpu.memory_space<vmem>>, vector<1x16x128xbf16>
    %7 = arith.extf %6 : vector<1x16x128xbf16> to vector<1x16x128xf32>
    %8 = vector.broadcast %7 : vector<1x16x128xf32> to vector<2x16x128xf32>
    %9 = arith.addf %5, %8 : vector<2x16x128xf32>
    %10 = vector.shape_cast %9 : vector<2x16x128xf32> to vector<32x128xf32>
    %11 = arith.truncf %10 : vector<32x128xf32> to vector<32x128xbf16>
    %c0_11 = arith.constant 0 : index
    %c0_12 = arith.constant 0 : index
    %12 = vector.load %arg3[%c0_11, %c0_12] : memref<128x128xbf16, #tpu.memory_space<vmem>>, vector<128x128xbf16>
    %cst_13 = arith.constant dense<0.000000e+00> : vector<32x128xf32>
    %13 = tpu.matmul %11, %12, %cst_13 {dimension_numbers = #tpu.dot_dimension_numbers<[1], [0], [0], [1], [0, 0, 1, 1], [], []>} : vector<32x128xbf16>, vector<128x128xbf16>, vector<32x128xf32> -> vector<32x128xf32>
    %c0_14 = arith.constant 0 : index
    %c0_15 = arith.constant 0 : index
    %14 = vector.load %arg4[%c0_14, %c0_15] : memref<1x128xf32, #tpu.memory_space<vmem>>, vector<1x128xf32>
    %15 = vector.broadcast %14 : vector<1x128xf32> to vector<32x128xf32>
    %16 = arith.addf %13, %15 : vector<32x128xf32>
    %17 = vector.shape_cast %16 : vector<32x128xf32> to vector<2x16x128xf32>
    %c0_16 = arith.constant 0 : index
    %c1 = arith.constant 1 : index
    %c0_17 = arith.constant 0 : index
    %18 = vector.load %arg11[%c0_16, %c1, %c0_17] : memref<2x18x128xf32, #tpu.memory_space<vmem>>, vector<2x16x128xf32>
    tpu.vector_store %arg11[%c0_16, %c1, %c0_17], %17 {strides = array<i32>} : memref<2x18x128xf32, #tpu.memory_space<vmem>>, vector<2x16x128xf32>,
    %c0_18 = arith.constant 0 : index
    %c0_19 = arith.constant 0 : index
    %c0_20 = arith.constant 0 : index
    %19 = vector.load %arg11[%c0_18, %c0_19, %c0_20] : memref<2x18x128xf32, #tpu.memory_space<vmem>>, vector<2x16x128xf32>
    %20 = vector.shape_cast %19 : vector<2x16x128xf32> to vector<32x128xf32>
    %21 = arith.truncf %20 : vector<32x128xf32> to vector<32x128xbf16>
    %c0_21 = arith.constant 0 : index
    %c0_22 = arith.constant 0 : index
    %c0_23 = arith.constant 0 : index
    %22 = vector.load %arg5[%c0_21, %c0_22, %c0_23] : memref<6x128x256xbf16, #tpu.memory_space<vmem>>, vector<1x128x256xbf16>
    %23 = vector.shape_cast %22 : vector<1x128x256xbf16> to vector<128x256xbf16>
    %cst_24 = arith.constant dense<0.000000e+00> : vector<32x256xf32>
    %24 = tpu.matmul %21, %23, %cst_24 {dimension_numbers = #tpu.dot_dimension_numbers<[1], [0], [0], [1], [0, 0, 1, 1], [], []>} : vector<32x128xbf16>, vector<128x256xbf16>, vector<32x256xf32> -> vector<32x256xf32>
    %c0_25 = arith.constant 0 : index
    %c1_26 = arith.constant 1 : index
    %c0_27 = arith.constant 0 : index
    %25 = vector.load %arg11[%c0_25, %c1_26, %c0_27] : memref<2x18x128xf32, #tpu.memory_space<vmem>>, vector<2x16x128xf32>
    %26 = vector.shape_cast %25 : vector<2x16x128xf32> to vector<32x128xf32>
    %27 = arith.truncf %26 : vector<32x128xf32> to vector<32x128xbf16>
    %c1_28 = arith.constant 1 : index
    %c0_29 = arith.constant 0 : index
    %c0_30 = arith.constant 0 : index
    %28 = vector.load %arg5[%c1_28, %c0_29, %c0_30] : memref<6x128x256xbf16, #tpu.memory_space<vmem>>, vector<1x128x256xbf16>
    %29 = vector.shape_cast %28 : vector<1x128x256xbf16> to vector<128x256xbf16>
    %cst_31 = arith.constant dense<0.000000e+00> : vector<32x256xf32>
    %30 = tpu.matmul %27, %29, %cst_31 {dimension_numbers = #tpu.dot_dimension_numbers<[1], [0], [0], [1], [0, 0, 1, 1], [], []>} : vector<32x128xbf16>, vector<128x256xbf16>, vector<32x256xf32> -> vector<32x256xf32>
    %31 = arith.addf %24, %30 : vector<32x256xf32>
    %c0_32 = arith.constant 0 : index
    %c2 = arith.constant 2 : index
    %c0_33 = arith.constant 0 : index
    %32 = vector.load %arg11[%c0_32, %c2, %c0_33] : memref<2x18x128xf32, #tpu.memory_space<vmem>>, vector<2x16x128xf32>
    %33 = vector.shape_cast %32 : vector<2x16x128xf32> to vector<32x128xf32>
    %34 = arith.truncf %33 : vector<32x128xf32> to vector<32x128xbf16>
    %c2_34 = arith.constant 2 : index
    %c0_35 = arith.constant 0 : index
    %c0_36 = arith.constant 0 : index
    %35 = vector.load %arg5[%c2_34, %c0_35, %c0_36] : memref<6x128x256xbf16, #tpu.memory_space<vmem>>, vector<1x128x256xbf16>
    %36 = vector.shape_cast %35 : vector<1x128x256xbf16> to vector<128x256xbf16>
    %cst_37 = arith.constant dense<0.000000e+00> : vector<32x256xf32>
    %37 = tpu.matmul %34, %36, %cst_37 {dimension_numbers = #tpu.dot_dimension_numbers<[1], [0], [0], [1], [0, 0, 1, 1], [], []>} : vector<32x128xbf16>, vector<128x256xbf16>, vector<32x256xf32> -> vector<32x256xf32>
    %38 = arith.addf %31, %37 : vector<32x256xf32>
    %c0_38 = arith.constant 0 : index
    %c0_39 = arith.constant 0 : index
    %c0_40 = arith.constant 0 : index
    %39 = vector.load %arg6[%c0_38, %c0_39, %c0_40] : memref<2x1x256xf32, #tpu.memory_space<vmem>>, vector<1x1x256xf32>
    %40 = vector.shape_cast %39 : vector<1x1x256xf32> to vector<1x256xf32>
    %41 = vector.broadcast %40 : vector<1x256xf32> to vector<32x256xf32>
    %42 = arith.addf %38, %41 : vector<32x256xf32>
    %43 = vector.extract_strided_slice %42 {offsets = [0, 0], sizes = [32, 128], strides = [1, 1]} : vector<32x256xf32> to vector<32x128xf32>
    %44 = vector.extract_strided_slice %42 {offsets = [0, 128], sizes = [32, 128], strides = [1, 1]} : vector<32x256xf32> to vector<32x128xf32>
    %45 = arith.negf %44 : vector<32x128xf32>
    %46 = math.exp %45 : vector<32x128xf32>
    %cst_41 = arith.constant 1.000000e+00 : f32
    %47 = vector.broadcast %cst_41 : f32 to vector<32x128xf32>
    %48 = arith.addf %47, %46 : vector<32x128xf32>
    %49 = arith.divf %47, %48 : vector<32x128xf32>
    %50 = arith.mulf %43, %49 : vector<32x128xf32>
    %51 = arith.addf %50, %16 : vector<32x128xf32>
    %cst_42 = arith.constant 0.707106769 : f32
    %52 = vector.broadcast %cst_42 : f32 to vector<32x128xf32>
    %53 = arith.mulf %51, %52 : vector<32x128xf32>
    %54 = vector.shape_cast %53 : vector<32x128xf32> to vector<2x16x128xf32>
    %c0_43 = arith.constant 0 : index
    %c1_44 = arith.constant 1 : index
    %c0_45 = arith.constant 0 : index
    %55 = vector.load %arg11[%c0_43, %c1_44, %c0_45] : memref<2x18x128xf32, #tpu.memory_space<vmem>>, vector<2x16x128xf32>
    tpu.vector_store %arg11[%c0_43, %c1_44, %c0_45], %54 {strides = array<i32>} : memref<2x18x128xf32, #tpu.memory_space<vmem>>, vector<2x16x128xf32>,
    %c0_46 = arith.constant 0 : index
    %c0_47 = arith.constant 0 : index
    %c0_48 = arith.constant 0 : index
    %56 = vector.load %arg11[%c0_46, %c0_47, %c0_48] : memref<2x18x128xf32, #tpu.memory_space<vmem>>, vector<2x16x128xf32>
    %57 = vector.shape_cast %56 : vector<2x16x128xf32> to vector<32x128xf32>
    %58 = arith.truncf %57 : vector<32x128xf32> to vector<32x128xbf16>
    %c3 = arith.constant 3 : index
    %c0_49 = arith.constant 0 : index
    %c0_50 = arith.constant 0 : index
    %59 = vector.load %arg5[%c3, %c0_49, %c0_50] : memref<6x128x256xbf16, #tpu.memory_space<vmem>>, vector<1x128x256xbf16>
    %60 = vector.shape_cast %59 : vector<1x128x256xbf16> to vector<128x256xbf16>
    %cst_51 = arith.constant dense<0.000000e+00> : vector<32x256xf32>
    %61 = tpu.matmul %58, %60, %cst_51 {dimension_numbers = #tpu.dot_dimension_numbers<[1], [0], [0], [1], [0, 0, 1, 1], [], []>} : vector<32x128xbf16>, vector<128x256xbf16>, vector<32x256xf32> -> vector<32x256xf32>
    %c0_52 = arith.constant 0 : index
    %c1_53 = arith.constant 1 : index
    %c0_54 = arith.constant 0 : index
    %62 = vector.load %arg11[%c0_52, %c1_53, %c0_54] : memref<2x18x128xf32, #tpu.memory_space<vmem>>, vector<2x16x128xf32>
    %63 = vector.shape_cast %62 : vector<2x16x128xf32> to vector<32x128xf32>
    %64 = arith.truncf %63 : vector<32x128xf32> to vector<32x128xbf16>
    %c4 = arith.constant 4 : index
    %c0_55 = arith.constant 0 : index
    %c0_56 = arith.constant 0 : index
    %65 = vector.load %arg5[%c4, %c0_55, %c0_56] : memref<6x128x256xbf16, #tpu.memory_space<vmem>>, vector<1x128x256xbf16>
    %66 = vector.shape_cast %65 : vector<1x128x256xbf16> to vector<128x256xbf16>
    %cst_57 = arith.constant dense<0.000000e+00> : vector<32x256xf32>
    %67 = tpu.matmul %64, %66, %cst_57 {dimension_numbers = #tpu.dot_dimension_numbers<[1], [0], [0], [1], [0, 0, 1, 1], [], []>} : vector<32x128xbf16>, vector<128x256xbf16>, vector<32x256xf32> -> vector<32x256xf32>
    %68 = arith.addf %61, %67 : vector<32x256xf32>
    %c0_58 = arith.constant 0 : index
    %c2_59 = arith.constant 2 : index
    %c0_60 = arith.constant 0 : index
    %69 = vector.load %arg11[%c0_58, %c2_59, %c0_60] : memref<2x18x128xf32, #tpu.memory_space<vmem>>, vector<2x16x128xf32>
    %70 = vector.shape_cast %69 : vector<2x16x128xf32> to vector<32x128xf32>
    %71 = arith.truncf %70 : vector<32x128xf32> to vector<32x128xbf16>
    %c5 = arith.constant 5 : index
    %c0_61 = arith.constant 0 : index
    %c0_62 = arith.constant 0 : index
    %72 = vector.load %arg5[%c5, %c0_61, %c0_62] : memref<6x128x256xbf16, #tpu.memory_space<vmem>>, vector<1x128x256xbf16>
    %73 = vector.shape_cast %72 : vector<1x128x256xbf16> to vector<128x256xbf16>
    %cst_63 = arith.constant dense<0.000000e+00> : vector<32x256xf32>
    %74 = tpu.matmul %71, %73, %cst_63 {dimension_numbers = #tpu.dot_dimension_numbers<[1], [0], [0], [1], [0, 0, 1, 1], [], []>} : vector<32x128xbf16>, vector<128x256xbf16>, vector<32x256xf32> -> vector<32x256xf32>
    %75 = arith.addf %68, %74 : vector<32x256xf32>
    %c1_64 = arith.constant 1 : index
    %c0_65 = arith.constant 0 : index
    %c0_66 = arith.constant 0 : index
    %76 = vector.load %arg6[%c1_64, %c0_65, %c0_66] : memref<2x1x256xf32, #tpu.memory_space<vmem>>, vector<1x1x256xf32>
    %77 = vector.shape_cast %76 : vector<1x1x256xf32> to vector<1x256xf32>
    %78 = vector.broadcast %77 : vector<1x256xf32> to vector<32x256xf32>
    %79 = arith.addf %75, %78 : vector<32x256xf32>
    %80 = vector.extract_strided_slice %79 {offsets = [0, 0], sizes = [32, 128], strides = [1, 1]} : vector<32x256xf32> to vector<32x128xf32>
    %81 = vector.extract_strided_slice %79 {offsets = [0, 128], sizes = [32, 128], strides = [1, 1]} : vector<32x256xf32> to vector<32x128xf32>
    %82 = arith.negf %81 : vector<32x128xf32>
    %83 = math.exp %82 : vector<32x128xf32>
    %cst_67 = arith.constant 1.000000e+00 : f32
    %84 = vector.broadcast %cst_67 : f32 to vector<32x128xf32>
    %85 = arith.addf %84, %83 : vector<32x128xf32>
    %86 = arith.divf %84, %85 : vector<32x128xf32>
    %87 = arith.mulf %80, %86 : vector<32x128xf32>
    %88 = arith.addf %87, %53 : vector<32x128xf32>
    %cst_68 = arith.constant 0.707106769 : f32
    %89 = vector.broadcast %cst_68 : f32 to vector<32x128xf32>
    %90 = arith.mulf %88, %89 : vector<32x128xf32>
    %91 = arith.truncf %90 : vector<32x128xf32> to vector<32x128xbf16>
    %c0_69 = arith.constant 0 : index
    %c0_70 = arith.constant 0 : index
    %92 = vector.load %arg7[%c0_69, %c0_70] : memref<128x128xbf16, #tpu.memory_space<vmem>>, vector<128x128xbf16>
    %cst_71 = arith.constant dense<0.000000e+00> : vector<32x128xf32>
    %93 = tpu.matmul %91, %92, %cst_71 {dimension_numbers = #tpu.dot_dimension_numbers<[1], [0], [0], [1], [0, 0, 1, 1], [], []>} : vector<32x128xbf16>, vector<128x128xbf16>, vector<32x128xf32> -> vector<32x128xf32>
    %c0_72 = arith.constant 0 : index
    %c0_73 = arith.constant 0 : index
    %94 = vector.load %arg8[%c0_72, %c0_73] : memref<1x128xf32, #tpu.memory_space<vmem>>, vector<1x128xf32>
    %95 = vector.broadcast %94 : vector<1x128xf32> to vector<32x128xf32>
    %96 = arith.addf %93, %95 : vector<32x128xf32>
    %c0_74 = arith.constant 0 : index
    %c0_75 = arith.constant 0 : index
    %c0_76 = arith.constant 0 : index
    %97 = vector.load %arg1[%c0_74, %c0_75, %c0_76] : memref<2x16x128xbf16, #tpu.memory_space<vmem>>, vector<2x16x128xbf16>
    %98 = arith.extf %97 : vector<2x16x128xbf16> to vector<2x16x128xf32>
    %c0_77 = arith.constant 0 : index
    %c0_78 = arith.constant 0 : index
    %c0_79 = arith.constant 0 : index
    %99 = vector.load %arg2[%c0_77, %c0_78, %c0_79] : memref<1x16x128xbf16, #tpu.memory_space<vmem>>, vector<1x16x128xbf16>
    %100 = arith.extf %99 : vector<1x16x128xbf16> to vector<1x16x128xf32>
    %101 = vector.broadcast %100 : vector<1x16x128xf32> to vector<2x16x128xf32>
    %102 = arith.addf %98, %101 : vector<2x16x128xf32>
    %103 = vector.shape_cast %102 : vector<2x16x128xf32> to vector<32x128xf32>
    %104 = vector.shape_cast %96 : vector<32x128xf32> to vector<2x16x128xf32>
    %c0_80 = arith.constant 0 : index
    %c0_81 = arith.constant 0 : index
    %c0_82 = arith.constant 0 : index
    %105 = vector.load %arg9[%c0_80, %c0_81, %c0_82] : memref<2x16x128xf32, #tpu.memory_space<vmem>>, vector<2x16x128xf32>
    tpu.vector_store %arg9[%c0_80, %c0_81, %c0_82], %104 {strides = array<i32>} : memref<2x16x128xf32, #tpu.memory_space<vmem>>, vector<2x16x128xf32>,
    %106 = arith.addf %96, %103 : vector<32x128xf32>
    %cst_83 = arith.constant 0.707106769 : f32
    %107 = vector.broadcast %cst_83 : f32 to vector<32x128xf32>
    %108 = arith.mulf %106, %107 : vector<32x128xf32>
    %109 = vector.shape_cast %108 : vector<32x128xf32> to vector<2x16x128xf32>
    %c0_84 = arith.constant 0 : index
    %c0_85 = arith.constant 0 : index
    %c0_86 = arith.constant 0 : index
    %110 = vector.load %arg10[%c0_84, %c0_85, %c0_86] : memref<2x16x128xf32, #tpu.memory_space<vmem>>, vector<2x16x128xf32>
    tpu.vector_store %arg10[%c0_84, %c0_85, %c0_86], %109 {strides = array<i32>} : memref<2x16x128xf32, #tpu.memory_space<vmem>>, vector<2x16x128xf32>,
    return
  }
  func.func @transform_0(%arg0: i32) -> (i32, i32, i32) {
    %c0_i32 = arith.constant 0 : i32
    %c0_i32_0 = arith.constant 0 : i32
    %c0_i32_1 = arith.constant 0 : i32
    return %arg0, %c0_i32, %c0_i32_0 : i32, i32, i32
  }
  func.func @transform_1(%arg0: i32) -> (i32, i32, i32) {
    %c0_i32 = arith.constant 0 : i32
    %c0_i32_0 = arith.constant 0 : i32
    %c0_i32_1 = arith.constant 0 : i32
    %c0_i32_2 = arith.constant 0 : i32
    return %c0_i32, %c0_i32_0, %c0_i32_1 : i32, i32, i32
  }
  func.func @transform_2(%arg0: i32) -> (i32, i32) {
    %c0_i32 = arith.constant 0 : i32
    %c0_i32_0 = arith.constant 0 : i32
    %c0_i32_1 = arith.constant 0 : i32
    return %c0_i32, %c0_i32_0 : i32, i32
  }
  func.func @transform_3(%arg0: i32) -> (i32, i32) {
    %c0_i32 = arith.constant 0 : i32
    %c0_i32_0 = arith.constant 0 : i32
    %c0_i32_1 = arith.constant 0 : i32
    return %c0_i32, %c0_i32_0 : i32, i32
  }
  func.func @transform_4(%arg0: i32) -> (i32, i32, i32) {
    %c0_i32 = arith.constant 0 : i32
    %c0_i32_0 = arith.constant 0 : i32
    %c0_i32_1 = arith.constant 0 : i32
    %c0_i32_2 = arith.constant 0 : i32
    return %c0_i32, %c0_i32_0, %c0_i32_1 : i32, i32, i32
  }
  func.func @transform_5(%arg0: i32) -> (i32, i32, i32) {
    %c0_i32 = arith.constant 0 : i32
    %c0_i32_0 = arith.constant 0 : i32
    %c0_i32_1 = arith.constant 0 : i32
    %c0_i32_2 = arith.constant 0 : i32
    return %c0_i32, %c0_i32_0, %c0_i32_1 : i32, i32, i32
  }
  func.func @transform_6(%arg0: i32) -> (i32, i32) {
    %c0_i32 = arith.constant 0 : i32
    %c0_i32_0 = arith.constant 0 : i32
    %c0_i32_1 = arith.constant 0 : i32
    return %c0_i32, %c0_i32_0 : i32, i32
  }
  func.func @transform_7(%arg0: i32) -> (i32, i32) {
    %c0_i32 = arith.constant 0 : i32
    %c0_i32_0 = arith.constant 0 : i32
    %c0_i32_1 = arith.constant 0 : i32
    return %c0_i32, %c0_i32_0 : i32, i32
  }
  func.func @transform_8(%arg0: i32) -> (i32, i32, i32) {
    %c0_i32 = arith.constant 0 : i32
    %c0_i32_0 = arith.constant 0 : i32
    %c0_i32_1 = arith.constant 0 : i32
    return %arg0, %c0_i32, %c0_i32_0 : i32, i32, i32
  }
  func.func @transform_9(%arg0: i32) -> (i32, i32, i32) {
    %c0_i32 = arith.constant 0 : i32
    %c0_i32_0 = arith.constant 0 : i32
    %c0_i32_1 = arith.constant 0 : i32
    return %arg0, %c0_i32, %c0_i32_0 : i32, i32, i32
  }
}

</mosaic_0001>

<llo_original>
// kernel: tpu_custom_call.1
$region0: #{tpu_custom_call.1}
  #allocation0 [shape = 'u32[]', space=smem, size = 0x4, offset = 0x4, fixed_abs, tag = 'smem constant byte address 0x4 - core index']
  #allocation1 [shape = 'u32[72,128]{1,0:T(1,128)}', space=vmem, size = 0x9000, scoped, tag = 'internal scratch']
  #allocation2 [shape = 'f32[2,18,128]{2,1,0:T(8,128)}', space=vmem, size = 0x6000, scoped, tag = 'scratch operand']
  %s0 = inlined_call_operand.hbm [shape: bf16[2,16,128], index: 0, kind: input, shape index: {}]
  %s1 = inlined_call_operand.hbm [shape: bf16[1,16,128], index: 1, kind: input, shape index: {}]
  %s2 = inlined_call_operand.hbm [shape: bf16[128,128], index: 2, kind: input, shape index: {}]
  %s3 = inlined_call_operand.hbm [shape: f32[1,128], index: 3, kind: input, shape index: {}]
  %s4 = inlined_call_operand.hbm [shape: bf16[6,128,256], index: 4, kind: input, shape index: {}]
  %s5 = inlined_call_operand.vmem [shape: f32[2,1,256], index: 5, kind: input, shape index: {}]
  %s6 = inlined_call_operand.hbm [shape: bf16[128,128], index: 6, kind: input, shape index: {}]
  %s7 = inlined_call_operand.vmem [shape: f32[1,128], index: 7, kind: input, shape index: {}]
  %s8 = inlined_call_operand.hbm [shape: f32[2,16,128], index: 8, kind: output, shape index: {0}]
  %s9 = inlined_call_operand.hbm [shape: f32[2,16,128], index: 9, kind: output, shape index: {1}]
  %10 = xla_tuple %s8, %s9
  %s11 = sld [smem:[#allocation0]]
  $region74: #{tpu_custom_call.1} parent=0
    _
  %s13 = ssub.s32 1, %s11
  %s14 = scalar_select 0, %s13, %s11
  $region1: #{tpu_custom_call.1} parent=0
    #allocation3 [shape = 'u8[8192]{0}', space=vmem, size = 0x2000, scoped, tag = 'input window, operand 0, single buffered']
    #allocation4 [shape = 's32[1]{0}', space=sflag, size = 0x4, scoped, tag = 'scoped memory for tpu_custom_call.1']
    #allocation5 [shape = 's32[1]{0}', space=sflag, size = 0x4, scoped, tag = 'scoped memory for tpu_custom_call.1']
    #allocation6 [shape = 'u8[4096]{0}', space=vmem, size = 0x1000, scoped, tag = 'input window, operand 1, single buffered']
    #allocation7 [shape = 's32[1]{0}', space=sflag, size = 0x4, scoped, tag = 'scoped memory for tpu_custom_call.1']
    #allocation8 [shape = 'u8[32768]{0}', space=vmem, size = 0x8000, scoped, tag = 'input window, operand 2, single buffered']
    #allocation9 [shape = 'u8[512]{0}', space=vmem, size = 0x400, scoped, tag = 'input window, operand 3, single buffered']
    #allocation10 [shape = 's32[1]{0}', space=sflag, size = 0x4, scoped, tag = 'scoped memory for tpu_custom_call.1']
    #allocation11 [shape = 'u8[393216]{0}', space=vmem, size = 0x60000, scoped, tag = 'input window, operand 4, single buffered']
    #allocation12 [shape = 'u8[32768]{0}', space=vmem, size = 0x8000, scoped, tag = 'input window, operand 6, single buffered']
    #allocation13 [shape = 's32[1]{0}', space=sflag, size = 0x4, scoped, tag = 'scoped memory for tpu_custom_call.1']
    #allocation14 [shape = 'u8[16384]{0}', space=vmem, size = 0x4000, scoped, tag = 'output window, operand 0, single buffered']
    #allocation15 [shape = 'u8[16384]{0}', space=vmem, size = 0x4000, scoped, tag = 'output window, operand 1, single buffered']
    #allocation16 [shape = 's32[1]{0}', space=sflag, size = 0x4, scoped, tag = 'scoped memory for tpu_custom_call.1']
    %15 = vsyncpa [#allocation4], 0
    %16 = vsyncpa [#allocation7], 0
    %17 = vsyncpa [#allocation10], 0
    %18 = vsyncpa [#allocation13], 0
    %19 = vsyncpa [#allocation5], 0
    %20 = vsyncpa [#allocation16], 0
    // Predicated region
    $region2: #{tpu_custom_call.1} parent=1 // pred_check
      _
    $region3: #{tpu_custom_call.1} parent=1 // pred_check_branch
      %22 = sbr.rel (0) target = $region5
    $region4: #{tpu_custom_call.1} parent=1 // pred_region
      %24 = vsyncadd [#allocation4], 0
      %s25 = sshll.u32 %s0, 4
      %s26 = int_to_ptr.hbm [resolvable:$true] %s25
      %s27 = sshll.u32 [#allocation3], 4
      %s28 = int_to_ptr.vmem [resolvable:$true] %s27
      %33 = dma.hbm_to_vmem [thread:$0]  %s26, 256, %s28, [#allocation4], 64, 64, 4
    $region5: #{tpu_custom_call.1} parent=1 // pred_fallthru
      _
    // Predicated region
    $region6: #{tpu_custom_call.1} parent=1 // pred_check
      _
    $region7: #{tpu_custom_call.1} parent=1 // pred_check_branch
      %35 = sbr.rel (0) target = $region9
    $region8: #{tpu_custom_call.1} parent=1 // pred_region
      %37 = vsyncadd [#allocation7], 0
      %s38 = sshll.u32 %s1, 4
      %s39 = int_to_ptr.hbm [resolvable:$true] %s38
      %s40 = sshll.u32 [#allocation6], 4
      %s41 = int_to_ptr.vmem [resolvable:$true] %s40
      %46 = dma.hbm_to_vmem [thread:$0]  %s39, 128, %s41, [#allocation7], 64, 64, 4
    $region9: #{tpu_custom_call.1} parent=1 // pred_fallthru
      _
    // Predicated region
    $region10: #{tpu_custom_call.1} parent=1 // pred_check
      _
    $region11: #{tpu_custom_call.1} parent=1 // pred_check_branch
      %48 = sbr.rel (0) target = $region13
    $region12: #{tpu_custom_call.1} parent=1 // pred_region
      %50 = vsyncadd [#allocation7], 0
      %s51 = sshll.u32 %s2, 4
      %s52 = int_to_ptr.hbm [resolvable:$true] %s51
      %s53 = sshll.u32 [#allocation8], 4
      %s54 = int_to_ptr.vmem [resolvable:$true] %s53
      %59 = dma.hbm_to_vmem [thread:$0]  %s52, 1024, %s54, [#allocation7], 64, 64, 4
    $region13: #{tpu_custom_call.1} parent=1 // pred_fallthru
      _
    // Predicated region
    $region14: #{tpu_custom_call.1} parent=1 // pred_check
      _
    $region15: #{tpu_custom_call.1} parent=1 // pred_check_branch
      %61 = sbr.rel (0) target = $region17
    $region16: #{tpu_custom_call.1} parent=1 // pred_region
      %63 = vsyncadd [#allocation10], 0
      %s65 = sshll.u32 %s3, 4
      %s66 = int_to_ptr.hbm [resolvable:$true] %s65
      %s67 = sshll.u32 [#allocation9], 4
      %s68 = int_to_ptr.vmem [resolvable:$true] %s67
      %70 = dma.hbm_to_vmem [thread:$0]  %s66, 16, %s68, [#allocation10]
    $region17: #{tpu_custom_call.1} parent=1 // pred_fallthru
      _
    // Predicated region
    $region18: #{tpu_custom_call.1} parent=1 // pred_check
      _
    $region19: #{tpu_custom_call.1} parent=1 // pred_check_branch
      %72 = sbr.rel (0) target = $region21
    $region20: #{tpu_custom_call.1} parent=1 // pred_region
      %74 = vsyncadd [#allocation10], 0
      %s75 = sshll.u32 %s4, 4
      %s76 = int_to_ptr.hbm [resolvable:$true] %s75
      %s77 = sshll.u32 [#allocation11], 4
      %s78 = int_to_ptr.vmem [resolvable:$true] %s77
      %83 = dma.hbm_to_vmem [thread:$0]  %s76, 12288, %s78, [#allocation10], 128, 128, 8
    $region21: #{tpu_custom_call.1} parent=1 // pred_fallthru
      _
    // Predicated region
    $region22: #{tpu_custom_call.1} parent=1 // pred_check
      _
    $region23: #{tpu_custom_call.1} parent=1 // pred_check_branch
      %85 = sbr.rel (0) target = $region25
    $region24: #{tpu_custom_call.1} parent=1 // pred_region
      _
    $region25: #{tpu_custom_call.1} parent=1 // pred_fallthru
      _
    // Predicated region
    $region26: #{tpu_custom_call.1} parent=1 // pred_check
      _
    $region27: #{tpu_custom_call.1} parent=1 // pred_check_branch
      %87 = sbr.rel (0) target = $region29
    $region28: #{tpu_custom_call.1} parent=1 // pred_region
      %89 = vsyncadd [#allocation13], 0
      %s90 = sshll.u32 %s6, 4
      %s91 = int_to_ptr.hbm [resolvable:$true] %s90
      %s92 = sshll.u32 [#allocation12], 4
      %s93 = int_to_ptr.vmem [resolvable:$true] %s92
      %98 = dma.hbm_to_vmem [thread:$0]  %s91, 1024, %s93, [#allocation13], 64, 64, 4
    $region29: #{tpu_custom_call.1} parent=1 // pred_fallthru
      _
    // Predicated region
    $region30: #{tpu_custom_call.1} parent=1 // pred_check
      _
    $region31: #{tpu_custom_call.1} parent=1 // pred_check_branch
      %100 = sbr.rel (0) target = $region33
    $region32: #{tpu_custom_call.1} parent=1 // pred_region
      _
    $region33: #{tpu_custom_call.1} parent=1 // pred_fallthru
      _
    // Predicated region
    $region34: #{tpu_custom_call.1} parent=1 // pred_check
      _
    $region35: #{tpu_custom_call.1} parent=1 // pred_check_branch
      %102 = sbr.rel (0) target = $region37
    $region36: #{tpu_custom_call.1} parent=1 // pred_region
      %104 = dma.done [#allocation4], 256
    $region37: #{tpu_custom_call.1} parent=1 // pred_fallthru
      _
    // Predicated region
    $region38: #{tpu_custom_call.1} parent=1 // pred_check
      _
    $region39: #{tpu_custom_call.1} parent=1 // pred_check_branch
      %106 = sbr.rel (0) target = $region41
    $region40: #{tpu_custom_call.1} parent=1 // pred_region
      %108 = dma.done [#allocation7], 128
    $region41: #{tpu_custom_call.1} parent=1 // pred_fallthru
      _
    // Predicated region
    $region42: #{tpu_custom_call.1} parent=1 // pred_check
      _
    $region43: #{tpu_custom_call.1} parent=1 // pred_check_branch
      %110 = sbr.rel (0) target = $region45
    $region44: #{tpu_custom_call.1} parent=1 // pred_region
      %112 = dma.done [#allocation7], 1024
    $region45: #{tpu_custom_call.1} parent=1 // pred_fallthru
      _
    // Predicated region
    $region46: #{tpu_custom_call.1} parent=1 // pred_check
      _
    $region47: #{tpu_custom_call.1} parent=1 // pred_check_branch
      %114 = sbr.rel (0) target = $region49
    $region48: #{tpu_custom_call.1} parent=1 // pred_region
      %116 = dma.done [#allocation10], 16
    $region49: #{tpu_custom_call.1} parent=1 // pred_fallthru
      _
    // Predicated region
    $region50: #{tpu_custom_call.1} parent=1 // pred_check
      _
    $region51: #{tpu_custom_call.1} parent=1 // pred_check_branch
      %118 = sbr.rel (0) target = $region53
    $region52: #{tpu_custom_call.1} parent=1 // pred_region
      %120 = dma.done [#allocation10], 12288
    $region53: #{tpu_custom_call.1} parent=1 // pred_fallthru
      _
    // Predicated region
    $region54: #{tpu_custom_call.1} parent=1 // pred_check
      _
    $region55: #{tpu_custom_call.1} parent=1 // pred_check_branch
      %122 = sbr.rel (0) target = $region57
    $region56: #{tpu_custom_call.1} parent=1 // pred_region
      %124 = dma.done [#allocation13], 1024
    $region57: #{tpu_custom_call.1} parent=1 // pred_fallthru
      _
    %125 = vst [vmem:[#allocation2] sm:$0x1] 0.0
    %126 = vst [vmem:[#allocation2 + $0x18] sm:$0x1] 0.0
    %127 = vst [vmem:[#allocation2 + $0x11] sm:$0x1] 0.0
    %128 = vst [vmem:[#allocation2 + $0x29] sm:$0x1] 0.0
    %v129 = vld [vmem:[#allocation3] sm:$0xf]
    %v130 = vld [vmem:[#allocation3 + $0x4] sm:$0xf]
    %v131 = vld [vmem:[#allocation3 + $0x8] sm:$0xf]
    %v132 = vld [vmem:[#allocation3 + $0xc] sm:$0xf]
    %v133 = vunpack.c.l.bf16 %v129
    %v134 = vunpack.c.l.bf16 %v130
    %v135 = vunpack.c.l.bf16 %v131
    %v136 = vunpack.c.l.bf16 %v132
    %v137 = vld [vmem:[#allocation6] sm:$0xf]
    %v138 = vld [vmem:[#allocation6 + $0x4] sm:$0xf]
    %v139 = vunpack.c.l.bf16 %v137
    %v140 = vunpack.c.l.bf16 %v138
    %v141 = vadd.f32 %v133, %v139
    %v142 = vadd.f32 %v134, %v140
    %v143 = vadd.f32 %v135, %v139
    %v144 = vadd.f32 %v136, %v140
    %v145 = vpack.c.bf16 %v142, %v141
    %v146 = vpack.c.bf16 %v144, %v143
    %v147 = vld [vmem:[#allocation8] sm:$0xf]
    %v148 = vld [vmem:[#allocation8 + $0x4] sm:$0xf]
    %v149 = vld [vmem:[#allocation8 + $0x8] sm:$0xf]
    %v150 = vld [vmem:[#allocation8 + $0xc] sm:$0xf]
    %v151 = vld [vmem:[#allocation8 + $0x10] sm:$0xf]
    %v152 = vld [vmem:[#allocation8 + $0x14] sm:$0xf]
    %v153 = vld [vmem:[#allocation8 + $0x18] sm:$0xf]
    %v154 = vld [vmem:[#allocation8 + $0x1c] sm:$0xf]
    %v155 = vld [vmem:[#allocation8 + $0x20] sm:$0xf]
    %v156 = vld [vmem:[#allocation8 + $0x24] sm:$0xf]
    %v157 = vld [vmem:[#allocation8 + $0x28] sm:$0xf]
    %v158 = vld [vmem:[#allocation8 + $0x2c] sm:$0xf]
    %v159 = vld [vmem:[#allocation8 + $0x30] sm:$0xf]
    %v160 = vld [vmem:[#allocation8 + $0x34] sm:$0xf]
    %v161 = vld [vmem:[#allocation8 + $0x38] sm:$0xf]
    %v162 = vld [vmem:[#allocation8 + $0x3c] sm:$0xf]
    %v163 = vld [vmem:[#allocation9] sm:$0x1]
    %v165 = vperm.slane %v163, 0
    %v183 = vunpack.c.l.b16 %v147
    %v184 = vunpack.c.l.b16 %v148
    %v185 = vunpack.c.l.b16 %v149
    %v186 = vunpack.c.l.b16 %v150
    %v187 = vunpack.c.l.b16 %v151
    %v188 = vunpack.c.l.b16 %v152
    %v189 = vunpack.c.l.b16 %v153
    %v190 = vunpack.c.l.b16 %v154
    %v191 = vunpack.c.l.b16 %v155
    %v192 = vunpack.c.l.b16 %v156
    %v193 = vunpack.c.l.b16 %v157
    %v194 = vunpack.c.l.b16 %v158
    %v195 = vunpack.c.l.b16 %v159
    %v196 = vunpack.c.l.b16 %v160
    %v197 = vunpack.c.l.b16 %v161
    %v198 = vunpack.c.l.b16 %v162
    %v199 = vpack.c.b16 %v184, %v183
    %v200 = vpack.c.b16 %v186, %v185
    %v201 = vpack.c.b16 %v188, %v187
    %v202 = vpack.c.b16 %v190, %v189
    %v203 = vpack.c.b16 %v192, %v191
    %v204 = vpack.c.b16 %v194, %v193
    %v205 = vpack.c.b16 %v196, %v195
    %v206 = vpack.c.b16 %v198, %v197
    %215 = vmatpush.bf16.msra.mxu0 %v206
    %216 = vmatpush.bf16.msra.mxu0 %v205
    %217 = vmatpush.bf16.msra.mxu0 %v204
    %218 = vmatpush.bf16.msra.mxu0 %v203
    %219 = vmatpush.bf16.msra.mxu0 %v202
    %220 = vmatpush.bf16.msra.mxu0 %v201
    %221 = vmatpush.bf16.msra.mxu0 %v200
    %222 = vmatpush.bf16.msra.mxu0 %v199
    %223 = vmatmul.bf16.gmra.mxu0 %v145
    %v224 = vpop.f32.mrf.mxu0
    %v225 = vadd.f32 %v165, %v224
    %v226 = vpop.f32.mrf.mxu0
    %v227 = vadd.f32 %v165, %v226
    %228 = vmatmul.bf16.gmra.mxu0 %v146
    %v229 = vpop.f32.mrf.mxu0
    %v230 = vadd.f32 %v165, %v229
    %v231 = vpop.f32.mrf.mxu0
    %v232 = vadd.f32 %v165, %v231
    %233 = vdwg.mxu0
    %234 = vst [vmem:[#allocation2 + $0x1] sm:$0xff] %v225
    %235 = vst [vmem:[#allocation2 + $0x9] sm:$0xff] %v227
    %236 = vst [vmem:[#allocation2 + $0x19] sm:$0xff] %v230
    %237 = vst [vmem:[#allocation2 + $0x21] sm:$0xff] %v232
    %v238 = vld [vmem:[#allocation2] sm:$0xff]
    %v239 = vld [vmem:[#allocation2 + $0x8] sm:$0xff]
    %v240 = vld [vmem:[#allocation2 + $0x18] sm:$0xff]
    %v241 = vld [vmem:[#allocation2 + $0x20] sm:$0xff]
    %v242 = vpack.c.bf16 %v239, %v238
    %v243 = vpack.c.bf16 %v241, %v240
    %v244 = vld [vmem:[#allocation11] sm:$0xff]
    %v245 = vld [vmem:[#allocation11 + $0x8] sm:$0xff]
    %v246 = vld [vmem:[#allocation11 + $0x10] sm:$0xff]
    %v247 = vld [vmem:[#allocation11 + $0x18] sm:$0xff]
    %v248 = vld [vmem:[#allocation11 + $0x20] sm:$0xff]
    %v249 = vld [vmem:[#allocation11 + $0x28] sm:$0xff]
    %v250 = vld [vmem:[#allocation11 + $0x30] sm:$0xff]
    %v251 = vld [vmem:[#allocation11 + $0x38] sm:$0xff]
    %v252 = vld [vmem:[#allocation11 + $0x40] sm:$0xff]
    %v253 = vld [vmem:[#allocation11 + $0x48] sm:$0xff]
    %v254 = vld [vmem:[#allocation11 + $0x50] sm:$0xff]
    %v255 = vld [vmem:[#allocation11 + $0x58] sm:$0xff]
    %v256 = vld [vmem:[#allocation11 + $0x60] sm:$0xff]
    %v257 = vld [vmem:[#allocation11 + $0x68] sm:$0xff]
    %v258 = vld [vmem:[#allocation11 + $0x70] sm:$0xff]
    %v259 = vld [vmem:[#allocation11 + $0x78] sm:$0xff]
    %v260 = vld [vmem:[#allocation2 + $0x1] sm:$0xff]
    %v261 = vld [vmem:[#allocation2 + $0x9] sm:$0xff]
    %v262 = vld [vmem:[#allocation2 + $0x19] sm:$0xff]
    %v263 = vld [vmem:[#allocation2 + $0x21] sm:$0xff]
    %v264 = vpack.c.bf16 %v261, %v260
    %v265 = vpack.c.bf16 %v263, %v262
    %s266 = scalar_lea.vmem [#allocation11], 128
    %v267 = vld [vmem:[%s266] sm:$0xff]
    %v268 = vld [vmem:[%s266 + $0x8] sm:$0xff]
    %v269 = vld [vmem:[%s266 + $0x10] sm:$0xff]
    %v270 = vld [vmem:[%s266 + $0x18] sm:$0xff]
    %v271 = vld [vmem:[%s266 + $0x20] sm:$0xff]
    %v272 = vld [vmem:[%s266 + $0x28] sm:$0xff]
    %v273 = vld [vmem:[%s266 + $0x30] sm:$0xff]
    %v274 = vld [vmem:[%s266 + $0x38] sm:$0xff]
    %v275 = vld [vmem:[%s266 + $0x40] sm:$0xff]
    %v276 = vld [vmem:[%s266 + $0x48] sm:$0xff]
    %v277 = vld [vmem:[%s266 + $0x50] sm:$0xff]
    %v278 = vld [vmem:[%s266 + $0x58] sm:$0xff]
    %v279 = vld [vmem:[%s266 + $0x60] sm:$0xff]
    %v280 = vld [vmem:[%s266 + $0x68] sm:$0xff]
    %v281 = vld [vmem:[%s266 + $0x70] sm:$0xff]
    %v282 = vld [vmem:[%s266 + $0x78] sm:$0xff]
    %v299 = vunpack.c.l.b16 %v267
    %v300 = vunpack.c.h.b16 %v267
    %v301 = vunpack.c.l.b16 %v268
    %v302 = vunpack.c.h.b16 %v268
    %v303 = vunpack.c.l.b16 %v269
    %v304 = vunpack.c.h.b16 %v269
    %v305 = vunpack.c.l.b16 %v270
    %v306 = vunpack.c.h.b16 %v270
    %v307 = vunpack.c.l.b16 %v271
    %v308 = vunpack.c.h.b16 %v271
    %v309 = vunpack.c.l.b16 %v272
    %v310 = vunpack.c.h.b16 %v272
    %v311 = vunpack.c.l.b16 %v273
    %v312 = vunpack.c.h.b16 %v273
    %v313 = vunpack.c.l.b16 %v274
    %v314 = vunpack.c.h.b16 %v274
    %v315 = vunpack.c.l.b16 %v275
    %v316 = vunpack.c.h.b16 %v275
    %v317 = vunpack.c.l.b16 %v276
    %v318 = vunpack.c.h.b16 %v276
    %v319 = vunpack.c.l.b16 %v277
    %v320 = vunpack.c.h.b16 %v277
    %v321 = vunpack.c.l.b16 %v278
    %v322 = vunpack.c.h.b16 %v278
    %v323 = vunpack.c.l.b16 %v279
    %v324 = vunpack.c.h.b16 %v279
    %v325 = vunpack.c.l.b16 %v280
    %v326 = vunpack.c.h.b16 %v280
    %v327 = vunpack.c.l.b16 %v281
    %v328 = vunpack.c.h.b16 %v281
    %v329 = vunpack.c.l.b16 %v282
    %v330 = vunpack.c.h.b16 %v282
    %v331 = vpack.c.b16 %v301, %v299
    %v332 = vpack.c.b16 %v302, %v300
    %v333 = vpack.c.b16 %v305, %v303
    %v334 = vpack.c.b16 %v306, %v304
    %v335 = vpack.c.b16 %v309, %v307
    %v336 = vpack.c.b16 %v310, %v308
    %v337 = vpack.c.b16 %v313, %v311
    %v338 = vpack.c.b16 %v314, %v312
    %v339 = vpack.c.b16 %v317, %v315
    %v340 = vpack.c.b16 %v318, %v316
    %v341 = vpack.c.b16 %v321, %v319
    %v342 = vpack.c.b16 %v322, %v320
    %v343 = vpack.c.b16 %v325, %v323
    %v344 = vpack.c.b16 %v326, %v324
    %v345 = vpack.c.b16 %v329, %v327
    %v346 = vpack.c.b16 %v330, %v328
    %363 = vmatpush.bf16.msra.mxu0 %v345
    %364 = vmatpush.bf16.msra.mxu0 %v343
    %365 = vmatpush.bf16.msra.mxu0 %v341
    %366 = vmatpush.bf16.msra.mxu0 %v339
    %367 = vmatpush.bf16.msra.mxu0 %v337
    %368 = vmatpush.bf16.msra.mxu0 %v335
    %369 = vmatpush.bf16.msra.mxu0 %v333
    %370 = vmatpush.bf16.msra.mxu0 %v331
    %371 = vmatmul.bf16.gmra.mxu0 %v264
    %v372 = vpop.f32.mrf.mxu0
    %v373 = vadd.f32 0.0, %v372
    %v374 = vpop.f32.mrf.mxu0
    %v375 = vadd.f32 0.0, %v374
    %376 = vmatmul.bf16.gmra.mxu0 %v265
    %v377 = vpop.f32.mrf.mxu0
    %v378 = vadd.f32 0.0, %v377
    %v379 = vpop.f32.mrf.mxu0
    %v380 = vadd.f32 0.0, %v379
    %381 = vdwg.mxu0
    %382 = vmatpush.bf16.msra.mxu0 %v346
    %383 = vmatpush.bf16.msra.mxu0 %v344
    %384 = vmatpush.bf16.msra.mxu0 %v342
    %385 = vmatpush.bf16.msra.mxu0 %v340
    %386 = vmatpush.bf16.msra.mxu0 %v338
    %387 = vmatpush.bf16.msra.mxu0 %v336
    %388 = vmatpush.bf16.msra.mxu0 %v334
    %389 = vmatpush.bf16.msra.mxu0 %v332
    %390 = vmatmul.bf16.gmra.mxu0 %v264
    %v391 = vpop.f32.mrf.mxu0
    %v392 = vadd.f32 0.0, %v391
    %v393 = vpop.f32.mrf.mxu0
    %v394 = vadd.f32 0.0, %v393
    %395 = vmatmul.bf16.gmra.mxu0 %v265
    %v396 = vpop.f32.mrf.mxu0
    %v397 = vadd.f32 0.0, %v396
    %v398 = vpop.f32.mrf.mxu0
    %v399 = vadd.f32 0.0, %v398
    %400 = vdwg.mxu0
    %v417 = vunpack.c.l.b16 %v244
    %v418 = vunpack.c.h.b16 %v244
    %v419 = vunpack.c.l.b16 %v245
    %v420 = vunpack.c.h.b16 %v245
    %v421 = vunpack.c.l.b16 %v246
    %v422 = vunpack.c.h.b16 %v246
    %v423 = vunpack.c.l.b16 %v247
    %v424 = vunpack.c.h.b16 %v247
    %v425 = vunpack.c.l.b16 %v248
    %v426 = vunpack.c.h.b16 %v248
    %v427 = vunpack.c.l.b16 %v249
    %v428 = vunpack.c.h.b16 %v249
    %v429 = vunpack.c.l.b16 %v250
    %v430 = vunpack.c.h.b16 %v250
    %v431 = vunpack.c.l.b16 %v251
    %v432 = vunpack.c.h.b16 %v251
    %v433 = vunpack.c.l.b16 %v252
    %v434 = vunpack.c.h.b16 %v252
    %v435 = vunpack.c.l.b16 %v253
    %v436 = vunpack.c.h.b16 %v253
    %v437 = vunpack.c.l.b16 %v254
    %v438 = vunpack.c.h.b16 %v254
    %v439 = vunpack.c.l.b16 %v255
    %v440 = vunpack.c.h.b16 %v255
    %v441 = vunpack.c.l.b16 %v256
    %v442 = vunpack.c.h.b16 %v256
    %v443 = vunpack.c.l.b16 %v257
    %v444 = vunpack.c.h.b16 %v257
    %v445 = vunpack.c.l.b16 %v258
    %v446 = vunpack.c.h.b16 %v258
    %v447 = vunpack.c.l.b16 %v259
    %v448 = vunpack.c.h.b16 %v259
    %v449 = vpack.c.b16 %v419, %v417
    %v450 = vpack.c.b16 %v420, %v418
    %v451 = vpack.c.b16 %v423, %v421
    %v452 = vpack.c.b16 %v424, %v422
    %v453 = vpack.c.b16 %v427, %v425
    %v454 = vpack.c.b16 %v428, %v426
    %v455 = vpack.c.b16 %v431, %v429
    %v456 = vpack.c.b16 %v432, %v430
    %v457 = vpack.c.b16 %v435, %v433
    %v458 = vpack.c.b16 %v436, %v434
    %v459 = vpack.c.b16 %v439, %v437
    %v460 = vpack.c.b16 %v440, %v438
    %v461 = vpack.c.b16 %v443, %v441
    %v462 = vpack.c.b16 %v444, %v442
    %v463 = vpack.c.b16 %v447, %v445
    %v464 = vpack.c.b16 %v448, %v446
    %481 = vmatpush.bf16.msra.mxu0 %v463
    %482 = vmatpush.bf16.msra.mxu0 %v461
    %483 = vmatpush.bf16.msra.mxu0 %v459
    %484 = vmatpush.bf16.msra.mxu0 %v457
    %485 = vmatpush.bf16.msra.mxu0 %v455
    %486 = vmatpush.bf16.msra.mxu0 %v453
    %487 = vmatpush.bf16.msra.mxu0 %v451
    %488 = vmatpush.bf16.msra.mxu0 %v449
    %489 = vmatmul.bf16.gmra.mxu0 %v242
    %v490 = vpop.f32.mrf.mxu0
    %v491 = vadd.f32 %v373, %v490
    %v492 = vpop.f32.mrf.mxu0
    %v493 = vadd.f32 %v375, %v492
    %494 = vmatmul.bf16.gmra.mxu0 %v243
    %v495 = vpop.f32.mrf.mxu0
    %v496 = vadd.f32 %v378, %v495
    %v497 = vpop.f32.mrf.mxu0
    %v498 = vadd.f32 %v380, %v497
    %499 = vdwg.mxu0
    %500 = vmatpush.bf16.msra.mxu0 %v464
    %501 = vmatpush.bf16.msra.mxu0 %v462
    %502 = vmatpush.bf16.msra.mxu0 %v460
    %503 = vmatpush.bf16.msra.mxu0 %v458
    %504 = vmatpush.bf16.msra.mxu0 %v456
    %505 = vmatpush.bf16.msra.mxu0 %v454
    %506 = vmatpush.bf16.msra.mxu0 %v452
    %507 = vmatpush.bf16.msra.mxu0 %v450
    %508 = vmatmul.bf16.gmra.mxu0 %v242
    %v509 = vpop.f32.mrf.mxu0
    %v510 = vadd.f32 %v392, %v509
    %v511 = vpop.f32.mrf.mxu0
    %v512 = vadd.f32 %v394, %v511
    %513 = vmatmul.bf16.gmra.mxu0 %v243
    %v514 = vpop.f32.mrf.mxu0
    %v515 = vadd.f32 %v397, %v514
    %v516 = vpop.f32.mrf.mxu0
    %v517 = vadd.f32 %v399, %v516
    %518 = vdwg.mxu0
    %v519 = vld [vmem:[#allocation2 + $0x2] sm:$0xff]
    %v520 = vld [vmem:[#allocation2 + $0xa] sm:$0xff]
    %v521 = vld [vmem:[#allocation2 + $0x1a] sm:$0xff]
    %v522 = vld [vmem:[#allocation2 + $0x22] sm:$0xff]
    %v523 = vpack.c.bf16 %v520, %v519
    %v524 = vpack.c.bf16 %v522, %v521
    %s525 = scalar_lea.vmem [#allocation11], 256
    %v526 = vld [vmem:[%s525] sm:$0xff]
    %v527 = vld [vmem:[%s525 + $0x8] sm:$0xff]
    %v528 = vld [vmem:[%s525 + $0x10] sm:$0xff]
    %v529 = vld [vmem:[%s525 + $0x18] sm:$0xff]
    %v530 = vld [vmem:[%s525 + $0x20] sm:$0xff]
    %v531 = vld [vmem:[%s525 + $0x28] sm:$0xff]
    %v532 = vld [vmem:[%s525 + $0x30] sm:$0xff]
    %v533 = vld [vmem:[%s525 + $0x38] sm:$0xff]
    %v534 = vld [vmem:[%s525 + $0x40] sm:$0xff]
    %v535 = vld [vmem:[%s525 + $0x48] sm:$0xff]
    %v536 = vld [vmem:[%s525 + $0x50] sm:$0xff]
    %v537 = vld [vmem:[%s525 + $0x58] sm:$0xff]
    %v538 = vld [vmem:[%s525 + $0x60] sm:$0xff]
    %v539 = vld [vmem:[%s525 + $0x68] sm:$0xff]
    %v540 = vld [vmem:[%s525 + $0x70] sm:$0xff]
    %v541 = vld [vmem:[%s525 + $0x78] sm:$0xff]
    %v558 = vunpack.c.l.b16 %v526
    %v559 = vunpack.c.h.b16 %v526
    %v560 = vunpack.c.l.b16 %v527
    %v561 = vunpack.c.h.b16 %v527
    %v562 = vunpack.c.l.b16 %v528
    %v563 = vunpack.c.h.b16 %v528
    %v564 = vunpack.c.l.b16 %v529
    %v565 = vunpack.c.h.b16 %v529
    %v566 = vunpack.c.l.b16 %v530
    %v567 = vunpack.c.h.b16 %v530
    %v568 = vunpack.c.l.b16 %v531
    %v569 = vunpack.c.h.b16 %v531
    %v570 = vunpack.c.l.b16 %v532
    %v571 = vunpack.c.h.b16 %v532
    %v572 = vunpack.c.l.b16 %v533
    %v573 = vunpack.c.h.b16 %v533
    %v574 = vunpack.c.l.b16 %v534
    %v575 = vunpack.c.h.b16 %v534
    %v576 = vunpack.c.l.b16 %v535
    %v577 = vunpack.c.h.b16 %v535
    %v578 = vunpack.c.l.b16 %v536
    %v579 = vunpack.c.h.b16 %v536
    %v580 = vunpack.c.l.b16 %v537
    %v581 = vunpack.c.h.b16 %v537
    %v582 = vunpack.c.l.b16 %v538
    %v583 = vunpack.c.h.b16 %v538
    %v584 = vunpack.c.l.b16 %v539
    %v585 = vunpack.c.h.b16 %v539
    %v586 = vunpack.c.l.b16 %v540
    %v587 = vunpack.c.h.b16 %v540
    %v588 = vunpack.c.l.b16 %v541
    %v589 = vunpack.c.h.b16 %v541
    %v590 = vpack.c.b16 %v560, %v558
    %v591 = vpack.c.b16 %v561, %v559
    %v592 = vpack.c.b16 %v564, %v562
    %v593 = vpack.c.b16 %v565, %v563
    %v594 = vpack.c.b16 %v568, %v566
    %v595 = vpack.c.b16 %v569, %v567
    %v596 = vpack.c.b16 %v572, %v570
    %v597 = vpack.c.b16 %v573, %v571
    %v598 = vpack.c.b16 %v576, %v574
    %v599 = vpack.c.b16 %v577, %v575
    %v600 = vpack.c.b16 %v580, %v578
    %v601 = vpack.c.b16 %v581, %v579
    %v602 = vpack.c.b16 %v584, %v582
    %v603 = vpack.c.b16 %v585, %v583
    %v604 = vpack.c.b16 %v588, %v586
    %v605 = vpack.c.b16 %v589, %v587
    %622 = vmatpush.bf16.msra.mxu0 %v604
    %623 = vmatpush.bf16.msra.mxu0 %v602
    %624 = vmatpush.bf16.msra.mxu0 %v600
    %625 = vmatpush.bf16.msra.mxu0 %v598
    %626 = vmatpush.bf16.msra.mxu0 %v596
    %627 = vmatpush.bf16.msra.mxu0 %v594
    %628 = vmatpush.bf16.msra.mxu0 %v592
    %629 = vmatpush.bf16.msra.mxu0 %v590
    %630 = vmatmul.bf16.gmra.mxu0 %v523
    %v631 = vpop.f32.mrf.mxu0
    %v632 = vadd.f32 0.0, %v631
    %v633 = vpop.f32.mrf.mxu0
    %v634 = vadd.f32 0.0, %v633
    %635 = vmatmul.bf16.gmra.mxu0 %v524
    %v636 = vpop.f32.mrf.mxu0
    %v637 = vadd.f32 0.0, %v636
    %v638 = vpop.f32.mrf.mxu0
    %v639 = vadd.f32 0.0, %v638
    %640 = vdwg.mxu0
    %641 = vmatpush.bf16.msra.mxu0 %v605
    %642 = vmatpush.bf16.msra.mxu0 %v603
    %643 = vmatpush.bf16.msra.mxu0 %v601
    %644 = vmatpush.bf16.msra.mxu0 %v599
    %645 = vmatpush.bf16.msra.mxu0 %v597
    %646 = vmatpush.bf16.msra.mxu0 %v595
    %647 = vmatpush.bf16.msra.mxu0 %v593
    %648 = vmatpush.bf16.msra.mxu0 %v591
    %649 = vmatmul.bf16.gmra.mxu0 %v523
    %v650 = vpop.f32.mrf.mxu0
    %v651 = vadd.f32 0.0, %v650
    %v652 = vpop.f32.mrf.mxu0
    %v653 = vadd.f32 0.0, %v652
    %654 = vmatmul.bf16.gmra.mxu0 %v524
    %v655 = vpop.f32.mrf.mxu0
    %v656 = vadd.f32 0.0, %v655
    %v657 = vpop.f32.mrf.mxu0
    %v658 = vadd.f32 0.0, %v657
    %659 = vdwg.mxu0
    %v660 = vadd.f32 %v491, %v632
    %v661 = vadd.f32 %v510, %v651
    %v662 = vadd.f32 %v493, %v634
    %v663 = vadd.f32 %v512, %v653
    %v664 = vadd.f32 %v496, %v637
    %v665 = vadd.f32 %v515, %v656
    %v666 = vadd.f32 %v498, %v639
    %v667 = vadd.f32 %v517, %v658
    %v668 = vld [vmem:[%s5] sm:$0x3]
    %v670 = vperm.slane %v668, 0
    %v671 = vperm.slane %v668, 1
    %v674 = vadd.f32 %v660, %v670
    %v675 = vadd.f32 %v661, %v671
    %v676 = vadd.f32 %v662, %v670
    %v677 = vadd.f32 %v663, %v671
    %v678 = vadd.f32 %v664, %v670
    %v679 = vadd.f32 %v665, %v671
    %v680 = vadd.f32 %v666, %v670
    %v681 = vadd.f32 %v667, %v671
    %v682 = vxor.u32 %v675, 2147483648
    %v683 = vxor.u32 %v677, 2147483648
    %v684 = vxor.u32 %v679, 2147483648
    %v685 = vxor.u32 %v681, 2147483648
    %v686 = vmul.f32 %v682, 1.442695
    %v687 = vpow.pop %v686
    %v688 = vmul.f32 %v683, 1.442695
    %v689 = vpow.pop %v688
    %v690 = vmul.f32 %v684, 1.442695
    %v691 = vpow.pop %v690
    %v692 = vmul.f32 %v685, 1.442695
    %v693 = vpow.pop %v692
    %v694 = vadd.f32 %v687, 1.0
    %v695 = vadd.f32 %v689, 1.0
    %v696 = vadd.f32 %v691, 1.0
    %v697 = vadd.f32 %v693, 1.0
    %v698 = vrcp.pop %v694
    %v699 = vmul.f32 %v694, %v698
    %v700 = vsub.f32 1.0, %v699
    %v701 = vmul.f32 %v698, %v700
    %v702 = vadd.f32 %v698, %v701
    %vm703 = vweird.f32 %v694
    %vm704 = vweird.f32 %v698
    %vm705 = vmor %vm703, %vm704
    %v706 = vsel %vm705, %v698, %v702
    %v707 = vand.u32 2147483647, %v694
    %vm708 = vcmp.eq.f32.partialorder %v707, 8.507059e+37
    %v709 = vand.u32 %v694, 2147483648
    %v710 = vor.u32 1.1754944e-38, %v709
    %v711 = vsel %vm708, %v710, %v706
    %v712 = vmul.f32 1.0, %v711
    %v713 = vrcp.pop %v695
    %v714 = vmul.f32 %v695, %v713
    %v715 = vsub.f32 1.0, %v714
    %v716 = vmul.f32 %v713, %v715
    %v717 = vadd.f32 %v713, %v716
    %vm718 = vweird.f32 %v695
    %vm719 = vweird.f32 %v713
    %vm720 = vmor %vm718, %vm719
    %v721 = vsel %vm720, %v713, %v717
    %v722 = vand.u32 2147483647, %v695
    %vm723 = vcmp.eq.f32.partialorder %v722, 8.507059e+37
    %v724 = vand.u32 %v695, 2147483648
    %v725 = vor.u32 1.1754944e-38, %v724
    %v726 = vsel %vm723, %v725, %v721
    %v727 = vmul.f32 1.0, %v726
    %v728 = vrcp.pop %v696
    %v729 = vmul.f32 %v696, %v728
    %v730 = vsub.f32 1.0, %v729
    %v731 = vmul.f32 %v728, %v730
    %v732 = vadd.f32 %v728, %v731
    %vm733 = vweird.f32 %v696
    %vm734 = vweird.f32 %v728
    %vm735 = vmor %vm733, %vm734
    %v736 = vsel %vm735, %v728, %v732
    %v737 = vand.u32 2147483647, %v696
    %vm738 = vcmp.eq.f32.partialorder %v737, 8.507059e+37
    %v739 = vand.u32 %v696, 2147483648
    %v740 = vor.u32 1.1754944e-38, %v739
    %v741 = vsel %vm738, %v740, %v736
    %v742 = vmul.f32 1.0, %v741
    %v743 = vrcp.pop %v697
    %v744 = vmul.f32 %v697, %v743
    %v745 = vsub.f32 1.0, %v744
    %v746 = vmul.f32 %v743, %v745
    %v747 = vadd.f32 %v743, %v746
    %vm748 = vweird.f32 %v697
    %vm749 = vweird.f32 %v743
    %vm750 = vmor %vm748, %vm749
    %v751 = vsel %vm750, %v743, %v747
    %v752 = vand.u32 2147483647, %v697
    %vm753 = vcmp.eq.f32.partialorder %v752, 8.507059e+37
    %v754 = vand.u32 %v697, 2147483648
    %v755 = vor.u32 1.1754944e-38, %v754
    %v756 = vsel %vm753, %v755, %v751
    %v757 = vmul.f32 1.0, %v756
    %v758 = vmul.f32 %v674, %v712
    %v759 = vmul.f32 %v676, %v727
    %v760 = vmul.f32 %v678, %v742
    %v761 = vmul.f32 %v680, %v757
    %v762 = vadd.f32 %v758, %v225
    %v763 = vadd.f32 %v759, %v227
    %v764 = vadd.f32 %v760, %v230
    %v765 = vadd.f32 %v761, %v232
    %v766 = vmul.f32 %v762, 0.70710677
    %v767 = vmul.f32 %v763, 0.70710677
    %v768 = vmul.f32 %v764, 0.70710677
    %v769 = vmul.f32 %v765, 0.70710677
    %770 = vst [vmem:[#allocation2 + $0x1] sm:$0xff] %v766
    %771 = vst [vmem:[#allocation2 + $0x9] sm:$0xff] %v767
    %772 = vst [vmem:[#allocation2 + $0x19] sm:$0xff] %v768
    %773 = vst [vmem:[#allocation2 + $0x21] sm:$0xff] %v769
    %v774 = vld [vmem:[#allocation2] sm:$0xff]
    %v775 = vld [vmem:[#allocation2 + $0x8] sm:$0xff]
    %v776 = vld [vmem:[#allocation2 + $0x18] sm:$0xff]
    %v777 = vld [vmem:[#allocation2 + $0x20] sm:$0xff]
    %v778 = vpack.c.bf16 %v775, %v774
    %v779 = vpack.c.bf16 %v777, %v776
    %s780 = scalar_lea.vmem [#allocation11], 384
    %v781 = vld [vmem:[%s780] sm:$0xff]
    %v782 = vld [vmem:[%s780 + $0x8] sm:$0xff]
    %v783 = vld [vmem:[%s780 + $0x10] sm:$0xff]
    %v784 = vld [vmem:[%s780 + $0x18] sm:$0xff]
    %v785 = vld [vmem:[%s780 + $0x20] sm:$0xff]
    %v786 = vld [vmem:[%s780 + $0x28] sm:$0xff]
    %v787 = vld [vmem:[%s780 + $0x30] sm:$0xff]
    %v788 = vld [vmem:[%s780 + $0x38] sm:$0xff]
    %v789 = vld [vmem:[%s780 + $0x40] sm:$0xff]
    %v790 = vld [vmem:[%s780 + $0x48] sm:$0xff]
    %v791 = vld [vmem:[%s780 + $0x50] sm:$0xff]
    %v792 = vld [vmem:[%s780 + $0x58] sm:$0xff]
    %v793 = vld [vmem:[%s780 + $0x60] sm:$0xff]
    %v794 = vld [vmem:[%s780 + $0x68] sm:$0xff]
    %v795 = vld [vmem:[%s780 + $0x70] sm:$0xff]
    %v796 = vld [vmem:[%s780 + $0x78] sm:$0xff]
    %v797 = vld [vmem:[#allocation2 + $0x1] sm:$0xff]
    %v798 = vld [vmem:[#allocation2 + $0x9] sm:$0xff]
    %v799 = vld [vmem:[#allocation2 + $0x19] sm:$0xff]
    %v800 = vld [vmem:[#allocation2 + $0x21] sm:$0xff]
    %v801 = vpack.c.bf16 %v798, %v797
    %v802 = vpack.c.bf16 %v800, %v799
    %s803 = scalar_lea.vmem [#allocation11], 512
    %v804 = vld [vmem:[%s803] sm:$0xff]
    %v805 = vld [vmem:[%s803 + $0x8] sm:$0xff]
    %v806 = vld [vmem:[%s803 + $0x10] sm:$0xff]
    %v807 = vld [vmem:[%s803 + $0x18] sm:$0xff]
    %v808 = vld [vmem:[%s803 + $0x20] sm:$0xff]
    %v809 = vld [vmem:[%s803 + $0x28] sm:$0xff]
    %v810 = vld [vmem:[%s803 + $0x30] sm:$0xff]
    %v811 = vld [vmem:[%s803 + $0x38] sm:$0xff]
    %v812 = vld [vmem:[%s803 + $0x40] sm:$0xff]
    %v813 = vld [vmem:[%s803 + $0x48] sm:$0xff]
    %v814 = vld [vmem:[%s803 + $0x50] sm:$0xff]
    %v815 = vld [vmem:[%s803 + $0x58] sm:$0xff]
    %v816 = vld [vmem:[%s803 + $0x60] sm:$0xff]
    %v817 = vld [vmem:[%s803 + $0x68] sm:$0xff]
    %v818 = vld [vmem:[%s803 + $0x70] sm:$0xff]
    %v819 = vld [vmem:[%s803 + $0x78] sm:$0xff]
    %v836 = vunpack.c.l.b16 %v804
    %v837 = vunpack.c.h.b16 %v804
    %v838 = vunpack.c.l.b16 %v805
    %v839 = vunpack.c.h.b16 %v805
    %v840 = vunpack.c.l.b16 %v806
    %v841 = vunpack.c.h.b16 %v806
    %v842 = vunpack.c.l.b16 %v807
    %v843 = vunpack.c.h.b16 %v807
    %v844 = vunpack.c.l.b16 %v808
    %v845 = vunpack.c.h.b16 %v808
    %v846 = vunpack.c.l.b16 %v809
    %v847 = vunpack.c.h.b16 %v809
    %v848 = vunpack.c.l.b16 %v810
    %v849 = vunpack.c.h.b16 %v810
    %v850 = vunpack.c.l.b16 %v811
    %v851 = vunpack.c.h.b16 %v811
    %v852 = vunpack.c.l.b16 %v812
    %v853 = vunpack.c.h.b16 %v812
    %v854 = vunpack.c.l.b16 %v813
    %v855 = vunpack.c.h.b16 %v813
    %v856 = vunpack.c.l.b16 %v814
    %v857 = vunpack.c.h.b16 %v814
    %v858 = vunpack.c.l.b16 %v815
    %v859 = vunpack.c.h.b16 %v815
    %v860 = vunpack.c.l.b16 %v816
    %v861 = vunpack.c.h.b16 %v816
    %v862 = vunpack.c.l.b16 %v817
    %v863 = vunpack.c.h.b16 %v817
    %v864 = vunpack.c.l.b16 %v818
    %v865 = vunpack.c.h.b16 %v818
    %v866 = vunpack.c.l.b16 %v819
    %v867 = vunpack.c.h.b16 %v819
    %v868 = vpack.c.b16 %v838, %v836
    %v869 = vpack.c.b16 %v839, %v837
    %v870 = vpack.c.b16 %v842, %v840
    %v871 = vpack.c.b16 %v843, %v841
    %v872 = vpack.c.b16 %v846, %v844
    %v873 = vpack.c.b16 %v847, %v845
    %v874 = vpack.c.b16 %v850, %v848
    %v875 = vpack.c.b16 %v851, %v849
    %v876 = vpack.c.b16 %v854, %v852
    %v877 = vpack.c.b16 %v855, %v853
    %v878 = vpack.c.b16 %v858, %v856
    %v879 = vpack.c.b16 %v859, %v857
    %v880 = vpack.c.b16 %v862, %v860
    %v881 = vpack.c.b16 %v863, %v861
    %v882 = vpack.c.b16 %v866, %v864
    %v883 = vpack.c.b16 %v867, %v865
    %900 = vmatpush.bf16.msra.mxu0 %v882
    %901 = vmatpush.bf16.msra.mxu0 %v880
    %902 = vmatpush.bf16.msra.mxu0 %v878
    %903 = vmatpush.bf16.msra.mxu0 %v876
    %904 = vmatpush.bf16.msra.mxu0 %v874
    %905 = vmatpush.bf16.msra.mxu0 %v872
    %906 = vmatpush.bf16.msra.mxu0 %v870
    %907 = vmatpush.bf16.msra.mxu0 %v868
    %908 = vmatmul.bf16.gmra.mxu0 %v801
    %v909 = vpop.f32.mrf.mxu0
    %v910 = vadd.f32 0.0, %v909
    %v911 = vpop.f32.mrf.mxu0
    %v912 = vadd.f32 0.0, %v911
    %913 = vmatmul.bf16.gmra.mxu0 %v802
    %v914 = vpop.f32.mrf.mxu0
    %v915 = vadd.f32 0.0, %v914
    %v916 = vpop.f32.mrf.mxu0
    %v917 = vadd.f32 0.0, %v916
    %918 = vdwg.mxu0
    %919 = vmatpush.bf16.msra.mxu0 %v883
    %920 = vmatpush.bf16.msra.mxu0 %v881
    %921 = vmatpush.bf16.msra.mxu0 %v879
    %922 = vmatpush.bf16.msra.mxu0 %v877
    %923 = vmatpush.bf16.msra.mxu0 %v875
    %924 = vmatpush.bf16.msra.mxu0 %v873
    %925 = vmatpush.bf16.msra.mxu0 %v871
    %926 = vmatpush.bf16.msra.mxu0 %v869
    %927 = vmatmul.bf16.gmra.mxu0 %v801
    %v928 = vpop.f32.mrf.mxu0
    %v929 = vadd.f32 0.0, %v928
    %v930 = vpop.f32.mrf.mxu0
    %v931 = vadd.f32 0.0, %v930
    %932 = vmatmul.bf16.gmra.mxu0 %v802
    %v933 = vpop.f32.mrf.mxu0
    %v934 = vadd.f32 0.0, %v933
    %v935 = vpop.f32.mrf.mxu0
    %v936 = vadd.f32 0.0, %v935
    %937 = vdwg.mxu0
    %v954 = vunpack.c.l.b16 %v781
    %v955 = vunpack.c.h.b16 %v781
    %v956 = vunpack.c.l.b16 %v782
    %v957 = vunpack.c.h.b16 %v782
    %v958 = vunpack.c.l.b16 %v783
    %v959 = vunpack.c.h.b16 %v783
    %v960 = vunpack.c.l.b16 %v784
    %v961 = vunpack.c.h.b16 %v784
    %v962 = vunpack.c.l.b16 %v785
    %v963 = vunpack.c.h.b16 %v785
    %v964 = vunpack.c.l.b16 %v786
    %v965 = vunpack.c.h.b16 %v786
    %v966 = vunpack.c.l.b16 %v787
    %v967 = vunpack.c.h.b16 %v787
    %v968 = vunpack.c.l.b16 %v788
    %v969 = vunpack.c.h.b16 %v788
    %v970 = vunpack.c.l.b16 %v789
    %v971 = vunpack.c.h.b16 %v789
    %v972 = vunpack.c.l.b16 %v790
    %v973 = vunpack.c.h.b16 %v790
    %v974 = vunpack.c.l.b16 %v791
    %v975 = vunpack.c.h.b16 %v791
    %v976 = vunpack.c.l.b16 %v792
    %v977 = vunpack.c.h.b16 %v792
    %v978 = vunpack.c.l.b16 %v793
    %v979 = vunpack.c.h.b16 %v793
    %v980 = vunpack.c.l.b16 %v794
    %v981 = vunpack.c.h.b16 %v794
    %v982 = vunpack.c.l.b16 %v795
    %v983 = vunpack.c.h.b16 %v795
    %v984 = vunpack.c.l.b16 %v796
    %v985 = vunpack.c.h.b16 %v796
    %v986 = vpack.c.b16 %v956, %v954
    %v987 = vpack.c.b16 %v957, %v955
    %v988 = vpack.c.b16 %v960, %v958
    %v989 = vpack.c.b16 %v961, %v959
    %v990 = vpack.c.b16 %v964, %v962
    %v991 = vpack.c.b16 %v965, %v963
    %v992 = vpack.c.b16 %v968, %v966
    %v993 = vpack.c.b16 %v969, %v967
    %v994 = vpack.c.b16 %v972, %v970
    %v995 = vpack.c.b16 %v973, %v971
    %v996 = vpack.c.b16 %v976, %v974
    %v997 = vpack.c.b16 %v977, %v975
    %v998 = vpack.c.b16 %v980, %v978
    %v999 = vpack.c.b16 %v981, %v979
    %v1000 = vpack.c.b16 %v984, %v982
    %v1001 = vpack.c.b16 %v985, %v983
    %1018 = vmatpush.bf16.msra.mxu0 %v1000
    %1019 = vmatpush.bf16.msra.mxu0 %v998
    %1020 = vmatpush.bf16.msra.mxu0 %v996
    %1021 = vmatpush.bf16.msra.mxu0 %v994
    %1022 = vmatpush.bf16.msra.mxu0 %v992
    %1023 = vmatpush.bf16.msra.mxu0 %v990
    %1024 = vmatpush.bf16.msra.mxu0 %v988
    %1025 = vmatpush.bf16.msra.mxu0 %v986
    %1026 = vmatmul.bf16.gmra.mxu0 %v778
    %v1027 = vpop.f32.mrf.mxu0
    %v1028 = vadd.f32 %v910, %v1027
    %v1029 = vpop.f32.mrf.mxu0
    %v1030 = vadd.f32 %v912, %v1029
    %1031 = vmatmul.bf16.gmra.mxu0 %v779
    %v1032 = vpop.f32.mrf.mxu0
    %v1033 = vadd.f32 %v915, %v1032
    %v1034 = vpop.f32.mrf.mxu0
    %v1035 = vadd.f32 %v917, %v1034
    %1036 = vdwg.mxu0
    %1037 = vmatpush.bf16.msra.mxu0 %v1001
    %1038 = vmatpush.bf16.msra.mxu0 %v999
    %1039 = vmatpush.bf16.msra.mxu0 %v997
    %1040 = vmatpush.bf16.msra.mxu0 %v995
    %1041 = vmatpush.bf16.msra.mxu0 %v993
    %1042 = vmatpush.bf16.msra.mxu0 %v991
    %1043 = vmatpush.bf16.msra.mxu0 %v989
    %1044 = vmatpush.bf16.msra.mxu0 %v987
    %1045 = vmatmul.bf16.gmra.mxu0 %v778
    %v1046 = vpop.f32.mrf.mxu0
    %v1047 = vadd.f32 %v929, %v1046
    %v1048 = vpop.f32.mrf.mxu0
    %v1049 = vadd.f32 %v931, %v1048
    %1050 = vmatmul.bf16.gmra.mxu0 %v779
    %v1051 = vpop.f32.mrf.mxu0
    %v1052 = vadd.f32 %v934, %v1051
    %v1053 = vpop.f32.mrf.mxu0
    %v1054 = vadd.f32 %v936, %v1053
    %1055 = vdwg.mxu0
    %v1056 = vld [vmem:[#allocation2 + $0x2] sm:$0xff]
    %v1057 = vld [vmem:[#allocation2 + $0xa] sm:$0xff]
    %v1058 = vld [vmem:[#allocation2 + $0x1a] sm:$0xff]
    %v1059 = vld [vmem:[#allocation2 + $0x22] sm:$0xff]
    %v1060 = vpack.c.bf16 %v1057, %v1056
    %v1061 = vpack.c.bf16 %v1059, %v1058
    %s1062 = scalar_lea.vmem [#allocation11], 640
    %v1063 = vld [vmem:[%s1062] sm:$0xff]
    %v1064 = vld [vmem:[%s1062 + $0x8] sm:$0xff]
    %v1065 = vld [vmem:[%s1062 + $0x10] sm:$0xff]
    %v1066 = vld [vmem:[%s1062 + $0x18] sm:$0xff]
    %v1067 = vld [vmem:[%s1062 + $0x20] sm:$0xff]
    %v1068 = vld [vmem:[%s1062 + $0x28] sm:$0xff]
    %v1069 = vld [vmem:[%s1062 + $0x30] sm:$0xff]
    %v1070 = vld [vmem:[%s1062 + $0x38] sm:$0xff]
    %v1071 = vld [vmem:[%s1062 + $0x40] sm:$0xff]
    %v1072 = vld [vmem:[%s1062 + $0x48] sm:$0xff]
    %v1073 = vld [vmem:[%s1062 + $0x50] sm:$0xff]
    %v1074 = vld [vmem:[%s1062 + $0x58] sm:$0xff]
    %v1075 = vld [vmem:[%s1062 + $0x60] sm:$0xff]
    %v1076 = vld [vmem:[%s1062 + $0x68] sm:$0xff]
    %v1077 = vld [vmem:[%s1062 + $0x70] sm:$0xff]
    %v1078 = vld [vmem:[%s1062 + $0x78] sm:$0xff]
    %v1095 = vunpack.c.l.b16 %v1063
    %v1096 = vunpack.c.h.b16 %v1063
    %v1097 = vunpack.c.l.b16 %v1064
    %v1098 = vunpack.c.h.b16 %v1064
    %v1099 = vunpack.c.l.b16 %v1065
    %v1100 = vunpack.c.h.b16 %v1065
    %v1101 = vunpack.c.l.b16 %v1066
    %v1102 = vunpack.c.h.b16 %v1066
    %v1103 = vunpack.c.l.b16 %v1067
    %v1104 = vunpack.c.h.b16 %v1067
    %v1105 = vunpack.c.l.b16 %v1068
    %v1106 = vunpack.c.h.b16 %v1068
    %v1107 = vunpack.c.l.b16 %v1069
    %v1108 = vunpack.c.h.b16 %v1069
    %v1109 = vunpack.c.l.b16 %v1070
    %v1110 = vunpack.c.h.b16 %v1070
    %v1111 = vunpack.c.l.b16 %v1071
    %v1112 = vunpack.c.h.b16 %v1071
    %v1113 = vunpack.c.l.b16 %v1072
    %v1114 = vunpack.c.h.b16 %v1072
    %v1115 = vunpack.c.l.b16 %v1073
    %v1116 = vunpack.c.h.b16 %v1073
    %v1117 = vunpack.c.l.b16 %v1074
    %v1118 = vunpack.c.h.b16 %v1074
    %v1119 = vunpack.c.l.b16 %v1075
    %v1120 = vunpack.c.h.b16 %v1075
    %v1121 = vunpack.c.l.b16 %v1076
    %v1122 = vunpack.c.h.b16 %v1076
    %v1123 = vunpack.c.l.b16 %v1077
    %v1124 = vunpack.c.h.b16 %v1077
    %v1125 = vunpack.c.l.b16 %v1078
    %v1126 = vunpack.c.h.b16 %v1078
    %v1127 = vpack.c.b16 %v1097, %v1095
    %v1128 = vpack.c.b16 %v1098, %v1096
    %v1129 = vpack.c.b16 %v1101, %v1099
    %v1130 = vpack.c.b16 %v1102, %v1100
    %v1131 = vpack.c.b16 %v1105, %v1103
    %v1132 = vpack.c.b16 %v1106, %v1104
    %v1133 = vpack.c.b16 %v1109, %v1107
    %v1134 = vpack.c.b16 %v1110, %v1108
    %v1135 = vpack.c.b16 %v1113, %v1111
    %v1136 = vpack.c.b16 %v1114, %v1112
    %v1137 = vpack.c.b16 %v1117, %v1115
    %v1138 = vpack.c.b16 %v1118, %v1116
    %v1139 = vpack.c.b16 %v1121, %v1119
    %v1140 = vpack.c.b16 %v1122, %v1120
    %v1141 = vpack.c.b16 %v1125, %v1123
    %v1142 = vpack.c.b16 %v1126, %v1124
    %1159 = vmatpush.bf16.msra.mxu0 %v1141
    %1160 = vmatpush.bf16.msra.mxu0 %v1139
    %1161 = vmatpush.bf16.msra.mxu0 %v1137
    %1162 = vmatpush.bf16.msra.mxu0 %v1135
    %1163 = vmatpush.bf16.msra.mxu0 %v1133
    %1164 = vmatpush.bf16.msra.mxu0 %v1131
    %1165 = vmatpush.bf16.msra.mxu0 %v1129
    %1166 = vmatpush.bf16.msra.mxu0 %v1127
    %1167 = vmatmul.bf16.gmra.mxu0 %v1060
    %v1168 = vpop.f32.mrf.mxu0
    %v1169 = vadd.f32 0.0, %v1168
    %v1170 = vpop.f32.mrf.mxu0
    %v1171 = vadd.f32 0.0, %v1170
    %1172 = vmatmul.bf16.gmra.mxu0 %v1061
    %v1173 = vpop.f32.mrf.mxu0
    %v1174 = vadd.f32 0.0, %v1173
    %v1175 = vpop.f32.mrf.mxu0
    %v1176 = vadd.f32 0.0, %v1175
    %1177 = vdwg.mxu0
    %1178 = vmatpush.bf16.msra.mxu0 %v1142
    %1179 = vmatpush.bf16.msra.mxu0 %v1140
    %1180 = vmatpush.bf16.msra.mxu0 %v1138
    %1181 = vmatpush.bf16.msra.mxu0 %v1136
    %1182 = vmatpush.bf16.msra.mxu0 %v1134
    %1183 = vmatpush.bf16.msra.mxu0 %v1132
    %1184 = vmatpush.bf16.msra.mxu0 %v1130
    %1185 = vmatpush.bf16.msra.mxu0 %v1128
    %1186 = vmatmul.bf16.gmra.mxu0 %v1060
    %v1187 = vpop.f32.mrf.mxu0
    %v1188 = vadd.f32 0.0, %v1187
    %v1189 = vpop.f32.mrf.mxu0
    %v1190 = vadd.f32 0.0, %v1189
    %1191 = vmatmul.bf16.gmra.mxu0 %v1061
    %v1192 = vpop.f32.mrf.mxu0
    %v1193 = vadd.f32 0.0, %v1192
    %v1194 = vpop.f32.mrf.mxu0
    %v1195 = vadd.f32 0.0, %v1194
    %1196 = vdwg.mxu0
    %v1197 = vadd.f32 %v1028, %v1169
    %v1198 = vadd.f32 %v1047, %v1188
    %v1199 = vadd.f32 %v1030, %v1171
    %v1200 = vadd.f32 %v1049, %v1190
    %v1201 = vadd.f32 %v1033, %v1174
    %v1202 = vadd.f32 %v1052, %v1193
    %v1203 = vadd.f32 %v1035, %v1176
    %v1204 = vadd.f32 %v1054, %v1195
    %s1205 = scalar_lea.vmem %s5, 2
    %v1206 = vld [vmem:[%s1205] sm:$0x3]
    %v1208 = vperm.slane %v1206, 0
    %v1209 = vperm.slane %v1206, 1
    %v1212 = vadd.f32 %v1197, %v1208
    %v1213 = vadd.f32 %v1198, %v1209
    %v1214 = vadd.f32 %v1199, %v1208
    %v1215 = vadd.f32 %v1200, %v1209
    %v1216 = vadd.f32 %v1201, %v1208
    %v1217 = vadd.f32 %v1202, %v1209
    %v1218 = vadd.f32 %v1203, %v1208
    %v1219 = vadd.f32 %v1204, %v1209
    %v1220 = vxor.u32 %v1213, 2147483648
    %v1221 = vxor.u32 %v1215, 2147483648
    %v1222 = vxor.u32 %v1217, 2147483648
    %v1223 = vxor.u32 %v1219, 2147483648
    %v1224 = vmul.f32 %v1220, 1.442695
    %v1225 = vpow.pop %v1224
    %v1226 = vmul.f32 %v1221, 1.442695
    %v1227 = vpow.pop %v1226
    %v1228 = vmul.f32 %v1222, 1.442695
    %v1229 = vpow.pop %v1228
    %v1230 = vmul.f32 %v1223, 1.442695
    %v1231 = vpow.pop %v1230
    %v1232 = vadd.f32 %v1225, 1.0
    %v1233 = vadd.f32 %v1227, 1.0
    %v1234 = vadd.f32 %v1229, 1.0
    %v1235 = vadd.f32 %v1231, 1.0
    %v1236 = vrcp.pop %v1232
    %v1237 = vmul.f32 %v1232, %v1236
    %v1238 = vsub.f32 1.0, %v1237
    %v1239 = vmul.f32 %v1236, %v1238
    %v1240 = vadd.f32 %v1236, %v1239
    %vm1241 = vweird.f32 %v1232
    %vm1242 = vweird.f32 %v1236
    %vm1243 = vmor %vm1241, %vm1242
    %v1244 = vsel %vm1243, %v1236, %v1240
    %v1245 = vand.u32 2147483647, %v1232
    %vm1246 = vcmp.eq.f32.partialorder %v1245, 8.507059e+37
    %v1247 = vand.u32 %v1232, 2147483648
    %v1248 = vor.u32 1.1754944e-38, %v1247
    %v1249 = vsel %vm1246, %v1248, %v1244
    %v1250 = vmul.f32 1.0, %v1249
    %v1251 = vrcp.pop %v1233
    %v1252 = vmul.f32 %v1233, %v1251
    %v1253 = vsub.f32 1.0, %v1252
    %v1254 = vmul.f32 %v1251, %v1253
    %v1255 = vadd.f32 %v1251, %v1254
    %vm1256 = vweird.f32 %v1233
    %vm1257 = vweird.f32 %v1251
    %vm1258 = vmor %vm1256, %vm1257
    %v1259 = vsel %vm1258, %v1251, %v1255
    %v1260 = vand.u32 2147483647, %v1233
    %vm1261 = vcmp.eq.f32.partialorder %v1260, 8.507059e+37
    %v1262 = vand.u32 %v1233, 2147483648
    %v1263 = vor.u32 1.1754944e-38, %v1262
    %v1264 = vsel %vm1261, %v1263, %v1259
    %v1265 = vmul.f32 1.0, %v1264
    %v1266 = vrcp.pop %v1234
    %v1267 = vmul.f32 %v1234, %v1266
    %v1268 = vsub.f32 1.0, %v1267
    %v1269 = vmul.f32 %v1266, %v1268
    %v1270 = vadd.f32 %v1266, %v1269
    %vm1271 = vweird.f32 %v1234
    %vm1272 = vweird.f32 %v1266
    %vm1273 = vmor %vm1271, %vm1272
    %v1274 = vsel %vm1273, %v1266, %v1270
    %v1275 = vand.u32 2147483647, %v1234
    %vm1276 = vcmp.eq.f32.partialorder %v1275, 8.507059e+37
    %v1277 = vand.u32 %v1234, 2147483648
    %v1278 = vor.u32 1.1754944e-38, %v1277
    %v1279 = vsel %vm1276, %v1278, %v1274
    %v1280 = vmul.f32 1.0, %v1279
    %v1281 = vrcp.pop %v1235
    %v1282 = vmul.f32 %v1235, %v1281
    %v1283 = vsub.f32 1.0, %v1282
    %v1284 = vmul.f32 %v1281, %v1283
    %v1285 = vadd.f32 %v1281, %v1284
    %vm1286 = vweird.f32 %v1235
    %vm1287 = vweird.f32 %v1281
    %vm1288 = vmor %vm1286, %vm1287
    %v1289 = vsel %vm1288, %v1281, %v1285
    %v1290 = vand.u32 2147483647, %v1235
    %vm1291 = vcmp.eq.f32.partialorder %v1290, 8.507059e+37
    %v1292 = vand.u32 %v1235, 2147483648
    %v1293 = vor.u32 1.1754944e-38, %v1292
    %v1294 = vsel %vm1291, %v1293, %v1289
    %v1295 = vmul.f32 1.0, %v1294
    %v1296 = vmul.f32 %v1212, %v1250
    %v1297 = vmul.f32 %v1214, %v1265
    %v1298 = vmul.f32 %v1216, %v1280
    %v1299 = vmul.f32 %v1218, %v1295
    %v1300 = vadd.f32 %v1296, %v766
    %v1301 = vadd.f32 %v1297, %v767
    %v1302 = vadd.f32 %v1298, %v768
    %v1303 = vadd.f32 %v1299, %v769
    %v1304 = vmul.f32 %v1300, 0.70710677
    %v1305 = vmul.f32 %v1301, 0.70710677
    %v1306 = vmul.f32 %v1302, 0.70710677
    %v1307 = vmul.f32 %v1303, 0.70710677
    %v1308 = vpack.c.bf16 %v1305, %v1304
    %v1309 = vpack.c.bf16 %v1307, %v1306
    %v1310 = vld [vmem:[#allocation12] sm:$0xf]
    %v1311 = vld [vmem:[#allocation12 + $0x4] sm:$0xf]
    %v1312 = vld [vmem:[#allocation12 + $0x8] sm:$0xf]
    %v1313 = vld [vmem:[#allocation12 + $0xc] sm:$0xf]
    %v1314 = vld [vmem:[#allocation12 + $0x10] sm:$0xf]
    %v1315 = vld [vmem:[#allocation12 + $0x14] sm:$0xf]
    %v1316 = vld [vmem:[#allocation12 + $0x18] sm:$0xf]
    %v1317 = vld [vmem:[#allocation12 + $0x1c] sm:$0xf]
    %v1318 = vld [vmem:[#allocation12 + $0x20] sm:$0xf]
    %v1319 = vld [vmem:[#allocation12 + $0x24] sm:$0xf]
    %v1320 = vld [vmem:[#allocation12 + $0x28] sm:$0xf]
    %v1321 = vld [vmem:[#allocation12 + $0x2c] sm:$0xf]
    %v1322 = vld [vmem:[#allocation12 + $0x30] sm:$0xf]
    %v1323 = vld [vmem:[#allocation12 + $0x34] sm:$0xf]
    %v1324 = vld [vmem:[#allocation12 + $0x38] sm:$0xf]
    %v1325 = vld [vmem:[#allocation12 + $0x3c] sm:$0xf]
    %v1326 = vld [vmem:[%s7] sm:$0x1]
    %v1328 = vperm.slane %v1326, 0
    %v1346 = vunpack.c.l.b16 %v1310
    %v1347 = vunpack.c.l.b16 %v1311
    %v1348 = vunpack.c.l.b16 %v1312
    %v1349 = vunpack.c.l.b16 %v1313
    %v1350 = vunpack.c.l.b16 %v1314
    %v1351 = vunpack.c.l.b16 %v1315
    %v1352 = vunpack.c.l.b16 %v1316
    %v1353 = vunpack.c.l.b16 %v1317
    %v1354 = vunpack.c.l.b16 %v1318
    %v1355 = vunpack.c.l.b16 %v1319
    %v1356 = vunpack.c.l.b16 %v1320
    %v1357 = vunpack.c.l.b16 %v1321
    %v1358 = vunpack.c.l.b16 %v1322
    %v1359 = vunpack.c.l.b16 %v1323
    %v1360 = vunpack.c.l.b16 %v1324
    %v1361 = vunpack.c.l.b16 %v1325
    %v1362 = vpack.c.b16 %v1347, %v1346
    %v1363 = vpack.c.b16 %v1349, %v1348
    %v1364 = vpack.c.b16 %v1351, %v1350
    %v1365 = vpack.c.b16 %v1353, %v1352
    %v1366 = vpack.c.b16 %v1355, %v1354
    %v1367 = vpack.c.b16 %v1357, %v1356
    %v1368 = vpack.c.b16 %v1359, %v1358
    %v1369 = vpack.c.b16 %v1361, %v1360
    %1378 = vmatpush.bf16.msra.mxu0 %v1369
    %1379 = vmatpush.bf16.msra.mxu0 %v1368
    %1380 = vmatpush.bf16.msra.mxu0 %v1367
    %1381 = vmatpush.bf16.msra.mxu0 %v1366
    %1382 = vmatpush.bf16.msra.mxu0 %v1365
    %1383 = vmatpush.bf16.msra.mxu0 %v1364
    %1384 = vmatpush.bf16.msra.mxu0 %v1363
    %1385 = vmatpush.bf16.msra.mxu0 %v1362
    %1386 = vmatmul.bf16.gmra.mxu0 %v1308
    %v1387 = vpop.f32.mrf.mxu0
    %v1388 = vadd.f32 %v1328, %v1387
    %v1389 = vpop.f32.mrf.mxu0
    %v1390 = vadd.f32 %v1328, %v1389
    %1391 = vmatmul.bf16.gmra.mxu0 %v1309
    %v1392 = vpop.f32.mrf.mxu0
    %v1393 = vadd.f32 %v1328, %v1392
    %v1394 = vpop.f32.mrf.mxu0
    %v1395 = vadd.f32 %v1328, %v1394
    %1396 = vdwg.mxu0
    %v1397 = vld [vmem:[#allocation3] sm:$0xf]
    %v1398 = vld [vmem:[#allocation3 + $0x4] sm:$0xf]
    %v1399 = vld [vmem:[#allocation3 + $0x8] sm:$0xf]
    %v1400 = vld [vmem:[#allocation3 + $0xc] sm:$0xf]
    %v1401 = vunpack.c.l.bf16 %v1397
    %v1402 = vunpack.c.l.bf16 %v1398
    %v1403 = vunpack.c.l.bf16 %v1399
    %v1404 = vunpack.c.l.bf16 %v1400
    %v1405 = vld [vmem:[#allocation6] sm:$0xf]
    %v1406 = vld [vmem:[#allocation6 + $0x4] sm:$0xf]
    %v1407 = vunpack.c.l.bf16 %v1405
    %v1408 = vunpack.c.l.bf16 %v1406
    %v1409 = vadd.f32 %v1401, %v1407
    %v1410 = vadd.f32 %v1402, %v1408
    %v1411 = vadd.f32 %v1403, %v1407
    %v1412 = vadd.f32 %v1404, %v1408
    %1413 = vst [vmem:[#allocation14] sm:$0xff] %v1388
    %1414 = vst [vmem:[#allocation14 + $0x8] sm:$0xff] %v1390
    %1415 = vst [vmem:[#allocation14 + $0x10] sm:$0xff] %v1393
    %1416 = vst [vmem:[#allocation14 + $0x18] sm:$0xff] %v1395
    %v1417 = vadd.f32 %v1388, %v1409
    %v1418 = vadd.f32 %v1390, %v1410
    %v1419 = vadd.f32 %v1393, %v1411
    %v1420 = vadd.f32 %v1395, %v1412
    %v1421 = vmul.f32 %v1417, 0.70710677
    %v1422 = vmul.f32 %v1418, 0.70710677
    %v1423 = vmul.f32 %v1419, 0.70710677
    %v1424 = vmul.f32 %v1420, 0.70710677
    %1425 = vst [vmem:[#allocation15] sm:$0xff] %v1421
    %1426 = vst [vmem:[#allocation15 + $0x8] sm:$0xff] %v1422
    %1427 = vst [vmem:[#allocation15 + $0x10] sm:$0xff] %v1423
    %1428 = vst [vmem:[#allocation15 + $0x18] sm:$0xff] %v1424
    // Predicated region
    $region58: #{tpu_custom_call.1} parent=1 // pred_check
      _
    $region59: #{tpu_custom_call.1} parent=1 // pred_check_branch
      %1430 = sbr.rel (0) target = $region61
    $region60: #{tpu_custom_call.1} parent=1 // pred_region
      %1432 = vsyncadd [#allocation5], 0
      %s1433 = sshll.u32 [#allocation14], 4
      %s1434 = int_to_ptr.vmem [resolvable:$true] %s1433
      %s1435 = sshll.u32 %s8, 4
      %s1436 = int_to_ptr.hbm [resolvable:$true] %s1435
      %1441 = dma.vmem_to_hbm [thread:$0]  %s1434, 512, %s1436, [#allocation5], 128, 128, 8
    $region61: #{tpu_custom_call.1} parent=1 // pred_fallthru
      _
    // Predicated region
    $region62: #{tpu_custom_call.1} parent=1 // pred_check
      _
    $region63: #{tpu_custom_call.1} parent=1 // pred_check_branch
      %1443 = sbr.rel (0) target = $region65
    $region64: #{tpu_custom_call.1} parent=1 // pred_region
      %1445 = vsyncadd [#allocation16], 0
      %s1446 = sshll.u32 [#allocation15], 4
      %s1447 = int_to_ptr.vmem [resolvable:$true] %s1446
      %s1448 = sshll.u32 %s9, 4
      %s1449 = int_to_ptr.hbm [resolvable:$true] %s1448
      %1454 = dma.vmem_to_hbm [thread:$0]  %s1447, 512, %s1449, [#allocation16], 128, 128, 8
    $region65: #{tpu_custom_call.1} parent=1 // pred_fallthru
      _
    // Predicated region
    $region66: #{tpu_custom_call.1} parent=1 // pred_check
      _
    $region67: #{tpu_custom_call.1} parent=1 // pred_check_branch
      %1456 = sbr.rel (0) target = $region69
    $region68: #{tpu_custom_call.1} parent=1 // pred_region
      %1458 = dma.done [#allocation5], 512
    $region69: #{tpu_custom_call.1} parent=1 // pred_fallthru
      _
    // Predicated region
    $region70: #{tpu_custom_call.1} parent=1 // pred_check
      _
    $region71: #{tpu_custom_call.1} parent=1 // pred_check_branch
      %1460 = sbr.rel (0) target = $region73
    $region72: #{tpu_custom_call.1} parent=1 // pred_region
      %1462 = dma.done [#allocation16], 512
    $region73: #{tpu_custom_call.1} parent=1 // pred_fallthru
      _
    %1463 = vsyncpa [#allocation4], 1
    %1464 = vsyncpa [#allocation7], 1
    %1465 = vsyncpa [#allocation10], 1
    %1466 = vsyncpa [#allocation13], 1
    %1467 = vsyncpa [#allocation5], 1
    %1468 = vsyncpa [#allocation16], 1

// kernel: tpu_custom_call.1
$region0: #{tpu_custom_call.1}
  #allocation0 [shape = 'u32[]', space=smem, size = 0x4, offset = 0x4, fixed_abs, tag = 'smem constant byte address 0x4 - core index']
  #allocation1 [shape = 'u32[72,128]{1,0:T(1,128)}', space=vmem, size = 0x9000, scoped, tag = 'internal scratch']
  #allocation2 [shape = 'f32[2,18,128]{2,1,0:T(8,128)}', space=vmem, size = 0x6000, scoped, tag = 'scratch operand']
  %s0 = inlined_call_operand.hbm [shape: bf16[2,16,128], index: 0, kind: input, shape index: {}]
  %s1 = inlined_call_operand.hbm [shape: bf16[1,16,128], index: 1, kind: input, shape index: {}]
  %s2 = inlined_call_operand.hbm [shape: bf16[128,128], index: 2, kind: input, shape index: {}]
  %s3 = inlined_call_operand.hbm [shape: f32[1,128], index: 3, kind: input, shape index: {}]
  %s4 = inlined_call_operand.hbm [shape: bf16[6,128,256], index: 4, kind: input, shape index: {}]
  %s5 = inlined_call_operand.vmem [shape: f32[2,1,256], index: 5, kind: input, shape index: {}]
  %s6 = inlined_call_operand.hbm [shape: bf16[128,128], index: 6, kind: input, shape index: {}]
  %s7 = inlined_call_operand.vmem [shape: f32[1,128], index: 7, kind: input, shape index: {}]
  %s8 = inlined_call_operand.hbm [shape: f32[2,16,128], index: 8, kind: output, shape index: {0}]
  %s9 = inlined_call_operand.hbm [shape: f32[2,16,128], index: 9, kind: output, shape index: {1}]
  %10 = xla_tuple %s8, %s9
  %s11 = sld [smem:[#allocation0]]
  $region74: #{tpu_custom_call.1} parent=0
    _
  %s13 = ssub.s32 1, %s11
  %s14 = scalar_select 0, %s13, %s11
  $region1: #{tpu_custom_call.1} parent=0
    #allocation3 [shape = 'u8[8192]{0}', space=vmem, size = 0x2000, scoped, tag = 'input window, operand 0, single buffered']
    #allocation4 [shape = 's32[1]{0}', space=sflag, size = 0x4, scoped, tag = 'scoped memory for tpu_custom_call.1']
    #allocation5 [shape = 's32[1]{0}', space=sflag, size = 0x4, scoped, tag = 'scoped memory for tpu_custom_call.1']
    #allocation6 [shape = 'u8[4096]{0}', space=vmem, size = 0x1000, scoped, tag = 'input window, operand 1, single buffered']
    #allocation7 [shape = 's32[1]{0}', space=sflag, size = 0x4, scoped, tag = 'scoped memory for tpu_custom_call.1']
    #allocation8 [shape = 'u8[32768]{0}', space=vmem, size = 0x8000, scoped, tag = 'input window, operand 2, single buffered']
    #allocation9 [shape = 'u8[512]{0}', space=vmem, size = 0x400, scoped, tag = 'input window, operand 3, single buffered']
    #allocation10 [shape = 's32[1]{0}', space=sflag, size = 0x4, scoped, tag = 'scoped memory for tpu_custom_call.1']
    #allocation11 [shape = 'u8[393216]{0}', space=vmem, size = 0x60000, scoped, tag = 'input window, operand 4, single buffered']
    #allocation12 [shape = 'u8[32768]{0}', space=vmem, size = 0x8000, scoped, tag = 'input window, operand 6, single buffered']
    #allocation13 [shape = 's32[1]{0}', space=sflag, size = 0x4, scoped, tag = 'scoped memory for tpu_custom_call.1']
    #allocation14 [shape = 'u8[16384]{0}', space=vmem, size = 0x4000, scoped, tag = 'output window, operand 0, single buffered']
    #allocation15 [shape = 'u8[16384]{0}', space=vmem, size = 0x4000, scoped, tag = 'output window, operand 1, single buffered']
    #allocation16 [shape = 's32[1]{0}', space=sflag, size = 0x4, scoped, tag = 'scoped memory for tpu_custom_call.1']
    %15 = vsyncpa [#allocation4], 0
    %16 = vsyncpa [#allocation7], 0
    %17 = vsyncpa [#allocation10], 0
    %18 = vsyncpa [#allocation13], 0
    %19 = vsyncpa [#allocation5], 0
    %20 = vsyncpa [#allocation16], 0
    // Predicated region
    $region2: #{tpu_custom_call.1} parent=1 // pred_check
      _
    $region3: #{tpu_custom_call.1} parent=1 // pred_check_branch
      %22 = sbr.rel (0) target = $region5
    $region4: #{tpu_custom_call.1} parent=1 // pred_region
      %24 = vsyncadd [#allocation4], 0
      %s25 = sshll.u32 %s0, 4
      %s26 = int_to_ptr.hbm [resolvable:$true] %s25
      %s27 = sshll.u32 [#allocation3], 4
      %s28 = int_to_ptr.vmem [resolvable:$true] %s27
      %33 = dma.hbm_to_vmem [thread:$0]  %s26, 256, %s28, [#allocation4], 64, 64, 4
    $region5: #{tpu_custom_call.1} parent=1 // pred_fallthru
      _
    // Predicated region
    $region6: #{tpu_custom_call.1} parent=1 // pred_check
      _
    $region7: #{tpu_custom_call.1} parent=1 // pred_check_branch
      %35 = sbr.rel (0) target = $region9
    $region8: #{tpu_custom_call.1} parent=1 // pred_region
      %37 = vsyncadd [#allocation7], 0
      %s38 = sshll.u32 %s1, 4
      %s39 = int_to_ptr.hbm [resolvable:$true] %s38
      %s40 = sshll.u32 [#allocation6], 4
      %s41 = int_to_ptr.vmem [resolvable:$true] %s40
      %46 = dma.hbm_to_vmem [thread:$0]  %s39, 128, %s41, [#allocation7], 64, 64, 4
    $region9: #{tpu_custom_call.1} parent=1 // pred_fallthru
      _
    // Predicated region
    $region10: #{tpu_custom_call.1} parent=1 // pred_check
      _
    $region11: #{tpu_custom_call.1} parent=1 // pred_check_branch
      %48 = sbr.rel (0) target = $region13
    $region12: #{tpu_custom_call.1} parent=1 // pred_region
      %50 = vsyncadd [#allocation7], 0
      %s51 = sshll.u32 %s2, 4
      %s52 = int_to_ptr.hbm [resolvable:$true] %s51
      %s53 = sshll.u32 [#allocation8], 4
      %s54 = int_to_ptr.vmem [resolvable:$true] %s53
      %59 = dma.hbm_to_vmem [thread:$0]  %s52, 1024, %s54, [#allocation7], 64, 64, 4
    $region13: #{tpu_custom_call.1} parent=1 // pred_fallthru
      _
    // Predicated region
    $region14: #{tpu_custom_call.1} parent=1 // pred_check
      _
    $region15: #{tpu_custom_call.1} parent=1 // pred_check_branch
      %61 = sbr.rel (0) target = $region17
    $region16: #{tpu_custom_call.1} parent=1 // pred_region
      %63 = vsyncadd [#allocation10], 0
      %s65 = sshll.u32 %s3, 4
      %s66 = int_to_ptr.hbm [resolvable:$true] %s65
      %s67 = sshll.u32 [#allocation9], 4
      %s68 = int_to_ptr.vmem [resolvable:$true] %s67
      %70 = dma.hbm_to_vmem [thread:$0]  %s66, 16, %s68, [#allocation10]
    $region17: #{tpu_custom_call.1} parent=1 // pred_fallthru
      _
    // Predicated region
    $region18: #{tpu_custom_call.1} parent=1 // pred_check
      _
    $region19: #{tpu_custom_call.1} parent=1 // pred_check_branch
      %72 = sbr.rel (0) target = $region21
    $region20: #{tpu_custom_call.1} parent=1 // pred_region
      %74 = vsyncadd [#allocation10], 0
      %s75 = sshll.u32 %s4, 4
      %s76 = int_to_ptr.hbm [resolvable:$true] %s75
      %s77 = sshll.u32 [#allocation11], 4
      %s78 = int_to_ptr.vmem [resolvable:$true] %s77
      %83 = dma.hbm_to_vmem [thread:$0]  %s76, 12288, %s78, [#allocation10], 128, 128, 8
    $region21: #{tpu_custom_call.1} parent=1 // pred_fallthru
      _
    // Predicated region
    $region22: #{tpu_custom_call.1} parent=1 // pred_check
      _
    $region23: #{tpu_custom_call.1} parent=1 // pred_check_branch
      %85 = sbr.rel (0) target = $region25
    $region24: #{tpu_custom_call.1} parent=1 // pred_region
      _
    $region25: #{tpu_custom_call.1} parent=1 // pred_fallthru
      _
    // Predicated region
    $region26: #{tpu_custom_call.1} parent=1 // pred_check
      _
    $region27: #{tpu_custom_call.1} parent=1 // pred_check_branch
      %87 = sbr.rel (0) target = $region29
    $region28: #{tpu_custom_call.1} parent=1 // pred_region
      %89 = vsyncadd [#allocation13], 0
      %s90 = sshll.u32 %s6, 4
      %s91 = int_to_ptr.hbm [resolvable:$true] %s90
      %s92 = sshll.u32 [#allocation12], 4
      %s93 = int_to_ptr.vmem [resolvable:$true] %s92
      %98 = dma.hbm_to_vmem [thread:$0]  %s91, 1024, %s93, [#allocation13], 64, 64, 4
    $region29: #{tpu_custom_call.1} parent=1 // pred_fallthru
      _
    // Predicated region
    $region30: #{tpu_custom_call.1} parent=1 // pred_check
      _
    $region31: #{tpu_custom_call.1} parent=1 // pred_check_branch
      %100 = sbr.rel (0) target = $region33
    $region32: #{tpu_custom_call.1} parent=1 // pred_region
      _
    $region33: #{tpu_custom_call.1} parent=1 // pred_fallthru
      _
    // Predicated region
    $region34: #{tpu_custom_call.1} parent=1 // pred_check
      _
    $region35: #{tpu_custom_call.1} parent=1 // pred_check_branch
      %102 = sbr.rel (0) target = $region37
    $region36: #{tpu_custom_call.1} parent=1 // pred_region
      %104 = dma.done [#allocation4], 256
    $region37: #{tpu_custom_call.1} parent=1 // pred_fallthru
      _
    // Predicated region
    $region38: #{tpu_custom_call.1} parent=1 // pred_check
      _
    $region39: #{tpu_custom_call.1} parent=1 // pred_check_branch
      %106 = sbr.rel (0) target = $region41
    $region40: #{tpu_custom_call.1} parent=1 // pred_region
      %108 = dma.done [#allocation7], 128
    $region41: #{tpu_custom_call.1} parent=1 // pred_fallthru
      _
    // Predicated region
    $region42: #{tpu_custom_call.1} parent=1 // pred_check
      _
    $region43: #{tpu_custom_call.1} parent=1 // pred_check_branch
      %110 = sbr.rel (0) target = $region45
    $region44: #{tpu_custom_call.1} parent=1 // pred_region
      %112 = dma.done [#allocation7], 1024
    $region45: #{tpu_custom_call.1} parent=1 // pred_fallthru
      _
    // Predicated region
    $region46: #{tpu_custom_call.1} parent=1 // pred_check
      _
    $region47: #{tpu_custom_call.1} parent=1 // pred_check_branch
      %114 = sbr.rel (0) target = $region49
    $region48: #{tpu_custom_call.1} parent=1 // pred_region
      %116 = dma.done [#allocation10], 16
    $region49: #{tpu_custom_call.1} parent=1 // pred_fallthru
      _
    // Predicated region
    $region50: #{tpu_custom_call.1} parent=1 // pred_check
      _
    $region51: #{tpu_custom_call.1} parent=1 // pred_check_branch
      %118 = sbr.rel (0) target = $region53
    $region52: #{tpu_custom_call.1} parent=1 // pred_region
      %120 = dma.done [#allocation10], 12288
    $region53: #{tpu_custom_call.1} parent=1 // pred_fallthru
      _
    // Predicated region
    $region54: #{tpu_custom_call.1} parent=1 // pred_check
      _
    $region55: #{tpu_custom_call.1} parent=1 // pred_check_branch
      %122 = sbr.rel (0) target = $region57
    $region56: #{tpu_custom_call.1} parent=1 // pred_region
      %124 = dma.done [#allocation13], 1024
    $region57: #{tpu_custom_call.1} parent=1 // pred_fallthru
      _
    %125 = vst [vmem:[#allocation2] sm:$0x1] 0.0
    %126 = vst [vmem:[#allocation2 + $0x18] sm:$0x1] 0.0
    %127 = vst [vmem:[#allocation2 + $0x11] sm:$0x1] 0.0
    %128 = vst [vmem:[#allocation2 + $0x29] sm:$0x1] 0.0
    %v129 = vld [vmem:[#allocation3] sm:$0xf]
    %v130 = vld [vmem:[#allocation3 + $0x4] sm:$0xf]
    %v131 = vld [vmem:[#allocation3 + $0x8] sm:$0xf]
    %v132 = vld [vmem:[#allocation3 + $0xc] sm:$0xf]
    %v133 = vunpack.c.l.bf16 %v129
    %v134 = vunpack.c.l.bf16 %v130
    %v135 = vunpack.c.l.bf16 %v131
    %v136 = vunpack.c.l.bf16 %v132
    %v137 = vld [vmem:[#allocation6] sm:$0xf]
    %v138 = vld [vmem:[#allocation6 + $0x4] sm:$0xf]
    %v139 = vunpack.c.l.bf16 %v137
    %v140 = vunpack.c.l.bf16 %v138
    %v141 = vadd.f32 %v133, %v139
    %v142 = vadd.f32 %v134, %v140
    %v143 = vadd.f32 %v135, %v139
    %v144 = vadd.f32 %v136, %v140
    %v145 = vpack.c.bf16 %v142, %v141
    %v146 = vpack.c.bf16 %v144, %v143
    %v147 = vld [vmem:[#allocation8] sm:$0xf]
    %v148 = vld [vmem:[#allocation8 + $0x4] sm:$0xf]
    %v149 = vld [vmem:[#allocation8 + $0x8] sm:$0xf]
    %v150 = vld [vmem:[#allocation8 + $0xc] sm:$0xf]
    %v151 = vld [vmem:[#allocation8 + $0x10] sm:$0xf]
    %v152 = vld [vmem:[#allocation8 + $0x14] sm:$0xf]
    %v153 = vld [vmem:[#allocation8 + $0x18] sm:$0xf]
    %v154 = vld [vmem:[#allocation8 + $0x1c] sm:$0xf]
    %v155 = vld [vmem:[#allocation8 + $0x20] sm:$0xf]
    %v156 = vld [vmem:[#allocation8 + $0x24] sm:$0xf]
    %v157 = vld [vmem:[#allocation8 + $0x28] sm:$0xf]
    %v158 = vld [vmem:[#allocation8 + $0x2c] sm:$0xf]
    %v159 = vld [vmem:[#allocation8 + $0x30] sm:$0xf]
    %v160 = vld [vmem:[#allocation8 + $0x34] sm:$0xf]
    %v161 = vld [vmem:[#allocation8 + $0x38] sm:$0xf]
    %v162 = vld [vmem:[#allocation8 + $0x3c] sm:$0xf]
    %v163 = vld [vmem:[#allocation9] sm:$0x1]
    %v165 = vperm.slane %v163, 0
    %v183 = vunpack.c.l.b16 %v147
    %v184 = vunpack.c.l.b16 %v148
    %v185 = vunpack.c.l.b16 %v149
    %v186 = vunpack.c.l.b16 %v150
    %v187 = vunpack.c.l.b16 %v151
    %v188 = vunpack.c.l.b16 %v152
    %v189 = vunpack.c.l.b16 %v153
    %v190 = vunpack.c.l.b16 %v154
    %v191 = vunpack.c.l.b16 %v155
    %v192 = vunpack.c.l.b16 %v156
    %v193 = vunpack.c.l.b16 %v157
    %v194 = vunpack.c.l.b16 %v158
    %v195 = vunpack.c.l.b16 %v159
    %v196 = vunpack.c.l.b16 %v160
    %v197 = vunpack.c.l.b16 %v161
    %v198 = vunpack.c.l.b16 %v162
    %v199 = vpack.c.b16 %v184, %v183
    %v200 = vpack.c.b16 %v186, %v185
    %v201 = vpack.c.b16 %v188, %v187
    %v202 = vpack.c.b16 %v190, %v189
    %v203 = vpack.c.b16 %v192, %v191
    %v204 = vpack.c.b16 %v194, %v193
    %v205 = vpack.c.b16 %v196, %v195
    %v206 = vpack.c.b16 %v198, %v197
    %215 = vmatpush.bf16.msra.mxu0 %v206
    %216 = vmatpush.bf16.msra.mxu0 %v205
    %217 = vmatpush.bf16.msra.mxu0 %v204
    %218 = vmatpush.bf16.msra.mxu0 %v203
    %219 = vmatpush.bf16.msra.mxu0 %v202
    %220 = vmatpush.bf16.msra.mxu0 %v201
    %221 = vmatpush.bf16.msra.mxu0 %v200
    %222 = vmatpush.bf16.msra.mxu0 %v199
    %223 = vmatmul.bf16.gmra.mxu0 %v145
    %v224 = vpop.f32.mrf.mxu0
    %v225 = vadd.f32 %v165, %v224
    %v226 = vpop.f32.mrf.mxu0
    %v227 = vadd.f32 %v165, %v226
    %228 = vmatmul.bf16.gmra.mxu0 %v146
    %v229 = vpop.f32.mrf.mxu0
    %v230 = vadd.f32 %v165, %v229
    %v231 = vpop.f32.mrf.mxu0
    %v232 = vadd.f32 %v165, %v231
    %233 = vdwg.mxu0
    %234 = vst [vmem:[#allocation2 + $0x1] sm:$0xff] %v225
    %235 = vst [vmem:[#allocation2 + $0x9] sm:$0xff] %v227
    %236 = vst [vmem:[#allocation2 + $0x19] sm:$0xff] %v230
    %237 = vst [vmem:[#allocation2 + $0x21] sm:$0xff] %v232
    %v238 = vld [vmem:[#allocation2] sm:$0xff]
    %v239 = vld [vmem:[#allocation2 + $0x8] sm:$0xff]
    %v240 = vld [vmem:[#allocation2 + $0x18] sm:$0xff]
    %v241 = vld [vmem:[#allocation2 + $0x20] sm:$0xff]
    %v242 = vpack.c.bf16 %v239, %v238
    %v243 = vpack.c.bf16 %v241, %v240
    %v244 = vld [vmem:[#allocation11] sm:$0xff]
    %v245 = vld [vmem:[#allocation11 + $0x8] sm:$0xff]
    %v246 = vld [vmem:[#allocation11 + $0x10] sm:$0xff]
    %v247 = vld [vmem:[#allocation11 + $0x18] sm:$0xff]
    %v248 = vld [vmem:[#allocation11 + $0x20] sm:$0xff]
    %v249 = vld [vmem:[#allocation11 + $0x28] sm:$0xff]
    %v250 = vld [vmem:[#allocation11 + $0x30] sm:$0xff]
    %v251 = vld [vmem:[#allocation11 + $0x38] sm:$0xff]
    %v252 = vld [vmem:[#allocation11 + $0x40] sm:$0xff]
    %v253 = vld [vmem:[#allocation11 + $0x48] sm:$0xff]
    %v254 = vld [vmem:[#allocation11 + $0x50] sm:$0xff]
    %v255 = vld [vmem:[#allocation11 + $0x58] sm:$0xff]
    %v256 = vld [vmem:[#allocation11 + $0x60] sm:$0xff]
    %v257 = vld [vmem:[#allocation11 + $0x68] sm:$0xff]
    %v258 = vld [vmem:[#allocation11 + $0x70] sm:$0xff]
    %v259 = vld [vmem:[#allocation11 + $0x78] sm:$0xff]
    %v260 = vld [vmem:[#allocation2 + $0x1] sm:$0xff]
    %v261 = vld [vmem:[#allocation2 + $0x9] sm:$0xff]
    %v262 = vld [vmem:[#allocation2 + $0x19] sm:$0xff]
    %v263 = vld [vmem:[#allocation2 + $0x21] sm:$0xff]
    %v264 = vpack.c.bf16 %v261, %v260
    %v265 = vpack.c.bf16 %v263, %v262
    %s266 = scalar_lea.vmem [#allocation11], 128
    %v267 = vld [vmem:[%s266] sm:$0xff]
    %v268 = vld [vmem:[%s266 + $0x8] sm:$0xff]
    %v269 = vld [vmem:[%s266 + $0x10] sm:$0xff]
    %v270 = vld [vmem:[%s266 + $0x18] sm:$0xff]
    %v271 = vld [vmem:[%s266 + $0x20] sm:$0xff]
    %v272 = vld [vmem:[%s266 + $0x28] sm:$0xff]
    %v273 = vld [vmem:[%s266 + $0x30] sm:$0xff]
    %v274 = vld [vmem:[%s266 + $0x38] sm:$0xff]
    %v275 = vld [vmem:[%s266 + $0x40] sm:$0xff]
    %v276 = vld [vmem:[%s266 + $0x48] sm:$0xff]
    %v277 = vld [vmem:[%s266 + $0x50] sm:$0xff]
    %v278 = vld [vmem:[%s266 + $0x58] sm:$0xff]
    %v279 = vld [vmem:[%s266 + $0x60] sm:$0xff]
    %v280 = vld [vmem:[%s266 + $0x68] sm:$0xff]
    %v281 = vld [vmem:[%s266 + $0x70] sm:$0xff]
    %v282 = vld [vmem:[%s266 + $0x78] sm:$0xff]
    %v299 = vunpack.c.l.b16 %v267
    %v300 = vunpack.c.h.b16 %v267
    %v301 = vunpack.c.l.b16 %v268
    %v302 = vunpack.c.h.b16 %v268
    %v303 = vunpack.c.l.b16 %v269
    %v304 = vunpack.c.h.b16 %v269
    %v305 = vunpack.c.l.b16 %v270
    %v306 = vunpack.c.h.b16 %v270
    %v307 = vunpack.c.l.b16 %v271
    %v308 = vunpack.c.h.b16 %v271
    %v309 = vunpack.c.l.b16 %v272
    %v310 = vunpack.c.h.b16 %v272
    %v311 = vunpack.c.l.b16 %v273
    %v312 = vunpack.c.h.b16 %v273
    %v313 = vunpack.c.l.b16 %v274
    %v314 = vunpack.c.h.b16 %v274
    %v315 = vunpack.c.l.b16 %v275
    %v316 = vunpack.c.h.b16 %v275
    %v317 = vunpack.c.l.b16 %v276
    %v318 = vunpack.c.h.b16 %v276
    %v319 = vunpack.c.l.b16 %v277
    %v320 = vunpack.c.h.b16 %v277
    %v321 = vunpack.c.l.b16 %v278
    %v322 = vunpack.c.h.b16 %v278
    %v323 = vunpack.c.l.b16 %v279
    %v324 = vunpack.c.h.b16 %v279
    %v325 = vunpack.c.l.b16 %v280
    %v326 = vunpack.c.h.b16 %v280
    %v327 = vunpack.c.l.b16 %v281
    %v328 = vunpack.c.h.b16 %v281
    %v329 = vunpack.c.l.b16 %v282
    %v330 = vunpack.c.h.b16 %v282
    %v331 = vpack.c.b16 %v301, %v299
    %v332 = vpack.c.b16 %v302, %v300
    %v333 = vpack.c.b16 %v305, %v303
    %v334 = vpack.c.b16 %v306, %v304
    %v335 = vpack.c.b16 %v309, %v307
    %v336 = vpack.c.b16 %v310, %v308
    %v337 = vpack.c.b16 %v313, %v311
    %v338 = vpack.c.b16 %v314, %v312
    %v339 = vpack.c.b16 %v317, %v315
    %v340 = vpack.c.b16 %v318, %v316
    %v341 = vpack.c.b16 %v321, %v319
    %v342 = vpack.c.b16 %v322, %v320
    %v343 = vpack.c.b16 %v325, %v323
    %v344 = vpack.c.b16 %v326, %v324
    %v345 = vpack.c.b16 %v329, %v327
    %v346 = vpack.c.b16 %v330, %v328
    %363 = vmatpush.bf16.msra.mxu0 %v345
    %364 = vmatpush.bf16.msra.mxu0 %v343
    %365 = vmatpush.bf16.msra.mxu0 %v341
    %366 = vmatpush.bf16.msra.mxu0 %v339
    %367 = vmatpush.bf16.msra.mxu0 %v337
    %368 = vmatpush.bf16.msra.mxu0 %v335
    %369 = vmatpush.bf16.msra.mxu0 %v333
    %370 = vmatpush.bf16.msra.mxu0 %v331
    %371 = vmatmul.bf16.gmra.mxu0 %v264
    %v372 = vpop.f32.mrf.mxu0
    %v373 = vadd.f32 0.0, %v372
    %v374 = vpop.f32.mrf.mxu0
    %v375 = vadd.f32 0.0, %v374
    %376 = vmatmul.bf16.gmra.mxu0 %v265
    %v377 = vpop.f32.mrf.mxu0
    %v378 = vadd.f32 0.0, %v377
    %v379 = vpop.f32.mrf.mxu0
    %v380 = vadd.f32 0.0, %v379
    %381 = vdwg.mxu0
    %382 = vmatpush.bf16.msra.mxu0 %v346
    %383 = vmatpush.bf16.msra.mxu0 %v344
    %384 = vmatpush.bf16.msra.mxu0 %v342
    %385 = vmatpush.bf16.msra.mxu0 %v340
    %386 = vmatpush.bf16.msra.mxu0 %v338
    %387 = vmatpush.bf16.msra.mxu0 %v336
    %388 = vmatpush.bf16.msra.mxu0 %v334
    %389 = vmatpush.bf16.msra.mxu0 %v332
    %390 = vmatmul.bf16.gmra.mxu0 %v264
    %v391 = vpop.f32.mrf.mxu0
    %v392 = vadd.f32 0.0, %v391
    %v393 = vpop.f32.mrf.mxu0
    %v394 = vadd.f32 0.0, %v393
    %395 = vmatmul.bf16.gmra.mxu0 %v265
    %v396 = vpop.f32.mrf.mxu0
    %v397 = vadd.f32 0.0, %v396
    %v398 = vpop.f32.mrf.mxu0
    %v399 = vadd.f32 0.0, %v398
    %400 = vdwg.mxu0
    %v417 = vunpack.c.l.b16 %v244
    %v418 = vunpack.c.h.b16 %v244
    %v419 = vunpack.c.l.b16 %v245
    %v420 = vunpack.c.h.b16 %v245
    %v421 = vunpack.c.l.b16 %v246
    %v422 = vunpack.c.h.b16 %v246
    %v423 = vunpack.c.l.b16 %v247
    %v424 = vunpack.c.h.b16 %v247
    %v425 = vunpack.c.l.b16 %v248
    %v426 = vunpack.c.h.b16 %v248
    %v427 = vunpack.c.l.b16 %v249
    %v428 = vunpack.c.h.b16 %v249
    %v429 = vunpack.c.l.b16 %v250
    %v430 = vunpack.c.h.b16 %v250
    %v431 = vunpack.c.l.b16 %v251
    %v432 = vunpack.c.h.b16 %v251
    %v433 = vunpack.c.l.b16 %v252
    %v434 = vunpack.c.h.b16 %v252
    %v435 = vunpack.c.l.b16 %v253
    %v436 = vunpack.c.h.b16 %v253
    %v437 = vunpack.c.l.b16 %v254
    %v438 = vunpack.c.h.b16 %v254
    %v439 = vunpack.c.l.b16 %v255
    %v440 = vunpack.c.h.b16 %v255
    %v441 = vunpack.c.l.b16 %v256
    %v442 = vunpack.c.h.b16 %v256
    %v443 = vunpack.c.l.b16 %v257
    %v444 = vunpack.c.h.b16 %v257
    %v445 = vunpack.c.l.b16 %v258
    %v446 = vunpack.c.h.b16 %v258
    %v447 = vunpack.c.l.b16 %v259
    %v448 = vunpack.c.h.b16 %v259
    %v449 = vpack.c.b16 %v419, %v417
    %v450 = vpack.c.b16 %v420, %v418
    %v451 = vpack.c.b16 %v423, %v421
    %v452 = vpack.c.b16 %v424, %v422
    %v453 = vpack.c.b16 %v427, %v425
    %v454 = vpack.c.b16 %v428, %v426
    %v455 = vpack.c.b16 %v431, %v429
    %v456 = vpack.c.b16 %v432, %v430
    %v457 = vpack.c.b16 %v435, %v433
    %v458 = vpack.c.b16 %v436, %v434
    %v459 = vpack.c.b16 %v439, %v437
    %v460 = vpack.c.b16 %v440, %v438
    %v461 = vpack.c.b16 %v443, %v441
    %v462 = vpack.c.b16 %v444, %v442
    %v463 = vpack.c.b16 %v447, %v445
    %v464 = vpack.c.b16 %v448, %v446
    %481 = vmatpush.bf16.msra.mxu0 %v463
    %482 = vmatpush.bf16.msra.mxu0 %v461
    %483 = vmatpush.bf16.msra.mxu0 %v459
    %484 = vmatpush.bf16.msra.mxu0 %v457
    %485 = vmatpush.bf16.msra.mxu0 %v455
    %486 = vmatpush.bf16.msra.mxu0 %v453
    %487 = vmatpush.bf16.msra.mxu0 %v451
    %488 = vmatpush.bf16.msra.mxu0 %v449
    %489 = vmatmul.bf16.gmra.mxu0 %v242
    %v490 = vpop.f32.mrf.mxu0
    %v491 = vadd.f32 %v373, %v490
    %v492 = vpop.f32.mrf.mxu0
    %v493 = vadd.f32 %v375, %v492
    %494 = vmatmul.bf16.gmra.mxu0 %v243
    %v495 = vpop.f32.mrf.mxu0
    %v496 = vadd.f32 %v378, %v495
    %v497 = vpop.f32.mrf.mxu0
    %v498 = vadd.f32 %v380, %v497
    %499 = vdwg.mxu0
    %500 = vmatpush.bf16.msra.mxu0 %v464
    %501 = vmatpush.bf16.msra.mxu0 %v462
    %502 = vmatpush.bf16.msra.mxu0 %v460
    %503 = vmatpush.bf16.msra.mxu0 %v458
    %504 = vmatpush.bf16.msra.mxu0 %v456
    %505 = vmatpush.bf16.msra.mxu0 %v454
    %506 = vmatpush.bf16.msra.mxu0 %v452
    %507 = vmatpush.bf16.msra.mxu0 %v450
    %508 = vmatmul.bf16.gmra.mxu0 %v242
    %v509 = vpop.f32.mrf.mxu0
    %v510 = vadd.f32 %v392, %v509
    %v511 = vpop.f32.mrf.mxu0
    %v512 = vadd.f32 %v394, %v511
    %513 = vmatmul.bf16.gmra.mxu0 %v243
    %v514 = vpop.f32.mrf.mxu0
    %v515 = vadd.f32 %v397, %v514
    %v516 = vpop.f32.mrf.mxu0
    %v517 = vadd.f32 %v399, %v516
    %518 = vdwg.mxu0
    %v519 = vld [vmem:[#allocation2 + $0x2] sm:$0xff]
    %v520 = vld [vmem:[#allocation2 + $0xa] sm:$0xff]
    %v521 = vld [vmem:[#allocation2 + $0x1a] sm:$0xff]
    %v522 = vld [vmem:[#allocation2 + $0x22] sm:$0xff]
    %v523 = vpack.c.bf16 %v520, %v519
    %v524 = vpack.c.bf16 %v522, %v521
    %s525 = scalar_lea.vmem [#allocation11], 256
    %v526 = vld [vmem:[%s525] sm:$0xff]
    %v527 = vld [vmem:[%s525 + $0x8] sm:$0xff]
    %v528 = vld [vmem:[%s525 + $0x10] sm:$0xff]
    %v529 = vld [vmem:[%s525 + $0x18] sm:$0xff]
    %v530 = vld [vmem:[%s525 + $0x20] sm:$0xff]
    %v531 = vld [vmem:[%s525 + $0x28] sm:$0xff]
    %v532 = vld [vmem:[%s525 + $0x30] sm:$0xff]
    %v533 = vld [vmem:[%s525 + $0x38] sm:$0xff]
    %v534 = vld [vmem:[%s525 + $0x40] sm:$0xff]
    %v535 = vld [vmem:[%s525 + $0x48] sm:$0xff]
    %v536 = vld [vmem:[%s525 + $0x50] sm:$0xff]
    %v537 = vld [vmem:[%s525 + $0x58] sm:$0xff]
    %v538 = vld [vmem:[%s525 + $0x60] sm:$0xff]
    %v539 = vld [vmem:[%s525 + $0x68] sm:$0xff]
    %v540 = vld [vmem:[%s525 + $0x70] sm:$0xff]
    %v541 = vld [vmem:[%s525 + $0x78] sm:$0xff]
    %v558 = vunpack.c.l.b16 %v526
    %v559 = vunpack.c.h.b16 %v526
    %v560 = vunpack.c.l.b16 %v527
    %v561 = vunpack.c.h.b16 %v527
    %v562 = vunpack.c.l.b16 %v528
    %v563 = vunpack.c.h.b16 %v528
    %v564 = vunpack.c.l.b16 %v529
    %v565 = vunpack.c.h.b16 %v529
    %v566 = vunpack.c.l.b16 %v530
    %v567 = vunpack.c.h.b16 %v530
    %v568 = vunpack.c.l.b16 %v531
    %v569 = vunpack.c.h.b16 %v531
    %v570 = vunpack.c.l.b16 %v532
    %v571 = vunpack.c.h.b16 %v532
    %v572 = vunpack.c.l.b16 %v533
    %v573 = vunpack.c.h.b16 %v533
    %v574 = vunpack.c.l.b16 %v534
    %v575 = vunpack.c.h.b16 %v534
    %v576 = vunpack.c.l.b16 %v535
    %v577 = vunpack.c.h.b16 %v535
    %v578 = vunpack.c.l.b16 %v536
    %v579 = vunpack.c.h.b16 %v536
    %v580 = vunpack.c.l.b16 %v537
    %v581 = vunpack.c.h.b16 %v537
    %v582 = vunpack.c.l.b16 %v538
    %v583 = vunpack.c.h.b16 %v538
    %v584 = vunpack.c.l.b16 %v539
    %v585 = vunpack.c.h.b16 %v539
    %v586 = vunpack.c.l.b16 %v540
    %v587 = vunpack.c.h.b16 %v540
    %v588 = vunpack.c.l.b16 %v541
    %v589 = vunpack.c.h.b16 %v541
    %v590 = vpack.c.b16 %v560, %v558
    %v591 = vpack.c.b16 %v561, %v559
    %v592 = vpack.c.b16 %v564, %v562
    %v593 = vpack.c.b16 %v565, %v563
    %v594 = vpack.c.b16 %v568, %v566
    %v595 = vpack.c.b16 %v569, %v567
    %v596 = vpack.c.b16 %v572, %v570
    %v597 = vpack.c.b16 %v573, %v571
    %v598 = vpack.c.b16 %v576, %v574
    %v599 = vpack.c.b16 %v577, %v575
    %v600 = vpack.c.b16 %v580, %v578
    %v601 = vpack.c.b16 %v581, %v579
    %v602 = vpack.c.b16 %v584, %v582
    %v603 = vpack.c.b16 %v585, %v583
    %v604 = vpack.c.b16 %v588, %v586
    %v605 = vpack.c.b16 %v589, %v587
    %622 = vmatpush.bf16.msra.mxu0 %v604
    %623 = vmatpush.bf16.msra.mxu0 %v602
    %624 = vmatpush.bf16.msra.mxu0 %v600
    %625 = vmatpush.bf16.msra.mxu0 %v598
    %626 = vmatpush.bf16.msra.mxu0 %v596
    %627 = vmatpush.bf16.msra.mxu0 %v594
    %628 = vmatpush.bf16.msra.mxu0 %v592
    %629 = vmatpush.bf16.msra.mxu0 %v590
    %630 = vmatmul.bf16.gmra.mxu0 %v523
    %v631 = vpop.f32.mrf.mxu0
    %v632 = vadd.f32 0.0, %v631
    %v633 = vpop.f32.mrf.mxu0
    %v634 = vadd.f32 0.0, %v633
    %635 = vmatmul.bf16.gmra.mxu0 %v524
    %v636 = vpop.f32.mrf.mxu0
    %v637 = vadd.f32 0.0, %v636
    %v638 = vpop.f32.mrf.mxu0
    %v639 = vadd.f32 0.0, %v638
    %640 = vdwg.mxu0
    %641 = vmatpush.bf16.msra.mxu0 %v605
    %642 = vmatpush.bf16.msra.mxu0 %v603
    %643 = vmatpush.bf16.msra.mxu0 %v601
    %644 = vmatpush.bf16.msra.mxu0 %v599
    %645 = vmatpush.bf16.msra.mxu0 %v597
    %646 = vmatpush.bf16.msra.mxu0 %v595
    %647 = vmatpush.bf16.msra.mxu0 %v593
    %648 = vmatpush.bf16.msra.mxu0 %v591
    %649 = vmatmul.bf16.gmra.mxu0 %v523
    %v650 = vpop.f32.mrf.mxu0
    %v651 = vadd.f32 0.0, %v650
    %v652 = vpop.f32.mrf.mxu0
    %v653 = vadd.f32 0.0, %v652
    %654 = vmatmul.bf16.gmra.mxu0 %v524
    %v655 = vpop.f32.mrf.mxu0
    %v656 = vadd.f32 0.0, %v655
    %v657 = vpop.f32.mrf.mxu0
    %v658 = vadd.f32 0.0, %v657
    %659 = vdwg.mxu0
    %v660 = vadd.f32 %v491, %v632
    %v661 = vadd.f32 %v510, %v651
    %v662 = vadd.f32 %v493, %v634
    %v663 = vadd.f32 %v512, %v653
    %v664 = vadd.f32 %v496, %v637
    %v665 = vadd.f32 %v515, %v656
    %v666 = vadd.f32 %v498, %v639
    %v667 = vadd.f32 %v517, %v658
    %v668 = vld [vmem:[%s5] sm:$0x3]
    %v670 = vperm.slane %v668, 0
    %v671 = vperm.slane %v668, 1
    %v674 = vadd.f32 %v660, %v670
    %v675 = vadd.f32 %v661, %v671
    %v676 = vadd.f32 %v662, %v670
    %v677 = vadd.f32 %v663, %v671
    %v678 = vadd.f32 %v664, %v670
    %v679 = vadd.f32 %v665, %v671
    %v680 = vadd.f32 %v666, %v670
    %v681 = vadd.f32 %v667, %v671
    %v682 = vxor.u32 %v675, 2147483648
    %v683 = vxor.u32 %v677, 2147483648
    %v684 = vxor.u32 %v679, 2147483648
    %v685 = vxor.u32 %v681, 2147483648
    %v686 = vmul.f32 %v682, 1.442695
    %v687 = vpow.pop %v686
    %v688 = vmul.f32 %v683, 1.442695
    %v689 = vpow.pop %v688
    %v690 = vmul.f32 %v684, 1.442695
    %v691 = vpow.pop %v690
    %v692 = vmul.f32 %v685, 1.442695
    %v693 = vpow.pop %v692
    %v694 = vadd.f32 %v687, 1.0
    %v695 = vadd.f32 %v689, 1.0
    %v696 = vadd.f32 %v691, 1.0
    %v697 = vadd.f32 %v693, 1.0
    %v698 = vrcp.pop %v694
    %v699 = vmul.f32 %v694, %v698
    %v700 = vsub.f32 1.0, %v699
    %v701 = vmul.f32 %v698, %v700
    %v702 = vadd.f32 %v698, %v701
    %vm703 = vweird.f32 %v694
    %vm704 = vweird.f32 %v698
    %vm705 = vmor %vm703, %vm704
    %v706 = vsel %vm705, %v698, %v702
    %v707 = vand.u32 2147483647, %v694
    %vm708 = vcmp.eq.f32.partialorder %v707, 8.507059e+37
    %v709 = vand.u32 %v694, 2147483648
    %v710 = vor.u32 1.1754944e-38, %v709
    %v711 = vsel %vm708, %v710, %v706
    %v712 = vmul.f32 1.0, %v711
    %v713 = vrcp.pop %v695
    %v714 = vmul.f32 %v695, %v713
    %v715 = vsub.f32 1.0, %v714
    %v716 = vmul.f32 %v713, %v715
    %v717 = vadd.f32 %v713, %v716
    %vm718 = vweird.f32 %v695
    %vm719 = vweird.f32 %v713
    %vm720 = vmor %vm718, %vm719
    %v721 = vsel %vm720, %v713, %v717
    %v722 = vand.u32 2147483647, %v695
    %vm723 = vcmp.eq.f32.partialorder %v722, 8.507059e+37
    %v724 = vand.u32 %v695, 2147483648
    %v725 = vor.u32 1.1754944e-38, %v724
    %v726 = vsel %vm723, %v725, %v721
    %v727 = vmul.f32 1.0, %v726
    %v728 = vrcp.pop %v696
    %v729 = vmul.f32 %v696, %v728
    %v730 = vsub.f32 1.0, %v729
    %v731 = vmul.f32 %v728, %v730
    %v732 = vadd.f32 %v728, %v731
    %vm733 = vweird.f32 %v696
    %vm734 = vweird.f32 %v728
    %vm735 = vmor %vm733, %vm734
    %v736 = vsel %vm735, %v728, %v732
    %v737 = vand.u32 2147483647, %v696
    %vm738 = vcmp.eq.f32.partialorder %v737, 8.507059e+37
    %v739 = vand.u32 %v696, 2147483648
    %v740 = vor.u32 1.1754944e-38, %v739
    %v741 = vsel %vm738, %v740, %v736
    %v742 = vmul.f32 1.0, %v741
    %v743 = vrcp.pop %v697
    %v744 = vmul.f32 %v697, %v743
    %v745 = vsub.f32 1.0, %v744
    %v746 = vmul.f32 %v743, %v745
    %v747 = vadd.f32 %v743, %v746
    %vm748 = vweird.f32 %v697
    %vm749 = vweird.f32 %v743
    %vm750 = vmor %vm748, %vm749
    %v751 = vsel %vm750, %v743, %v747
    %v752 = vand.u32 2147483647, %v697
    %vm753 = vcmp.eq.f32.partialorder %v752, 8.507059e+37
    %v754 = vand.u32 %v697, 2147483648
    %v755 = vor.u32 1.1754944e-38, %v754
    %v756 = vsel %vm753, %v755, %v751
    %v757 = vmul.f32 1.0, %v756
    %v758 = vmul.f32 %v674, %v712
    %v759 = vmul.f32 %v676, %v727
    %v760 = vmul.f32 %v678, %v742
    %v761 = vmul.f32 %v680, %v757
    %v762 = vadd.f32 %v758, %v225
    %v763 = vadd.f32 %v759, %v227
    %v764 = vadd.f32 %v760, %v230
    %v765 = vadd.f32 %v761, %v232
    %v766 = vmul.f32 %v762, 0.70710677
    %v767 = vmul.f32 %v763, 0.70710677
    %v768 = vmul.f32 %v764, 0.70710677
    %v769 = vmul.f32 %v765, 0.70710677
    %770 = vst [vmem:[#allocation2 + $0x1] sm:$0xff] %v766
    %771 = vst [vmem:[#allocation2 + $0x9] sm:$0xff] %v767
    %772 = vst [vmem:[#allocation2 + $0x19] sm:$0xff] %v768
    %773 = vst [vmem:[#allocation2 + $0x21] sm:$0xff] %v769
    %v774 = vld [vmem:[#allocation2] sm:$0xff]
    %v775 = vld [vmem:[#allocation2 + $0x8] sm:$0xff]
    %v776 = vld [vmem:[#allocation2 + $0x18] sm:$0xff]
    %v777 = vld [vmem:[#allocation2 + $0x20] sm:$0xff]
    %v778 = vpack.c.bf16 %v775, %v774
    %v779 = vpack.c.bf16 %v777, %v776
    %s780 = scalar_lea.vmem [#allocation11], 384
    %v781 = vld [vmem:[%s780] sm:$0xff]
    %v782 = vld [vmem:[%s780 + $0x8] sm:$0xff]
    %v783 = vld [vmem:[%s780 + $0x10] sm:$0xff]
    %v784 = vld [vmem:[%s780 + $0x18] sm:$0xff]
    %v785 = vld [vmem:[%s780 + $0x20] sm:$0xff]
    %v786 = vld [vmem:[%s780 + $0x28] sm:$0xff]
    %v787 = vld [vmem:[%s780 + $0x30] sm:$0xff]
    %v788 = vld [vmem:[%s780 + $0x38] sm:$0xff]
    %v789 = vld [vmem:[%s780 + $0x40] sm:$0xff]
    %v790 = vld [vmem:[%s780 + $0x48] sm:$0xff]
    %v791 = vld [vmem:[%s780 + $0x50] sm:$0xff]
    %v792 = vld [vmem:[%s780 + $0x58] sm:$0xff]
    %v793 = vld [vmem:[%s780 + $0x60] sm:$0xff]
    %v794 = vld [vmem:[%s780 + $0x68] sm:$0xff]
    %v795 = vld [vmem:[%s780 + $0x70] sm:$0xff]
    %v796 = vld [vmem:[%s780 + $0x78] sm:$0xff]
    %v797 = vld [vmem:[#allocation2 + $0x1] sm:$0xff]
    %v798 = vld [vmem:[#allocation2 + $0x9] sm:$0xff]
    %v799 = vld [vmem:[#allocation2 + $0x19] sm:$0xff]
    %v800 = vld [vmem:[#allocation2 + $0x21] sm:$0xff]
    %v801 = vpack.c.bf16 %v798, %v797
    %v802 = vpack.c.bf16 %v800, %v799
    %s803 = scalar_lea.vmem [#allocation11], 512
    %v804 = vld [vmem:[%s803] sm:$0xff]
    %v805 = vld [vmem:[%s803 + $0x8] sm:$0xff]
    %v806 = vld [vmem:[%s803 + $0x10] sm:$0xff]
    %v807 = vld [vmem:[%s803 + $0x18] sm:$0xff]
    %v808 = vld [vmem:[%s803 + $0x20] sm:$0xff]
    %v809 = vld [vmem:[%s803 + $0x28] sm:$0xff]
    %v810 = vld [vmem:[%s803 + $0x30] sm:$0xff]
    %v811 = vld [vmem:[%s803 + $0x38] sm:$0xff]
    %v812 = vld [vmem:[%s803 + $0x40] sm:$0xff]
    %v813 = vld [vmem:[%s803 + $0x48] sm:$0xff]
    %v814 = vld [vmem:[%s803 + $0x50] sm:$0xff]
    %v815 = vld [vmem:[%s803 + $0x58] sm:$0xff]
    %v816 = vld [vmem:[%s803 + $0x60] sm:$0xff]
    %v817 = vld [vmem:[%s803 + $0x68] sm:$0xff]
    %v818 = vld [vmem:[%s803 + $0x70] sm:$0xff]
    %v819 = vld [vmem:[%s803 + $0x78] sm:$0xff]
    %v836 = vunpack.c.l.b16 %v804
    %v837 = vunpack.c.h.b16 %v804
    %v838 = vunpack.c.l.b16 %v805
    %v839 = vunpack.c.h.b16 %v805
    %v840 = vunpack.c.l.b16 %v806
    %v841 = vunpack.c.h.b16 %v806
    %v842 = vunpack.c.l.b16 %v807
    %v843 = vunpack.c.h.b16 %v807
    %v844 = vunpack.c.l.b16 %v808
    %v845 = vunpack.c.h.b16 %v808
    %v846 = vunpack.c.l.b16 %v809
    %v847 = vunpack.c.h.b16 %v809
    %v848 = vunpack.c.l.b16 %v810
    %v849 = vunpack.c.h.b16 %v810
    %v850 = vunpack.c.l.b16 %v811
    %v851 = vunpack.c.h.b16 %v811
    %v852 = vunpack.c.l.b16 %v812
    %v853 = vunpack.c.h.b16 %v812
    %v854 = vunpack.c.l.b16 %v813
    %v855 = vunpack.c.h.b16 %v813
    %v856 = vunpack.c.l.b16 %v814
    %v857 = vunpack.c.h.b16 %v814
    %v858 = vunpack.c.l.b16 %v815
    %v859 = vunpack.c.h.b16 %v815
    %v860 = vunpack.c.l.b16 %v816
    %v861 = vunpack.c.h.b16 %v816
    %v862 = vunpack.c.l.b16 %v817
    %v863 = vunpack.c.h.b16 %v817
    %v864 = vunpack.c.l.b16 %v818
    %v865 = vunpack.c.h.b16 %v818
    %v866 = vunpack.c.l.b16 %v819
    %v867 = vunpack.c.h.b16 %v819
    %v868 = vpack.c.b16 %v838, %v836
    %v869 = vpack.c.b16 %v839, %v837
    %v870 = vpack.c.b16 %v842, %v840
    %v871 = vpack.c.b16 %v843, %v841
    %v872 = vpack.c.b16 %v846, %v844
    %v873 = vpack.c.b16 %v847, %v845
    %v874 = vpack.c.b16 %v850, %v848
    %v875 = vpack.c.b16 %v851, %v849
    %v876 = vpack.c.b16 %v854, %v852
    %v877 = vpack.c.b16 %v855, %v853
    %v878 = vpack.c.b16 %v858, %v856
    %v879 = vpack.c.b16 %v859, %v857
    %v880 = vpack.c.b16 %v862, %v860
    %v881 = vpack.c.b16 %v863, %v861
    %v882 = vpack.c.b16 %v866, %v864
    %v883 = vpack.c.b16 %v867, %v865
    %900 = vmatpush.bf16.msra.mxu0 %v882
    %901 = vmatpush.bf16.msra.mxu0 %v880
    %902 = vmatpush.bf16.msra.mxu0 %v878
    %903 = vmatpush.bf16.msra.mxu0 %v876
    %904 = vmatpush.bf16.msra.mxu0 %v874
    %905 = vmatpush.bf16.msra.mxu0 %v872
    %906 = vmatpush.bf16.msra.mxu0 %v870
    %907 = vmatpush.bf16.msra.mxu0 %v868
    %908 = vmatmul.bf16.gmra.mxu0 %v801
    %v909 = vpop.f32.mrf.mxu0
    %v910 = vadd.f32 0.0, %v909
    %v911 = vpop.f32.mrf.mxu0
    %v912 = vadd.f32 0.0, %v911
    %913 = vmatmul.bf16.gmra.mxu0 %v802
    %v914 = vpop.f32.mrf.mxu0
    %v915 = vadd.f32 0.0, %v914
    %v916 = vpop.f32.mrf.mxu0
    %v917 = vadd.f32 0.0, %v916
    %918 = vdwg.mxu0
    %919 = vmatpush.bf16.msra.mxu0 %v883
    %920 = vmatpush.bf16.msra.mxu0 %v881
    %921 = vmatpush.bf16.msra.mxu0 %v879
    %922 = vmatpush.bf16.msra.mxu0 %v877
    %923 = vmatpush.bf16.msra.mxu0 %v875
    %924 = vmatpush.bf16.msra.mxu0 %v873
    %925 = vmatpush.bf16.msra.mxu0 %v871
    %926 = vmatpush.bf16.msra.mxu0 %v869
    %927 = vmatmul.bf16.gmra.mxu0 %v801
    %v928 = vpop.f32.mrf.mxu0
    %v929 = vadd.f32 0.0, %v928
    %v930 = vpop.f32.mrf.mxu0
    %v931 = vadd.f32 0.0, %v930
    %932 = vmatmul.bf16.gmra.mxu0 %v802
    %v933 = vpop.f32.mrf.mxu0
    %v934 = vadd.f32 0.0, %v933
    %v935 = vpop.f32.mrf.mxu0
    %v936 = vadd.f32 0.0, %v935
    %937 = vdwg.mxu0
    %v954 = vunpack.c.l.b16 %v781
    %v955 = vunpack.c.h.b16 %v781
    %v956 = vunpack.c.l.b16 %v782
    %v957 = vunpack.c.h.b16 %v782
    %v958 = vunpack.c.l.b16 %v783
    %v959 = vunpack.c.h.b16 %v783
    %v960 = vunpack.c.l.b16 %v784
    %v961 = vunpack.c.h.b16 %v784
    %v962 = vunpack.c.l.b16 %v785
    %v963 = vunpack.c.h.b16 %v785
    %v964 = vunpack.c.l.b16 %v786
    %v965 = vunpack.c.h.b16 %v786
    %v966 = vunpack.c.l.b16 %v787
    %v967 = vunpack.c.h.b16 %v787
    %v968 = vunpack.c.l.b16 %v788
    %v969 = vunpack.c.h.b16 %v788
    %v970 = vunpack.c.l.b16 %v789
    %v971 = vunpack.c.h.b16 %v789
    %v972 = vunpack.c.l.b16 %v790
    %v973 = vunpack.c.h.b16 %v790
    %v974 = vunpack.c.l.b16 %v791
    %v975 = vunpack.c.h.b16 %v791
    %v976 = vunpack.c.l.b16 %v792
    %v977 = vunpack.c.h.b16 %v792
    %v978 = vunpack.c.l.b16 %v793
    %v979 = vunpack.c.h.b16 %v793
    %v980 = vunpack.c.l.b16 %v794
    %v981 = vunpack.c.h.b16 %v794
    %v982 = vunpack.c.l.b16 %v795
    %v983 = vunpack.c.h.b16 %v795
    %v984 = vunpack.c.l.b16 %v796
    %v985 = vunpack.c.h.b16 %v796
    %v986 = vpack.c.b16 %v956, %v954
    %v987 = vpack.c.b16 %v957, %v955
    %v988 = vpack.c.b16 %v960, %v958
    %v989 = vpack.c.b16 %v961, %v959
    %v990 = vpack.c.b16 %v964, %v962
    %v991 = vpack.c.b16 %v965, %v963
    %v992 = vpack.c.b16 %v968, %v966
    %v993 = vpack.c.b16 %v969, %v967
    %v994 = vpack.c.b16 %v972, %v970
    %v995 = vpack.c.b16 %v973, %v971
    %v996 = vpack.c.b16 %v976, %v974
    %v997 = vpack.c.b16 %v977, %v975
    %v998 = vpack.c.b16 %v980, %v978
    %v999 = vpack.c.b16 %v981, %v979
    %v1000 = vpack.c.b16 %v984, %v982
    %v1001 = vpack.c.b16 %v985, %v983
    %1018 = vmatpush.bf16.msra.mxu0 %v1000
    %1019 = vmatpush.bf16.msra.mxu0 %v998
    %1020 = vmatpush.bf16.msra.mxu0 %v996
    %1021 = vmatpush.bf16.msra.mxu0 %v994
    %1022 = vmatpush.bf16.msra.mxu0 %v992
    %1023 = vmatpush.bf16.msra.mxu0 %v990
    %1024 = vmatpush.bf16.msra.mxu0 %v988
    %1025 = vmatpush.bf16.msra.mxu0 %v986
    %1026 = vmatmul.bf16.gmra.mxu0 %v778
    %v1027 = vpop.f32.mrf.mxu0
    %v1028 = vadd.f32 %v910, %v1027
    %v1029 = vpop.f32.mrf.mxu0
    %v1030 = vadd.f32 %v912, %v1029
    %1031 = vmatmul.bf16.gmra.mxu0 %v779
    %v1032 = vpop.f32.mrf.mxu0
    %v1033 = vadd.f32 %v915, %v1032
    %v1034 = vpop.f32.mrf.mxu0
    %v1035 = vadd.f32 %v917, %v1034
    %1036 = vdwg.mxu0
    %1037 = vmatpush.bf16.msra.mxu0 %v1001
    %1038 = vmatpush.bf16.msra.mxu0 %v999
    %1039 = vmatpush.bf16.msra.mxu0 %v997
    %1040 = vmatpush.bf16.msra.mxu0 %v995
    %1041 = vmatpush.bf16.msra.mxu0 %v993
    %1042 = vmatpush.bf16.msra.mxu0 %v991
    %1043 = vmatpush.bf16.msra.mxu0 %v989
    %1044 = vmatpush.bf16.msra.mxu0 %v987
    %1045 = vmatmul.bf16.gmra.mxu0 %v778
    %v1046 = vpop.f32.mrf.mxu0
    %v1047 = vadd.f32 %v929, %v1046
    %v1048 = vpop.f32.mrf.mxu0
    %v1049 = vadd.f32 %v931, %v1048
    %1050 = vmatmul.bf16.gmra.mxu0 %v779
    %v1051 = vpop.f32.mrf.mxu0
    %v1052 = vadd.f32 %v934, %v1051
    %v1053 = vpop.f32.mrf.mxu0
    %v1054 = vadd.f32 %v936, %v1053
    %1055 = vdwg.mxu0
    %v1056 = vld [vmem:[#allocation2 + $0x2] sm:$0xff]
    %v1057 = vld [vmem:[#allocation2 + $0xa] sm:$0xff]
    %v1058 = vld [vmem:[#allocation2 + $0x1a] sm:$0xff]
    %v1059 = vld [vmem:[#allocation2 + $0x22] sm:$0xff]
    %v1060 = vpack.c.bf16 %v1057, %v1056
    %v1061 = vpack.c.bf16 %v1059, %v1058
    %s1062 = scalar_lea.vmem [#allocation11], 640
    %v1063 = vld [vmem:[%s1062] sm:$0xff]
    %v1064 = vld [vmem:[%s1062 + $0x8] sm:$0xff]
    %v1065 = vld [vmem:[%s1062 + $0x10] sm:$0xff]
    %v1066 = vld [vmem:[%s1062 + $0x18] sm:$0xff]
    %v1067 = vld [vmem:[%s1062 + $0x20] sm:$0xff]
    %v1068 = vld [vmem:[%s1062 + $0x28] sm:$0xff]
    %v1069 = vld [vmem:[%s1062 + $0x30] sm:$0xff]
    %v1070 = vld [vmem:[%s1062 + $0x38] sm:$0xff]
    %v1071 = vld [vmem:[%s1062 + $0x40] sm:$0xff]
    %v1072 = vld [vmem:[%s1062 + $0x48] sm:$0xff]
    %v1073 = vld [vmem:[%s1062 + $0x50] sm:$0xff]
    %v1074 = vld [vmem:[%s1062 + $0x58] sm:$0xff]
    %v1075 = vld [vmem:[%s1062 + $0x60] sm:$0xff]
    %v1076 = vld [vmem:[%s1062 + $0x68] sm:$0xff]
    %v1077 = vld [vmem:[%s1062 + $0x70] sm:$0xff]
    %v1078 = vld [vmem:[%s1062 + $0x78] sm:$0xff]
    %v1095 = vunpack.c.l.b16 %v1063
    %v1096 = vunpack.c.h.b16 %v1063
    %v1097 = vunpack.c.l.b16 %v1064
    %v1098 = vunpack.c.h.b16 %v1064
    %v1099 = vunpack.c.l.b16 %v1065
    %v1100 = vunpack.c.h.b16 %v1065
    %v1101 = vunpack.c.l.b16 %v1066
    %v1102 = vunpack.c.h.b16 %v1066
    %v1103 = vunpack.c.l.b16 %v1067
    %v1104 = vunpack.c.h.b16 %v1067
    %v1105 = vunpack.c.l.b16 %v1068
    %v1106 = vunpack.c.h.b16 %v1068
    %v1107 = vunpack.c.l.b16 %v1069
    %v1108 = vunpack.c.h.b16 %v1069
    %v1109 = vunpack.c.l.b16 %v1070
    %v1110 = vunpack.c.h.b16 %v1070
    %v1111 = vunpack.c.l.b16 %v1071
    %v1112 = vunpack.c.h.b16 %v1071
    %v1113 = vunpack.c.l.b16 %v1072
    %v1114 = vunpack.c.h.b16 %v1072
    %v1115 = vunpack.c.l.b16 %v1073
    %v1116 = vunpack.c.h.b16 %v1073
    %v1117 = vunpack.c.l.b16 %v1074
    %v1118 = vunpack.c.h.b16 %v1074
    %v1119 = vunpack.c.l.b16 %v1075
    %v1120 = vunpack.c.h.b16 %v1075
    %v1121 = vunpack.c.l.b16 %v1076
    %v1122 = vunpack.c.h.b16 %v1076
    %v1123 = vunpack.c.l.b16 %v1077
    %v1124 = vunpack.c.h.b16 %v1077
    %v1125 = vunpack.c.l.b16 %v1078
    %v1126 = vunpack.c.h.b16 %v1078
    %v1127 = vpack.c.b16 %v1097, %v1095
    %v1128 = vpack.c.b16 %v1098, %v1096
    %v1129 = vpack.c.b16 %v1101, %v1099
    %v1130 = vpack.c.b16 %v1102, %v1100
    %v1131 = vpack.c.b16 %v1105, %v1103
    %v1132 = vpack.c.b16 %v1106, %v1104
    %v1133 = vpack.c.b16 %v1109, %v1107
    %v1134 = vpack.c.b16 %v1110, %v1108
    %v1135 = vpack.c.b16 %v1113, %v1111
    %v1136 = vpack.c.b16 %v1114, %v1112
    %v1137 = vpack.c.b16 %v1117, %v1115
    %v1138 = vpack.c.b16 %v1118, %v1116
    %v1139 = vpack.c.b16 %v1121, %v1119
    %v1140 = vpack.c.b16 %v1122, %v1120
    %v1141 = vpack.c.b16 %v1125, %v1123
    %v1142 = vpack.c.b16 %v1126, %v1124
    %1159 = vmatpush.bf16.msra.mxu0 %v1141
    %1160 = vmatpush.bf16.msra.mxu0 %v1139
    %1161 = vmatpush.bf16.msra.mxu0 %v1137
    %1162 = vmatpush.bf16.msra.mxu0 %v1135
    %1163 = vmatpush.bf16.msra.mxu0 %v1133
    %1164 = vmatpush.bf16.msra.mxu0 %v1131
    %1165 = vmatpush.bf16.msra.mxu0 %v1129
    %1166 = vmatpush.bf16.msra.mxu0 %v1127
    %1167 = vmatmul.bf16.gmra.mxu0 %v1060
    %v1168 = vpop.f32.mrf.mxu0
    %v1169 = vadd.f32 0.0, %v1168
    %v1170 = vpop.f32.mrf.mxu0
    %v1171 = vadd.f32 0.0, %v1170
    %1172 = vmatmul.bf16.gmra.mxu0 %v1061
    %v1173 = vpop.f32.mrf.mxu0
    %v1174 = vadd.f32 0.0, %v1173
    %v1175 = vpop.f32.mrf.mxu0
    %v1176 = vadd.f32 0.0, %v1175
    %1177 = vdwg.mxu0
    %1178 = vmatpush.bf16.msra.mxu0 %v1142
    %1179 = vmatpush.bf16.msra.mxu0 %v1140
    %1180 = vmatpush.bf16.msra.mxu0 %v1138
    %1181 = vmatpush.bf16.msra.mxu0 %v1136
    %1182 = vmatpush.bf16.msra.mxu0 %v1134
    %1183 = vmatpush.bf16.msra.mxu0 %v1132
    %1184 = vmatpush.bf16.msra.mxu0 %v1130
    %1185 = vmatpush.bf16.msra.mxu0 %v1128
    %1186 = vmatmul.bf16.gmra.mxu0 %v1060
    %v1187 = vpop.f32.mrf.mxu0
    %v1188 = vadd.f32 0.0, %v1187
    %v1189 = vpop.f32.mrf.mxu0
    %v1190 = vadd.f32 0.0, %v1189
    %1191 = vmatmul.bf16.gmra.mxu0 %v1061
    %v1192 = vpop.f32.mrf.mxu0
    %v1193 = vadd.f32 0.0, %v1192
    %v1194 = vpop.f32.mrf.mxu0
    %v1195 = vadd.f32 0.0, %v1194
    %1196 = vdwg.mxu0
    %v1197 = vadd.f32 %v1028, %v1169
    %v1198 = vadd.f32 %v1047, %v1188
    %v1199 = vadd.f32 %v1030, %v1171
    %v1200 = vadd.f32 %v1049, %v1190
    %v1201 = vadd.f32 %v1033, %v1174
    %v1202 = vadd.f32 %v1052, %v1193
    %v1203 = vadd.f32 %v1035, %v1176
    %v1204 = vadd.f32 %v1054, %v1195
    %s1205 = scalar_lea.vmem %s5, 2
    %v1206 = vld [vmem:[%s1205] sm:$0x3]
    %v1208 = vperm.slane %v1206, 0
    %v1209 = vperm.slane %v1206, 1
    %v1212 = vadd.f32 %v1197, %v1208
    %v1213 = vadd.f32 %v1198, %v1209
    %v1214 = vadd.f32 %v1199, %v1208
    %v1215 = vadd.f32 %v1200, %v1209
    %v1216 = vadd.f32 %v1201, %v1208
    %v1217 = vadd.f32 %v1202, %v1209
    %v1218 = vadd.f32 %v1203, %v1208
    %v1219 = vadd.f32 %v1204, %v1209
    %v1220 = vxor.u32 %v1213, 2147483648
    %v1221 = vxor.u32 %v1215, 2147483648
    %v1222 = vxor.u32 %v1217, 2147483648
    %v1223 = vxor.u32 %v1219, 2147483648
    %v1224 = vmul.f32 %v1220, 1.442695
    %v1225 = vpow.pop %v1224
    %v1226 = vmul.f32 %v1221, 1.442695
    %v1227 = vpow.pop %v1226
    %v1228 = vmul.f32 %v1222, 1.442695
    %v1229 = vpow.pop %v1228
    %v1230 = vmul.f32 %v1223, 1.442695
    %v1231 = vpow.pop %v1230
    %v1232 = vadd.f32 %v1225, 1.0
    %v1233 = vadd.f32 %v1227, 1.0
    %v1234 = vadd.f32 %v1229, 1.0
    %v1235 = vadd.f32 %v1231, 1.0
    %v1236 = vrcp.pop %v1232
    %v1237 = vmul.f32 %v1232, %v1236
    %v1238 = vsub.f32 1.0, %v1237
    %v1239 = vmul.f32 %v1236, %v1238
    %v1240 = vadd.f32 %v1236, %v1239
    %vm1241 = vweird.f32 %v1232
    %vm1242 = vweird.f32 %v1236
    %vm1243 = vmor %vm1241, %vm1242
    %v1244 = vsel %vm1243, %v1236, %v1240
    %v1245 = vand.u32 2147483647, %v1232
    %vm1246 = vcmp.eq.f32.partialorder %v1245, 8.507059e+37
    %v1247 = vand.u32 %v1232, 2147483648
    %v1248 = vor.u32 1.1754944e-38, %v1247
    %v1249 = vsel %vm1246, %v1248, %v1244
    %v1250 = vmul.f32 1.0, %v1249
    %v1251 = vrcp.pop %v1233
    %v1252 = vmul.f32 %v1233, %v1251
    %v1253 = vsub.f32 1.0, %v1252
    %v1254 = vmul.f32 %v1251, %v1253
    %v1255 = vadd.f32 %v1251, %v1254
    %vm1256 = vweird.f32 %v1233
    %vm1257 = vweird.f32 %v1251
    %vm1258 = vmor %vm1256, %vm1257
    %v1259 = vsel %vm1258, %v1251, %v1255
    %v1260 = vand.u32 2147483647, %v1233
    %vm1261 = vcmp.eq.f32.partialorder %v1260, 8.507059e+37
    %v1262 = vand.u32 %v1233, 2147483648
    %v1263 = vor.u32 1.1754944e-38, %v1262
    %v1264 = vsel %vm1261, %v1263, %v1259
    %v1265 = vmul.f32 1.0, %v1264
    %v1266 = vrcp.pop %v1234
    %v1267 = vmul.f32 %v1234, %v1266
    %v1268 = vsub.f32 1.0, %v1267
    %v1269 = vmul.f32 %v1266, %v1268
    %v1270 = vadd.f32 %v1266, %v1269
    %vm1271 = vweird.f32 %v1234
    %vm1272 = vweird.f32 %v1266
    %vm1273 = vmor %vm1271, %vm1272
    %v1274 = vsel %vm1273, %v1266, %v1270
    %v1275 = vand.u32 2147483647, %v1234
    %vm1276 = vcmp.eq.f32.partialorder %v1275, 8.507059e+37
    %v1277 = vand.u32 %v1234, 2147483648
    %v1278 = vor.u32 1.1754944e-38, %v1277
    %v1279 = vsel %vm1276, %v1278, %v1274
    %v1280 = vmul.f32 1.0, %v1279
    %v1281 = vrcp.pop %v1235
    %v1282 = vmul.f32 %v1235, %v1281
    %v1283 = vsub.f32 1.0, %v1282
    %v1284 = vmul.f32 %v1281, %v1283
    %v1285 = vadd.f32 %v1281, %v1284
    %vm1286 = vweird.f32 %v1235
    %vm1287 = vweird.f32 %v1281
    %vm1288 = vmor %vm1286, %vm1287
    %v1289 = vsel %vm1288, %v1281, %v1285
    %v1290 = vand.u32 2147483647, %v1235
    %vm1291 = vcmp.eq.f32.partialorder %v1290, 8.507059e+37
    %v1292 = vand.u32 %v1235, 2147483648
    %v1293 = vor.u32 1.1754944e-38, %v1292
    %v1294 = vsel %vm1291, %v1293, %v1289
    %v1295 = vmul.f32 1.0, %v1294
    %v1296 = vmul.f32 %v1212, %v1250
    %v1297 = vmul.f32 %v1214, %v1265
    %v1298 = vmul.f32 %v1216, %v1280
    %v1299 = vmul.f32 %v1218, %v1295
    %v1300 = vadd.f32 %v1296, %v766
    %v1301 = vadd.f32 %v1297, %v767
    %v1302 = vadd.f32 %v1298, %v768
    %v1303 = vadd.f32 %v1299, %v769
    %v1304 = vmul.f32 %v1300, 0.70710677
    %v1305 = vmul.f32 %v1301, 0.70710677
    %v1306 = vmul.f32 %v1302, 0.70710677
    %v1307 = vmul.f32 %v1303, 0.70710677
    %v1308 = vpack.c.bf16 %v1305, %v1304
    %v1309 = vpack.c.bf16 %v1307, %v1306
    %v1310 = vld [vmem:[#allocation12] sm:$0xf]
    %v1311 = vld [vmem:[#allocation12 + $0x4] sm:$0xf]
    %v1312 = vld [vmem:[#allocation12 + $0x8] sm:$0xf]
    %v1313 = vld [vmem:[#allocation12 + $0xc] sm:$0xf]
    %v1314 = vld [vmem:[#allocation12 + $0x10] sm:$0xf]
    %v1315 = vld [vmem:[#allocation12 + $0x14] sm:$0xf]
    %v1316 = vld [vmem:[#allocation12 + $0x18] sm:$0xf]
    %v1317 = vld [vmem:[#allocation12 + $0x1c] sm:$0xf]
    %v1318 = vld [vmem:[#allocation12 + $0x20] sm:$0xf]
    %v1319 = vld [vmem:[#allocation12 + $0x24] sm:$0xf]
    %v1320 = vld [vmem:[#allocation12 + $0x28] sm:$0xf]
    %v1321 = vld [vmem:[#allocation12 + $0x2c] sm:$0xf]
    %v1322 = vld [vmem:[#allocation12 + $0x30] sm:$0xf]
    %v1323 = vld [vmem:[#allocation12 + $0x34] sm:$0xf]
    %v1324 = vld [vmem:[#allocation12 + $0x38] sm:$0xf]
    %v1325 = vld [vmem:[#allocation12 + $0x3c] sm:$0xf]
    %v1326 = vld [vmem:[%s7] sm:$0x1]
    %v1328 = vperm.slane %v1326, 0
    %v1346 = vunpack.c.l.b16 %v1310
    %v1347 = vunpack.c.l.b16 %v1311
    %v1348 = vunpack.c.l.b16 %v1312
    %v1349 = vunpack.c.l.b16 %v1313
    %v1350 = vunpack.c.l.b16 %v1314
    %v1351 = vunpack.c.l.b16 %v1315
    %v1352 = vunpack.c.l.b16 %v1316
    %v1353 = vunpack.c.l.b16 %v1317
    %v1354 = vunpack.c.l.b16 %v1318
    %v1355 = vunpack.c.l.b16 %v1319
    %v1356 = vunpack.c.l.b16 %v1320
    %v1357 = vunpack.c.l.b16 %v1321
    %v1358 = vunpack.c.l.b16 %v1322
    %v1359 = vunpack.c.l.b16 %v1323
    %v1360 = vunpack.c.l.b16 %v1324
    %v1361 = vunpack.c.l.b16 %v1325
    %v1362 = vpack.c.b16 %v1347, %v1346
    %v1363 = vpack.c.b16 %v1349, %v1348
    %v1364 = vpack.c.b16 %v1351, %v1350
    %v1365 = vpack.c.b16 %v1353, %v1352
    %v1366 = vpack.c.b16 %v1355, %v1354
    %v1367 = vpack.c.b16 %v1357, %v1356
    %v1368 = vpack.c.b16 %v1359, %v1358
    %v1369 = vpack.c.b16 %v1361, %v1360
    %1378 = vmatpush.bf16.msra.mxu0 %v1369
    %1379 = vmatpush.bf16.msra.mxu0 %v1368
    %1380 = vmatpush.bf16.msra.mxu0 %v1367
    %1381 = vmatpush.bf16.msra.mxu0 %v1366
    %1382 = vmatpush.bf16.msra.mxu0 %v1365
    %1383 = vmatpush.bf16.msra.mxu0 %v1364
    %1384 = vmatpush.bf16.msra.mxu0 %v1363
    %1385 = vmatpush.bf16.msra.mxu0 %v1362
    %1386 = vmatmul.bf16.gmra.mxu0 %v1308
    %v1387 = vpop.f32.mrf.mxu0
    %v1388 = vadd.f32 %v1328, %v1387
    %v1389 = vpop.f32.mrf.mxu0
    %v1390 = vadd.f32 %v1328, %v1389
    %1391 = vmatmul.bf16.gmra.mxu0 %v1309
    %v1392 = vpop.f32.mrf.mxu0
    %v1393 = vadd.f32 %v1328, %v1392
    %v1394 = vpop.f32.mrf.mxu0
    %v1395 = vadd.f32 %v1328, %v1394
    %1396 = vdwg.mxu0
    %v1397 = vld [vmem:[#allocation3] sm:$0xf]
    %v1398 = vld [vmem:[#allocation3 + $0x4] sm:$0xf]
    %v1399 = vld [vmem:[#allocation3 + $0x8] sm:$0xf]
    %v1400 = vld [vmem:[#allocation3 + $0xc] sm:$0xf]
    %v1401 = vunpack.c.l.bf16 %v1397
    %v1402 = vunpack.c.l.bf16 %v1398
    %v1403 = vunpack.c.l.bf16 %v1399
    %v1404 = vunpack.c.l.bf16 %v1400
    %v1405 = vld [vmem:[#allocation6] sm:$0xf]
    %v1406 = vld [vmem:[#allocation6 + $0x4] sm:$0xf]
    %v1407 = vunpack.c.l.bf16 %v1405
    %v1408 = vunpack.c.l.bf16 %v1406
    %v1409 = vadd.f32 %v1401, %v1407
    %v1410 = vadd.f32 %v1402, %v1408
    %v1411 = vadd.f32 %v1403, %v1407
    %v1412 = vadd.f32 %v1404, %v1408
    %1413 = vst [vmem:[#allocation14] sm:$0xff] %v1388
    %1414 = vst [vmem:[#allocation14 + $0x8] sm:$0xff] %v1390
    %1415 = vst [vmem:[#allocation14 + $0x10] sm:$0xff] %v1393
    %1416 = vst [vmem:[#allocation14 + $0x18] sm:$0xff] %v1395
    %v1417 = vadd.f32 %v1388, %v1409
    %v1418 = vadd.f32 %v1390, %v1410
    %v1419 = vadd.f32 %v1393, %v1411
    %v1420 = vadd.f32 %v1395, %v1412
    %v1421 = vmul.f32 %v1417, 0.70710677
    %v1422 = vmul.f32 %v1418, 0.70710677
    %v1423 = vmul.f32 %v1419, 0.70710677
    %v1424 = vmul.f32 %v1420, 0.70710677
    %1425 = vst [vmem:[#allocation15] sm:$0xff] %v1421
    %1426 = vst [vmem:[#allocation15 + $0x8] sm:$0xff] %v1422
    %1427 = vst [vmem:[#allocation15 + $0x10] sm:$0xff] %v1423
    %1428 = vst [vmem:[#allocation15 + $0x18] sm:$0xff] %v1424
    // Predicated region
    $region58: #{tpu_custom_call.1} parent=1 // pred_check
      _
    $region59: #{tpu_custom_call.1} parent=1 // pred_check_branch
      %1430 = sbr.rel (0) target = $region61
    $region60: #{tpu_custom_call.1} parent=1 // pred_region
      %1432 = vsyncadd [#allocation5], 0
      %s1433 = sshll.u32 [#allocation14], 4
      %s1434 = int_to_ptr.vmem [resolvable:$true] %s1433
      %s1435 = sshll.u32 %s8, 4
      %s1436 = int_to_ptr.hbm [resolvable:$true] %s1435
      %1441 = dma.vmem_to_hbm [thread:$0]  %s1434, 512, %s1436, [#allocation5], 128, 128, 8
    $region61: #{tpu_custom_call.1} parent=1 // pred_fallthru
      _
    // Predicated region
    $region62: #{tpu_custom_call.1} parent=1 // pred_check
      _
    $region63: #{tpu_custom_call.1} parent=1 // pred_check_branch
      %1443 = sbr.rel (0) target = $region65
    $region64: #{tpu_custom_call.1} parent=1 // pred_region
      %1445 = vsyncadd [#allocation16], 0
      %s1446 = sshll.u32 [#allocation15], 4
      %s1447 = int_to_ptr.vmem [resolvable:$true] %s1446
      %s1448 = sshll.u32 %s9, 4
      %s1449 = int_to_ptr.hbm [resolvable:$true] %s1448
      %1454 = dma.vmem_to_hbm [thread:$0]  %s1447, 512, %s1449, [#allocation16], 128, 128, 8
    $region65: #{tpu_custom_call.1} parent=1 // pred_fallthru
      _
    // Predicated region
    $region66: #{tpu_custom_call.1} parent=1 // pred_check
      _
    $region67: #{tpu_custom_call.1} parent=1 // pred_check_branch
      %1456 = sbr.rel (0) target = $region69
    $region68: #{tpu_custom_call.1} parent=1 // pred_region
      %1458 = dma.done [#allocation5], 512
    $region69: #{tpu_custom_call.1} parent=1 // pred_fallthru
      _
    // Predicated region
    $region70: #{tpu_custom_call.1} parent=1 // pred_check
      _
    $region71: #{tpu_custom_call.1} parent=1 // pred_check_branch
      %1460 = sbr.rel (0) target = $region73
    $region72: #{tpu_custom_call.1} parent=1 // pred_region
      %1462 = dma.done [#allocation16], 512
    $region73: #{tpu_custom_call.1} parent=1 // pred_fallthru
      _
    %1463 = vsyncpa [#allocation4], 1
    %1464 = vsyncpa [#allocation7], 1
    %1465 = vsyncpa [#allocation10], 1
    %1466 = vsyncpa [#allocation13], 1
    %1467 = vsyncpa [#allocation5], 1
    %1468 = vsyncpa [#allocation16], 1

</llo_original>
